<compile_context>
chip_gen: v7x
topology: tpu7x:2x2x1
jax: 0.10.0
libtpu: 0.0.40
codegen_flags: <defaults>
</compile_context>

<pallas_src>
import functools

import jax
import jax.numpy as jnp
from jax import lax
from jax.experimental import pallas as pl
from jax.experimental.pallas import tpu as pltpu

NEG = -1e9  # additive mask; exp() underflows to exactly 0 in f32


# ----------------------------------------------------------------------------
# Pallas kernel: block-diagonal attention over wp packed windows
# ----------------------------------------------------------------------------
def wmsa_kernel(x_ref, wqkv_ref, bqv_ref, rel_ref, wout_ref, bout_ref, o_ref,
                *, n_heads, head_dim, p, wp, hw, ww, shift, has_sw):
    # x_ref   : [1, p, wp*p, C]  f32   (original image layout, no wrapper pack)
    # wqkv_ref: [C, 3C]          bf16  (q columns pre-scaled by head_dim**-0.5)
    # bqv_ref : [1, 3C]          f32   (q part scaled, k part zeroed, v part kept)
    # rel_ref : [H, M, M]        f32   (rel-pos bias, NEG baked off block-diag,
    #                                   rows in the kernel's natural ordering)
    # wout_ref: [H, d, out]      bf16
    # bout_ref: [1, out]         f32
    # o_ref   : [1, p, wp*p, out]
    C = x_ref.shape[-1]
    out_dim = o_ref.shape[-1]
    M = p * wp * p
    d = head_dim
    H = n_heads

    # contiguous merge of the two sublane-side dims -> [M, C]; bf16 for the MXU
    x = x_ref[0].reshape(M, C).astype(jnp.bfloat16)

    # Fused QKV projection: one wide MXU matmul (K=C, N=3C) instead of 3*H
    # tiny N=32 matmuls.  f32 accumulate, fused (scaled-q / zero-k / v) bias.
    qkv = jnp.dot(x, wqkv_ref[...], preferred_element_type=jnp.float32)
    qkv = qkv + bqv_ref[...]                                     # [M, 3C] f32

    # ---- shifted-window edge mask rebuilt in-kernel (zero HBM traffic) ----
    # Natural row ordering from the BlockSpec strip: m -> (p1, win_local, p2)
    #   p1  = m // (wp*p)   (pixel row inside the window)
    #   winl= (m % (wp*p)) // p
    #   p2  = m % p         (pixel col inside the window)
    if has_sw:
        s = p - shift
        row = lax.broadcasted_iota(jnp.int32, (M, M), 0)
        col = lax.broadcasted_iota(jnp.int32, (M, M), 1)
        p1_r, p1_c = row // (wp * p), col // (wp * p)
        p2_r, p2_c = row % p, col % p
        winl_r = (row % (wp * p)) // p
        last_wrow = pl.program_id(0) == (hw - 1)                 # scalar bool
        w2_r = pl.program_id(1) * wp + winl_r                    # global win col
        mask_h = jnp.logical_and(last_wrow, (p1_r < s) != (p1_c < s))
        mask_w = jnp.logical_and(w2_r == (ww - 1), (p2_r < s) != (p2_c < s))
        sw_kill = jnp.logical_or(mask_h, mask_w)                 # [M, M] bool

    acc = jnp.zeros((M, out_dim), jnp.float32)
    # Small static head count (H=2 here) -> unrolled Python loop is fine.
    # TODO(synk): switch to lax.fori_loop over heads if n_heads grows, to bound
    # the live range of the [M, M] f32 sim/p intermediates.
    for h in range(n_heads):
        q = qkv[:, h * d:(h + 1) * d].astype(jnp.bfloat16)           # scaled q
        k = qkv[:, (H + h) * d:(H + h + 1) * d].astype(jnp.bfloat16)
        v = qkv[:, (2 * H + h) * d:(2 * H + h + 1) * d].astype(jnp.bfloat16)

        # sim = q @ k^T (contract head_dim), bf16 operands, f32 accumulate
        sim = lax.dot_general(q, k, (((1,), (1,)), ((), ())),
                              preferred_element_type=jnp.float32)     # [M, M]
        sim = sim + rel_ref[h]             # rel-pos bias + block-diag NEG mask
        if has_sw:
            sim = jnp.where(sw_kill, NEG, sim)

        # softmax in f32 (masked rows always keep their own window unmasked)
        sim = sim - jnp.max(sim, axis=-1, keepdims=True)
        pmat = jnp.exp(sim)
        inv = pl.reciprocal(jnp.sum(pmat, axis=-1, keepdims=True), approx=True)

        att = jnp.dot(pmat.astype(jnp.bfloat16), v,
                      preferred_element_type=jnp.float32) * inv       # [M, d]

        # per-head accumulation of the output projection (no lane concat)
        acc = acc + jnp.dot(att.astype(jnp.bfloat16), wout_ref[h],
                            preferred_element_type=jnp.float32)       # [M,out]

    o_ref[0] = (acc + bout_ref[...]).reshape(p, wp * p, out_dim).astype(o_ref.dtype)


# ----------------------------------------------------------------------------
# JAX glue (parameter prep, constant bias table, roll for the SW variant)
# ----------------------------------------------------------------------------
def relative_embedding(rel_table, p):
    # rel_table: [n_heads, 2p-1, 2p-1]  ->  [n_heads, p*p, p*p]
    coords = jnp.stack(
        jnp.meshgrid(jnp.arange(p), jnp.arange(p), indexing="ij"),
        axis=-1).reshape(p * p, 2)
    relation = coords[:, None, :] - coords[None, :, :] + p - 1
    return rel_table[:, relation[..., 0], relation[..., 1]]


def build_rel_bias_natural(rel_table, p, wp):
    """Rel-pos bias + block-diagonal NEG mask in the kernel's row ordering.

    Constant across the whole grid -> DMA'd once (constant index_map).
    Row m corresponds to (p1, win_local, p2) = (m//(wp*p), (m%(wp*p))//p, m%p).
    """
    rel = relative_embedding(rel_table, p)               # [H, p2, p2]
    M = wp * p * p
    m = jnp.arange(M)
    winl = (m % (wp * p)) // p
    pos = (m // (wp * p)) * p + (m % p)                  # window-local pixel id
    same = winl[:, None] == winl[None, :]                # block-diagonal
    tiled = rel[:, pos[:, None], pos[None, :]]           # [H, M, M]
    return jnp.where(same[None], tiled, NEG).astype(jnp.float32)


def generate_mask_bias(hw, ww, p, shift, attn_type):
    # additive SW mask per window (reference only): 0 allowed, NEG masked
    nw, p2 = hw * ww, p * p
    if attn_type == "W":
        return jnp.zeros((nw, p2, p2), jnp.float32)
    s = p - shift
    m = jnp.zeros((hw, ww, p, p, p, p), dtype=bool)
    m = m.at[-1, :, :s, :, s:, :].set(True)
    m = m.at[-1, :, s:, :, :s, :].set(True)
    m = m.at[:, -1, :, :s, :, s:].set(True)
    m = m.at[:, -1, :, s:, :, :s].set(True)
    m = m.reshape(nw, p2, p2)
    return jnp.where(m, NEG, 0.0).astype(jnp.float32)


def _default_target_rows():
    # v5e: 128x128 MXU, no bf16 EUP, single vst slot -> M=128. Else M=256.
    try:
        kind = jax.devices()[0].device_kind.lower()
    except Exception:
        kind = ""
    return 128 if "v5" in kind else 256


def wmsa_forward(x, params, *, window_size, head_dim, attn_type,
                 target_rows=None):
    B, Himg, Wimg, C = x.shape
    p = window_size
    assert Himg % p == 0 and Wimg % p == 0 and C % head_dim == 0
    n_heads = C // head_dim
    out_dim = params["w_out"].shape[1]
    shift = p // 2
    has_sw = attn_type != "W"
    if target_rows is None:
        target_rows = _default_target_rows()

    if has_sw:
        # TODO(synk): the cyclic roll (and its inverse) is still a wrapper-side
        # full-activation pass; folding the wrap-around into manual DMA would
        # remove two more HBM round trips for SW blocks.
        x = jnp.roll(x, shift=(-shift, -shift), axis=(1, 2))

    hw, ww = Himg // p, Wimg // p
    p2 = p * p
    # ---- window packing: wp adjacent windows per grid step (M ~ target_rows)
    wp = max(1, min(ww, target_rows // p2))
    while ww % wp:
        wp -= 1
    ngw = ww // wp
    M = wp * p2

    # ---- weight prep: fold softmax scale into q, drop k bias, bf16 operands
    scale = head_dim ** -0.5
    wqkv = jnp.concatenate([params["w_qkv"][:, :C] * scale,
                            params["w_qkv"][:, C:]], axis=1).astype(jnp.bfloat16)
    bq = params["b_qkv"][:C] * scale
    bv = params["b_qkv"][2 * C:]
    bqv = jnp.concatenate([bq, jnp.zeros((C,), bq.dtype), bv])[None, :]
    bqv = bqv.astype(jnp.float32)
    wout = params["w_out"].reshape(n_heads, head_dim, out_dim).astype(jnp.bfloat16)
    bout = params["b_out"][None, :].astype(jnp.float32)

    # constant (grid-invariant) rel-pos + block-diag bias table [H, M, M]
    rel_bias = build_rel_bias_natural(params["rel_table"], p, wp)

    kernel = functools.partial(
        wmsa_kernel, n_heads=n_heads, head_dim=head_dim, p=p, wp=wp,
        hw=hw, ww=ww, shift=shift, has_sw=has_sw)

    out = pl.pallas_call(
        kernel,
        out_shape=jax.ShapeDtypeStruct((B, Himg, Wimg, out_dim), x.dtype),
        grid=(hw, ngw, B),
        in_specs=[
            # x: one (p, wp*p) spatial strip straight from [B, H, W, C]
            pl.BlockSpec((1, p, wp * p, C), lambda i, j, b: (b, i, j, 0)),
            pl.BlockSpec((C, 3 * C), lambda i, j, b: (0, 0)),              # Wqkv
            pl.BlockSpec((1, 3 * C), lambda i, j, b: (0, 0)),              # bqkv
            pl.BlockSpec((n_heads, M, M), lambda i, j, b: (0, 0, 0)),      # rel
            pl.BlockSpec((n_heads, head_dim, out_dim),
                         lambda i, j, b: (0, 0, 0)),                       # Wout
            pl.BlockSpec((1, out_dim), lambda i, j, b: (0, 0)),            # bout
        ],
        out_specs=pl.BlockSpec((1, p, wp * p, out_dim),
                               lambda i, j, b: (b, i, j, 0)),
        compiler_params=pltpu.CompilerParams(
            dimension_semantics=("parallel", "parallel", "parallel")),
    )(x, wqkv, bqv, rel_bias, wout, bout)

    if has_sw:
        out = jnp.roll(out, shift=(shift, shift), axis=(1, 2))
    return out


# ----------------------------------------------------------------------------
# Pure-JAX f32 reference (matches the PyTorch WMSA.forward semantics)
# ----------------------------------------------------------------------------
def wmsa_reference(x, params, *, window_size, head_dim, attn_type):
    B, H, W, C = x.shape
    p = window_size
    n_heads = C // head_dim
    shift = p // 2
    if attn_type != "W":
        x = jnp.roll(x, shift=(-shift, -shift), axis=(1, 2))
    hw, ww = H // p, W // p
    nw, p2 = hw * ww, p * p
    xw = (x.reshape(B, hw, p, ww, p, C).transpose(0, 1, 3, 2, 4, 5)
           .reshape(B, nw, p2, C))
    qkv = xw @ params["w_qkv"] + params["b_qkv"]
    qkv = qkv.reshape(B, nw, p2, 3 * n_heads, head_dim)
    qkv = jnp.moveaxis(qkv, 3, 0)                        # [3h, B, nw, p2, d]
    q, k, v = qkv[:n_heads], qkv[n_heads:2 * n_heads], qkv[2 * n_heads:]
    sim = jnp.einsum("hbwpc,hbwqc->hbwpq", q, k) * (head_dim ** -0.5)
    sim = sim + relative_embedding(params["rel_table"], p)[:, None, None]
    sim = sim + generate_mask_bias(hw, ww, p, shift, attn_type)[None, None]
    probs = jax.nn.softmax(sim, axis=-1)
    out = jnp.einsum("hbwij,hbwjc->hbwic", probs, v)
    out = jnp.moveaxis(out, 0, 3).reshape(B, nw, p2, C)  # (h c) concat
    out = out @ params["w_out"] + params["b_out"]
    out_dim = out.shape[-1]
    out = (out.reshape(B, hw, ww, p, p, out_dim).transpose(0, 1, 3, 2, 4, 5)
              .reshape(B, H, W, out_dim))
    if attn_type != "W":
        out = jnp.roll(out, shift=(shift, shift), axis=(1, 2))
    return out


# ----------------------------------------------------------------------------
if __name__ == "__main__":
    # Small config consistent with FAA's WMSA blocks (window_size=8, head_dim=32)
    B, H, W = 2, 32, 32
    input_dim, output_dim, head_dim, window_size = 64, 64, 32, 8
    n_heads = input_dim // head_dim

    key = jax.random.PRNGKey(0)
    k1, k2, k3, k4, k5, k6 = jax.random.split(key, 6)
    params = {
        # weights stored [in, out] so the kernel computes x @ W
        "w_qkv": 0.02 * jax.random.normal(k1, (input_dim, 3 * input_dim), jnp.float32),
        "b_qkv": 0.01 * jax.random.normal(k2, (3 * input_dim,), jnp.float32),
        "w_out": 0.02 * jax.random.normal(k3, (input_dim, output_dim), jnp.float32),
        "b_out": 0.01 * jax.random.normal(k4, (output_dim,), jnp.float32),
        # trunc_normal(std=0.02) approximated by normal(std=0.02)
        "rel_table": 0.02 * jax.random.normal(
            k5, (n_heads, 2 * window_size - 1, 2 * window_size - 1), jnp.float32),
    }
    x = jax.random.normal(k6, (B, H, W, input_dim), jnp.float32)

    for attn_type in ("W", "SW"):
        out = wmsa_forward(x, params, window_size=window_size,
                           head_dim=head_dim, attn_type=attn_type)
        out = jax.block_until_ready(out)
        ref = wmsa_reference(x, params, window_size=window_size,
                             head_dim=head_dim, attn_type=attn_type)
        assert out.shape == (B, H, W, output_dim)
        # bf16 matmul operands (f32 accumulation) vs pure-f32 reference
        assert jnp.allclose(out, ref, atol=2e-3, rtol=2e-2), f"mismatch ({attn_type})"

    print("KERNEL_OK")
</pallas_src>

<mosaic_0001>
module attributes {stable_mosaic.version = 11 : i64} {
  func.func @wmsa_kernel(%arg0: i32, %arg1: i32, %arg2: i32, %arg3: memref<1x8x32x64xf32, #tpu.memory_space<vmem>>, %arg4: memref<64x192xbf16, #tpu.memory_space<vmem>>, %arg5: memref<1x192xf32, #tpu.memory_space<vmem>>, %arg6: memref<2x256x256xf32, #tpu.memory_space<vmem>>, %arg7: memref<2x32x64xbf16, #tpu.memory_space<vmem>>, %arg8: memref<1x64xf32, #tpu.memory_space<vmem>>, %arg9: memref<1x8x32x64xf32, #tpu.memory_space<vmem>>) attributes {dimension_semantics = [#tpu.dimension_semantics<parallel>, #tpu.dimension_semantics<parallel>, #tpu.dimension_semantics<parallel>], iteration_bounds = array<i64: 4, 1, 2>, scalar_prefetch = 0 : i64, scratch_operands = 0 : i64, tpu.core_type = #tpu.core_type<tc>, window_params = [{transform_indices = @transform_0, window_bounds = array<i64: 1, 8, 32, 64>}, {pipeline_mode = #tpu.pipeline_mode<synchronous>, transform_indices = @transform_1, window_bounds = array<i64: 64, 192>}, {pipeline_mode = #tpu.pipeline_mode<synchronous>, transform_indices = @transform_2, window_bounds = array<i64: 1, 192>}, {pipeline_mode = #tpu.pipeline_mode<synchronous>, transform_indices = @transform_3, window_bounds = array<i64: 2, 256, 256>}, {pipeline_mode = #tpu.pipeline_mode<synchronous>, transform_indices = @transform_4, window_bounds = array<i64: 2, 32, 64>}, {pipeline_mode = #tpu.pipeline_mode<synchronous>, transform_indices = @transform_5, window_bounds = array<i64: 1, 64>}, {transform_indices = @transform_6, window_bounds = array<i64: 1, 8, 32, 64>}]} {
    %c0 = arith.constant 0 : index
    %c0_0 = arith.constant 0 : index
    %c0_1 = arith.constant 0 : index
    %c0_2 = arith.constant 0 : index
    %0 = vector.load %arg3[%c0, %c0_0, %c0_1, %c0_2] : memref<1x8x32x64xf32, #tpu.memory_space<vmem>>, vector<1x8x32x64xf32>
    %1 = vector.shape_cast %0 : vector<1x8x32x64xf32> to vector<8x32x64xf32>
    %2 = vector.shape_cast %1 : vector<8x32x64xf32> to vector<256x64xf32>
    %3 = arith.truncf %2 : vector<256x64xf32> to vector<256x64xbf16>
    %c0_3 = arith.constant 0 : index
    %c0_4 = arith.constant 0 : index
    %4 = vector.load %arg4[%c0_3, %c0_4] : memref<64x192xbf16, #tpu.memory_space<vmem>>, vector<64x192xbf16>
    %cst = arith.constant dense<0.000000e+00> : vector<256x192xf32>
    %5 = tpu.matmul %3, %4, %cst {dimension_numbers = #tpu.dot_dimension_numbers<[1], [0], [0], [1], [0, 0, 1, 1], [], []>} : vector<256x64xbf16>, vector<64x192xbf16>, vector<256x192xf32> -> vector<256x192xf32>
    %c0_5 = arith.constant 0 : index
    %c0_6 = arith.constant 0 : index
    %6 = vector.load %arg5[%c0_5, %c0_6] : memref<1x192xf32, #tpu.memory_space<vmem>>, vector<1x192xf32>
    %7 = vector.broadcast %6 : vector<1x192xf32> to vector<256x192xf32>
    %8 = arith.addf %5, %7 : vector<256x192xf32>
    %cst_7 = arith.constant 0.000000e+00 : f32
    %9 = vector.broadcast %cst_7 : f32 to vector<256x64xf32>
    %10 = vector.extract_strided_slice %8 {offsets = [0, 0], sizes = [256, 32], strides = [1, 1]} : vector<256x192xf32> to vector<256x32xf32>
    %11 = arith.truncf %10 : vector<256x32xf32> to vector<256x32xbf16>
    %12 = vector.extract_strided_slice %8 {offsets = [0, 64], sizes = [256, 32], strides = [1, 1]} : vector<256x192xf32> to vector<256x32xf32>
    %13 = arith.truncf %12 : vector<256x32xf32> to vector<256x32xbf16>
    %14 = vector.extract_strided_slice %8 {offsets = [0, 128], sizes = [256, 32], strides = [1, 1]} : vector<256x192xf32> to vector<256x32xf32>
    %15 = arith.truncf %14 : vector<256x32xf32> to vector<256x32xbf16>
    %cst_8 = arith.constant dense<0.000000e+00> : vector<256x256xf32>
    %16 = tpu.matmul %11, %13, %cst_8 {dimension_numbers = #tpu.dot_dimension_numbers<[1], [1], [0], [0], [0, 0, 1, 0], [], []>} : vector<256x32xbf16>, vector<256x32xbf16>, vector<256x256xf32> -> vector<256x256xf32>
    %c0_9 = arith.constant 0 : index
    %c0_10 = arith.constant 0 : index
    %c0_11 = arith.constant 0 : index
    %17 = vector.load %arg6[%c0_9, %c0_10, %c0_11] : memref<2x256x256xf32, #tpu.memory_space<vmem>>, vector<1x256x256xf32>
    %18 = vector.shape_cast %17 : vector<1x256x256xf32> to vector<256x256xf32>
    %19 = arith.addf %16, %18 : vector<256x256xf32>
    %cst_12 = arith.constant dense<0xFF800000> : vector<256xf32>
    %20 = vector.multi_reduction <maximumf>, %19, %cst_12 [1] : vector<256x256xf32> to vector<256xf32>
    %21 = vector.shape_cast %20 : vector<256xf32> to vector<256x1xf32>
    %22 = vector.broadcast %21 : vector<256x1xf32> to vector<256x256xf32>
    %23 = arith.subf %19, %22 : vector<256x256xf32>
    %24 = math.exp %23 : vector<256x256xf32>
    %cst_13 = arith.constant dense<0.000000e+00> : vector<256xf32>
    %25 = vector.multi_reduction <add>, %24, %cst_13 [1] : vector<256x256xf32> to vector<256xf32>
    %26 = vector.shape_cast %25 : vector<256xf32> to vector<256x1xf32>
    %27 = tpu.reciprocal %26 {approx = true} : vector<256x1xf32> -> vector<256x1xf32>
    %28 = arith.truncf %24 : vector<256x256xf32> to vector<256x256xbf16>
    %cst_14 = arith.constant dense<0.000000e+00> : vector<256x32xf32>
    %29 = tpu.matmul %28, %15, %cst_14 {dimension_numbers = #tpu.dot_dimension_numbers<[1], [0], [0], [1], [0, 0, 1, 1], [], []>} : vector<256x256xbf16>, vector<256x32xbf16>, vector<256x32xf32> -> vector<256x32xf32>
    %30 = vector.broadcast %27 : vector<256x1xf32> to vector<256x32xf32>
    %31 = arith.mulf %29, %30 : vector<256x32xf32>
    %32 = arith.truncf %31 : vector<256x32xf32> to vector<256x32xbf16>
    %c0_15 = arith.constant 0 : index
    %c0_16 = arith.constant 0 : index
    %c0_17 = arith.constant 0 : index
    %33 = vector.load %arg7[%c0_15, %c0_16, %c0_17] : memref<2x32x64xbf16, #tpu.memory_space<vmem>>, vector<1x32x64xbf16>
    %34 = vector.shape_cast %33 : vector<1x32x64xbf16> to vector<32x64xbf16>
    %cst_18 = arith.constant dense<0.000000e+00> : vector<256x64xf32>
    %35 = tpu.matmul %32, %34, %cst_18 {dimension_numbers = #tpu.dot_dimension_numbers<[1], [0], [0], [1], [0, 0, 1, 1], [], []>} : vector<256x32xbf16>, vector<32x64xbf16>, vector<256x64xf32> -> vector<256x64xf32>
    %36 = arith.addf %9, %35 : vector<256x64xf32>
    %37 = vector.extract_strided_slice %8 {offsets = [0, 32], sizes = [256, 32], strides = [1, 1]} : vector<256x192xf32> to vector<256x32xf32>
    %38 = arith.truncf %37 : vector<256x32xf32> to vector<256x32xbf16>
    %39 = vector.extract_strided_slice %8 {offsets = [0, 96], sizes = [256, 32], strides = [1, 1]} : vector<256x192xf32> to vector<256x32xf32>
    %40 = arith.truncf %39 : vector<256x32xf32> to vector<256x32xbf16>
    %41 = vector.extract_strided_slice %8 {offsets = [0, 160], sizes = [256, 32], strides = [1, 1]} : vector<256x192xf32> to vector<256x32xf32>
    %42 = arith.truncf %41 : vector<256x32xf32> to vector<256x32xbf16>
    %cst_19 = arith.constant dense<0.000000e+00> : vector<256x256xf32>
    %43 = tpu.matmul %38, %40, %cst_19 {dimension_numbers = #tpu.dot_dimension_numbers<[1], [1], [0], [0], [0, 0, 1, 0], [], []>} : vector<256x32xbf16>, vector<256x32xbf16>, vector<256x256xf32> -> vector<256x256xf32>
    %c1 = arith.constant 1 : index
    %c0_20 = arith.constant 0 : index
    %c0_21 = arith.constant 0 : index
    %44 = vector.load %arg6[%c1, %c0_20, %c0_21] : memref<2x256x256xf32, #tpu.memory_space<vmem>>, vector<1x256x256xf32>
    %45 = vector.shape_cast %44 : vector<1x256x256xf32> to vector<256x256xf32>
    %46 = arith.addf %43, %45 : vector<256x256xf32>
    %cst_22 = arith.constant dense<0xFF800000> : vector<256xf32>
    %47 = vector.multi_reduction <maximumf>, %46, %cst_22 [1] : vector<256x256xf32> to vector<256xf32>
    %48 = vector.shape_cast %47 : vector<256xf32> to vector<256x1xf32>
    %49 = vector.broadcast %48 : vector<256x1xf32> to vector<256x256xf32>
    %50 = arith.subf %46, %49 : vector<256x256xf32>
    %51 = math.exp %50 : vector<256x256xf32>
    %cst_23 = arith.constant dense<0.000000e+00> : vector<256xf32>
    %52 = vector.multi_reduction <add>, %51, %cst_23 [1] : vector<256x256xf32> to vector<256xf32>
    %53 = vector.shape_cast %52 : vector<256xf32> to vector<256x1xf32>
    %54 = tpu.reciprocal %53 {approx = true} : vector<256x1xf32> -> vector<256x1xf32>
    %55 = arith.truncf %51 : vector<256x256xf32> to vector<256x256xbf16>
    %cst_24 = arith.constant dense<0.000000e+00> : vector<256x32xf32>
    %56 = tpu.matmul %55, %42, %cst_24 {dimension_numbers = #tpu.dot_dimension_numbers<[1], [0], [0], [1], [0, 0, 1, 1], [], []>} : vector<256x256xbf16>, vector<256x32xbf16>, vector<256x32xf32> -> vector<256x32xf32>
    %57 = vector.broadcast %54 : vector<256x1xf32> to vector<256x32xf32>
    %58 = arith.mulf %56, %57 : vector<256x32xf32>
    %59 = arith.truncf %58 : vector<256x32xf32> to vector<256x32xbf16>
    %c1_25 = arith.constant 1 : index
    %c0_26 = arith.constant 0 : index
    %c0_27 = arith.constant 0 : index
    %60 = vector.load %arg7[%c1_25, %c0_26, %c0_27] : memref<2x32x64xbf16, #tpu.memory_space<vmem>>, vector<1x32x64xbf16>
    %61 = vector.shape_cast %60 : vector<1x32x64xbf16> to vector<32x64xbf16>
    %cst_28 = arith.constant dense<0.000000e+00> : vector<256x64xf32>
    %62 = tpu.matmul %59, %61, %cst_28 {dimension_numbers = #tpu.dot_dimension_numbers<[1], [0], [0], [1], [0, 0, 1, 1], [], []>} : vector<256x32xbf16>, vector<32x64xbf16>, vector<256x64xf32> -> vector<256x64xf32>
    %63 = arith.addf %36, %62 : vector<256x64xf32>
    %c0_29 = arith.constant 0 : index
    %c0_30 = arith.constant 0 : index
    %64 = vector.load %arg8[%c0_29, %c0_30] : memref<1x64xf32, #tpu.memory_space<vmem>>, vector<1x64xf32>
    %65 = vector.broadcast %64 : vector<1x64xf32> to vector<256x64xf32>
    %66 = arith.addf %63, %65 : vector<256x64xf32>
    %67 = vector.shape_cast %66 : vector<256x64xf32> to vector<8x32x64xf32>
    %c0_31 = arith.constant 0 : index
    %c0_32 = arith.constant 0 : index
    %c0_33 = arith.constant 0 : index
    %c0_34 = arith.constant 0 : index
    %68 = vector.load %arg9[%c0_31, %c0_32, %c0_33, %c0_34] : memref<1x8x32x64xf32, #tpu.memory_space<vmem>>, vector<1x8x32x64xf32>
    %69 = vector.shape_cast %68 : vector<1x8x32x64xf32> to vector<8x32x64xf32>
    %70 = vector.shape_cast %67 : vector<8x32x64xf32> to vector<1x8x32x64xf32>
    tpu.vector_store %arg9[%c0_31, %c0_32, %c0_33, %c0_34], %70 {strides = array<i32>} : memref<1x8x32x64xf32, #tpu.memory_space<vmem>>, vector<1x8x32x64xf32>,
    return
  }
  func.func @transform_0(%arg0: i32, %arg1: i32, %arg2: i32) -> (i32, i32, i32, i32) {
    %c0_i32 = arith.constant 0 : i32
    %c0_i32_0 = arith.constant 0 : i32
    return %arg2, %arg0, %arg1, %c0_i32 : i32, i32, i32, i32
  }
  func.func @transform_1(%arg0: i32, %arg1: i32, %arg2: i32) -> (i32, i32) {
    %c0_i32 = arith.constant 0 : i32
    %c0_i32_0 = arith.constant 0 : i32
    %c0_i32_1 = arith.constant 0 : i32
    return %c0_i32, %c0_i32_0 : i32, i32
  }
  func.func @transform_2(%arg0: i32, %arg1: i32, %arg2: i32) -> (i32, i32) {
    %c0_i32 = arith.constant 0 : i32
    %c0_i32_0 = arith.constant 0 : i32
    %c0_i32_1 = arith.constant 0 : i32
    return %c0_i32, %c0_i32_0 : i32, i32
  }
  func.func @transform_3(%arg0: i32, %arg1: i32, %arg2: i32) -> (i32, i32, i32) {
    %c0_i32 = arith.constant 0 : i32
    %c0_i32_0 = arith.constant 0 : i32
    %c0_i32_1 = arith.constant 0 : i32
    %c0_i32_2 = arith.constant 0 : i32
    return %c0_i32, %c0_i32_0, %c0_i32_1 : i32, i32, i32
  }
  func.func @transform_4(%arg0: i32, %arg1: i32, %arg2: i32) -> (i32, i32, i32) {
    %c0_i32 = arith.constant 0 : i32
    %c0_i32_0 = arith.constant 0 : i32
    %c0_i32_1 = arith.constant 0 : i32
    %c0_i32_2 = arith.constant 0 : i32
    return %c0_i32, %c0_i32_0, %c0_i32_1 : i32, i32, i32
  }
  func.func @transform_5(%arg0: i32, %arg1: i32, %arg2: i32) -> (i32, i32) {
    %c0_i32 = arith.constant 0 : i32
    %c0_i32_0 = arith.constant 0 : i32
    %c0_i32_1 = arith.constant 0 : i32
    return %c0_i32, %c0_i32_0 : i32, i32
  }
  func.func @transform_6(%arg0: i32, %arg1: i32, %arg2: i32) -> (i32, i32, i32, i32) {
    %c0_i32 = arith.constant 0 : i32
    %c0_i32_0 = arith.constant 0 : i32
    return %arg2, %arg0, %arg1, %c0_i32 : i32, i32, i32, i32
  }
}

</mosaic_0001>

<llo_original>
// kernel: tpu_custom_call.1
$region0: #{tpu_custom_call.1}
  #allocation0 [shape = 'u32[]', space=smem, size = 0x4, offset = 0x4, fixed_abs, tag = 'smem constant byte address 0x4 - core index']
  #allocation1 [shape = 'u32[144,128]{1,0:T(1,128)}', space=vmem, size = 0x12000, scoped, tag = 'internal scratch']
  %s0 = inlined_call_operand.hbm [shape: f32[2,32,32,64], index: 0, kind: input, shape index: {}]
  %s1 = inlined_call_operand.hbm [shape: bf16[64,192], index: 1, kind: input, shape index: {}]
  %s2 = inlined_call_operand.vmem [shape: f32[1,192], index: 2, kind: input, shape index: {}]
  %s3 = inlined_call_operand.hbm [shape: f32[2,256,256], index: 3, kind: input, shape index: {}]
  %s4 = inlined_call_operand.hbm [shape: bf16[2,32,64], index: 4, kind: input, shape index: {}]
  %s5 = inlined_call_operand.vmem [shape: f32[1,64], index: 5, kind: input, shape index: {}]
  %s6 = inlined_call_operand.hbm [shape: f32[2,32,32,64], index: 6, kind: output, shape index: {}]
  %s7 = sld [smem:[#allocation0]]
  $region73: #{tpu_custom_call.1} parent=0
    _
  %s9 = ssub.s32 1, %s7
  %s10 = scalar_select 0, %s9, %s7
  $region1: #{tpu_custom_call.1} parent=0
    #allocation2 [shape = 'u8[262144]{0}', space=vmem, size = 0x40000, scoped, tag = 'input window, operand 0']
    #allocation3 [shape = 's32[2]{0}', space=sflag, size = 0x8, scoped, tag = 'scoped memory for tpu_custom_call.1']
    #allocation4 [shape = 's32[2]{0}', space=sflag, size = 0x8, scoped, tag = 'scoped memory for tpu_custom_call.1']
    #allocation5 [shape = 'u8[32768]{0}', space=vmem, size = 0x8000, scoped, tag = 'input window, operand 1, single buffered']
    #allocation6 [shape = 's32[1]{0}', space=sflag, size = 0x4, scoped, tag = 'scoped memory for tpu_custom_call.1']
    #allocation7 [shape = 'u8[524288]{0}', space=vmem, size = 0x80000, scoped, tag = 'input window, operand 3, single buffered']
    #allocation8 [shape = 'u8[16384]{0}', space=vmem, size = 0x4000, scoped, tag = 'input window, operand 4, single buffered']
    #allocation9 [shape = 's32[1]{0}', space=sflag, size = 0x4, scoped, tag = 'scoped memory for tpu_custom_call.1']
    #allocation10 [shape = 'u8[262144]{0}', space=vmem, size = 0x40000, scoped, tag = 'output window, operand 0']
    %11 = vsyncpa [#allocation3], 0
    %s12 = scalar_lea.sflag [#allocation3], 1
    %13 = vsyncpa %s12, 0
    %14 = vsyncpa [#allocation6], 0
    %15 = vsyncpa [#allocation9], 0
    %16 = vsyncpa [#allocation4], 0
    %s17 = scalar_lea.sflag [#allocation4], 1
    %18 = vsyncpa %s17, 0
    loop: start=0, step=1, limit=10
    $region2: #{tpu_custom_call.1} parent=1 // loop_pre_header
      _
    $region3: #{tpu_custom_call.1} parent=1 // loop_header
      %s20 = sphi 0, %s24
      %p21 = scmp.ge.s32.totalorder %s20, 10
      %s27 = sphi 0, %s46
      %s28 = sphi 0, %s42
      %s29 = sphi 0, %s38
      %s30 = sphi 0, %s27
      %s31 = sphi 0, %s28
      %s32 = sphi 0, %s29
      %s33 = sphi 0, %s30
      %s34 = sphi 0, %s31
      %s35 = sphi 0, %s32
      %s53 = sphi 0, %s55
      %s56 = sphi 0, %s53
      %s57 = sphi 0, %s56
      %s73 = sphi 0, %s57
      %s77 = sphi 0, %s77
      %s79 = sphi 0, %s77
      %s80 = sphi 0, %s79
      %s94 = sphi 0, %s80
      %s98 = sphi 0, %s98
      %s100 = sphi 0, %s98
      %s101 = sphi 0, %s100
      %s115 = sphi 0, %s101
      %s119 = sphi 0, %s119
      %s121 = sphi 0, %s119
      %s122 = sphi 0, %s121
      %s136 = sphi 0, %s122
      %s140 = sphi 0, %s140
      %s142 = sphi 0, %s140
      %s143 = sphi 0, %s142
      %s157 = sphi 0, %s143
      %s161 = sphi 0, %s161
      %s163 = sphi 0, %s161
      %s164 = sphi 0, %s163
      %s178 = sphi 0, %s164
      %s188 = sphi 0, %s190
      %s191 = sphi 0, %s188
      %s192 = sphi 0, %s191
      %s208 = sphi 0, %s192
    $region4: #{tpu_custom_call.1} parent=1 // loop_header_branch
      %23 = sbr.rel (%p21) target = $region8
    $region5: #{tpu_custom_call.1} parent=1 // loop_body
      %s25 = ssub.s32 %s20, 1
      %s26 = ssub.s32 %s20, 2
      %s36 = sadd.s32 1, %s29
      %p37 = scmp.ge.s32.totalorder %s36, 2
      %s38 = scalar_select %p37, 0, %s36
      %s39 = sadd.s32 1, %s28
      %s40 = scalar_select %p37, %s39, %s28
      %p41 = scmp.ge.s32.totalorder %s40, 1
      %s42 = scalar_select %p41, 0, %s40
      %s43 = sadd.s32 1, %s27
      %s44 = scalar_select %p41, %s43, %s27
      %p45 = scmp.ge.s32.totalorder %s44, 4
      %s46 = scalar_select %p45, 0, %s44
      %s47 = ssub.s32 %s29, %s38
      %s48 = ssub.s32 %s27, %s46
      %s49 = sor.u32 %s47, %s48
      %s50 = ssub.s32 %s28, %s42
      %s51 = sor.u32 %s49, %s50
      %p52 = scmp.eq.s32.totalorder %s51, 0
      %s54 = sadd.s32 %s53, 1
      %s55 = scalar_select %p52, %s53, %s54
      %p58 = pneg %p52
      %p59 = scmp.eq.s32.totalorder %s20, 7
      %p60 = por %p58, %p59
      %p61 = scmp.ne.s32.totalorder %s53, %s56
      %p62 = scmp.eq.s32.totalorder %s20, 0
      %p63 = por %p61, %p62
      %p64 = scmp.ne.s32.totalorder %s53, %s56
      %p65 = scmp.eq.s32.totalorder %s25, 7
      %p66 = por %p64, %p65
      %p67 = scmp.ne.s32.totalorder %s56, %s57
      %p68 = scmp.eq.s32.totalorder %s25, 0
      %p69 = por %p67, %p68
      %p70 = scmp.ne.s32.totalorder %s56, %s57
      %p71 = scmp.eq.s32.totalorder %s26, 7
      %p72 = por %p70, %p71
      %p74 = scmp.ne.s32.totalorder %s57, %s73
      %p75 = scmp.eq.s32.totalorder %s26, 0
      %p76 = por %p74, %p75
      %s78 = sadd.s32 %s77, 1
      %p81 = scmp.eq.s32.totalorder %s20, 7
      %p82 = scmp.ne.s32.totalorder %s77, %s79
      %p83 = scmp.eq.s32.totalorder %s20, 0
      %p84 = por %p82, %p83
      %p85 = scmp.ne.s32.totalorder %s77, %s79
      %p86 = scmp.eq.s32.totalorder %s25, 7
      %p87 = por %p85, %p86
      %p88 = scmp.ne.s32.totalorder %s79, %s80
      %p89 = scmp.eq.s32.totalorder %s25, 0
      %p90 = por %p88, %p89
      %p91 = scmp.ne.s32.totalorder %s79, %s80
      %p92 = scmp.eq.s32.totalorder %s26, 7
      %p93 = por %p91, %p92
      %p95 = scmp.ne.s32.totalorder %s80, %s94
      %p96 = scmp.eq.s32.totalorder %s26, 0
      %p97 = por %p95, %p96
      %s99 = sadd.s32 %s98, 1
      %p102 = scmp.eq.s32.totalorder %s20, 7
      %p103 = scmp.ne.s32.totalorder %s98, %s100
      %p104 = scmp.eq.s32.totalorder %s20, 0
      %p105 = por %p103, %p104
      %p106 = scmp.ne.s32.totalorder %s98, %s100
      %p107 = scmp.eq.s32.totalorder %s25, 7
      %p108 = por %p106, %p107
      %p109 = scmp.ne.s32.totalorder %s100, %s101
      %p110 = scmp.eq.s32.totalorder %s25, 0
      %p111 = por %p109, %p110
      %p112 = scmp.ne.s32.totalorder %s100, %s101
      %p113 = scmp.eq.s32.totalorder %s26, 7
      %p114 = por %p112, %p113
      %p116 = scmp.ne.s32.totalorder %s101, %s115
      %p117 = scmp.eq.s32.totalorder %s26, 0
      %p118 = por %p116, %p117
      %s120 = sadd.s32 %s119, 1
      %p123 = scmp.eq.s32.totalorder %s20, 7
      %p124 = scmp.ne.s32.totalorder %s119, %s121
      %p125 = scmp.eq.s32.totalorder %s20, 0
      %p126 = por %p124, %p125
      %p127 = scmp.ne.s32.totalorder %s119, %s121
      %p128 = scmp.eq.s32.totalorder %s25, 7
      %p129 = por %p127, %p128
      %p130 = scmp.ne.s32.totalorder %s121, %s122
      %p131 = scmp.eq.s32.totalorder %s25, 0
      %p132 = por %p130, %p131
      %p133 = scmp.ne.s32.totalorder %s121, %s122
      %p134 = scmp.eq.s32.totalorder %s26, 7
      %p135 = por %p133, %p134
      %p137 = scmp.ne.s32.totalorder %s122, %s136
      %p138 = scmp.eq.s32.totalorder %s26, 0
      %p139 = por %p137, %p138
      %s141 = sadd.s32 %s140, 1
      %p144 = scmp.eq.s32.totalorder %s20, 7
      %p145 = scmp.ne.s32.totalorder %s140, %s142
      %p146 = scmp.eq.s32.totalorder %s20, 0
      %p147 = por %p145, %p146
      %p148 = scmp.ne.s32.totalorder %s140, %s142
      %p149 = scmp.eq.s32.totalorder %s25, 7
      %p150 = por %p148, %p149
      %p151 = scmp.ne.s32.totalorder %s142, %s143
      %p152 = scmp.eq.s32.totalorder %s25, 0
      %p153 = por %p151, %p152
      %p154 = scmp.ne.s32.totalorder %s142, %s143
      %p155 = scmp.eq.s32.totalorder %s26, 7
      %p156 = por %p154, %p155
      %p158 = scmp.ne.s32.totalorder %s143, %s157
      %p159 = scmp.eq.s32.totalorder %s26, 0
      %p160 = por %p158, %p159
      %s162 = sadd.s32 %s161, 1
      %p165 = scmp.eq.s32.totalorder %s20, 7
      %p166 = scmp.ne.s32.totalorder %s161, %s163
      %p167 = scmp.eq.s32.totalorder %s20, 0
      %p168 = por %p166, %p167
      %p169 = scmp.ne.s32.totalorder %s161, %s163
      %p170 = scmp.eq.s32.totalorder %s25, 7
      %p171 = por %p169, %p170
      %p172 = scmp.ne.s32.totalorder %s163, %s164
      %p173 = scmp.eq.s32.totalorder %s25, 0
      %p174 = por %p172, %p173
      %p175 = scmp.ne.s32.totalorder %s163, %s164
      %p176 = scmp.eq.s32.totalorder %s26, 7
      %p177 = por %p175, %p176
      %p179 = scmp.ne.s32.totalorder %s164, %s178
      %p180 = scmp.eq.s32.totalorder %s26, 0
      %p181 = por %p179, %p180
      %s182 = ssub.s32 %s29, %s38
      %s183 = ssub.s32 %s27, %s46
      %s184 = sor.u32 %s182, %s183
      %s185 = ssub.s32 %s28, %s42
      %s186 = sor.u32 %s184, %s185
      %p187 = scmp.eq.s32.totalorder %s186, 0
      %s189 = sadd.s32 %s188, 1
      %s190 = scalar_select %p187, %s188, %s189
      %p193 = pneg %p187
      %p194 = scmp.eq.s32.totalorder %s20, 7
      %p195 = por %p193, %p194
      %p196 = scmp.ne.s32.totalorder %s188, %s191
      %p197 = scmp.eq.s32.totalorder %s20, 0
      %p198 = por %p196, %p197
      %p199 = scmp.ne.s32.totalorder %s188, %s191
      %p200 = scmp.eq.s32.totalorder %s25, 7
      %p201 = por %p199, %p200
      %p202 = scmp.ne.s32.totalorder %s191, %s192
      %p203 = scmp.eq.s32.totalorder %s25, 0
      %p204 = por %p202, %p203
      %p205 = scmp.ne.s32.totalorder %s191, %s192
      %p206 = scmp.eq.s32.totalorder %s26, 7
      %p207 = por %p205, %p206
      %p209 = scmp.ne.s32.totalorder %s192, %s208
      %p210 = scmp.eq.s32.totalorder %s26, 0
      %p211 = por %p209, %p210
      %p212 = scmp.le.s32.totalorder 1, %s20
      %p213 = scmp.lt.s32.totalorder %s20, 9
      %p214 = pnand %p212, %p213
      %p215 = pneg %p214
      // Predicated region
      $region9: #{tpu_custom_call.1} parent=5 // pred_check
        _
      $region10: #{tpu_custom_call.1} parent=5 // pred_check_branch
        %217 = sbr.rel (%p214) target = $region12
      $region11: #{tpu_custom_call.1} parent=5 // pred_region
        %s218 = ssub.s32 %s20, 1
        // Predicated region
        $region13: #{tpu_custom_call.1} parent=11 // pred_check
          %p219 = pneg %p90
        $region14: #{tpu_custom_call.1} parent=11 // pred_check_branch
          %221 = sbr.rel (%p219) target = $region16
        $region15: #{tpu_custom_call.1} parent=11 // pred_region
          %s223 = ssub.s32 1024, 1024
          %224 = vsyncadd [#allocation6], %s223
          %s225 = sshll.u32 [#allocation5], 4
          %s226 = int_to_ptr.vmem [resolvable:$true] %s225
          %231 = dma.hbm_to_vmem [thread:$0]  %s1, 1024, %s226, [#allocation6], 128, 128, 8
        $region16: #{tpu_custom_call.1} parent=11 // pred_fallthru
          _
        // Predicated region
        $region17: #{tpu_custom_call.1} parent=11 // pred_check
          %p232 = pneg %p111
        $region18: #{tpu_custom_call.1} parent=11 // pred_check_branch
          %234 = sbr.rel (%p232) target = $region20
        $region19: #{tpu_custom_call.1} parent=11 // pred_region
          _
        $region20: #{tpu_custom_call.1} parent=11 // pred_fallthru
          _
        // Predicated region
        $region21: #{tpu_custom_call.1} parent=11 // pred_check
          %p235 = pneg %p132
        $region22: #{tpu_custom_call.1} parent=11 // pred_check_branch
          %237 = sbr.rel (%p235) target = $region24
        $region23: #{tpu_custom_call.1} parent=11 // pred_region
          %s239 = ssub.s32 16384, 16384
          %240 = vsyncadd [#allocation6], %s239
          %s241 = sshll.u32 [#allocation7], 4
          %s242 = int_to_ptr.vmem [resolvable:$true] %s241
          %247 = dma.hbm_to_vmem [thread:$0]  %s3, 16384, %s242, [#allocation6], 256, 256, 16
        $region24: #{tpu_custom_call.1} parent=11 // pred_fallthru
          _
        // Predicated region
        $region25: #{tpu_custom_call.1} parent=11 // pred_check
          %p248 = pneg %p153
        $region26: #{tpu_custom_call.1} parent=11 // pred_check_branch
          %250 = sbr.rel (%p248) target = $region28
        $region27: #{tpu_custom_call.1} parent=11 // pred_region
          %s252 = ssub.s32 512, 512
          %253 = vsyncadd [#allocation9], %s252
          %s254 = sshll.u32 [#allocation8], 4
          %s255 = int_to_ptr.vmem [resolvable:$true] %s254
          %260 = dma.hbm_to_vmem [thread:$0]  %s4, 512, %s255, [#allocation9], 64, 64, 4
        $region28: #{tpu_custom_call.1} parent=11 // pred_fallthru
          _
        // Predicated region
        $region29: #{tpu_custom_call.1} parent=11 // pred_check
          %p261 = pneg %p174
        $region30: #{tpu_custom_call.1} parent=11 // pred_check_branch
          %263 = sbr.rel (%p261) target = $region32
        $region31: #{tpu_custom_call.1} parent=11 // pred_region
          _
        $region32: #{tpu_custom_call.1} parent=11 // pred_fallthru
          _
      $region12: #{tpu_custom_call.1} parent=5 // pred_fallthru
        _
      %p264 = scmp.lt.s32.totalorder %s20, 8
      // Predicated region
      $region33: #{tpu_custom_call.1} parent=5 // pred_check
        %p265 = pneg %p264
      $region34: #{tpu_custom_call.1} parent=5 // pred_check_branch
        %267 = sbr.rel (%p265) target = $region36
      $region35: #{tpu_custom_call.1} parent=5 // pred_region
        // Predicated region
        $region37: #{tpu_custom_call.1} parent=35 // pred_check
          %p268 = pneg %p63
        $region38: #{tpu_custom_call.1} parent=35 // pred_check_branch
          %270 = sbr.rel (%p268) target = $region40
        $region39: #{tpu_custom_call.1} parent=35 // pred_region
          %s271 = sand.u32 %s53, 1
          %s272 = scalar_lea.sflag [#allocation3], %s271
          %s273 = sand.u32 %s53, 1
          %s274 = smul.addr %s273, 256
          %s275 = scalar_lea.vmem [#allocation2], %s274
          %s276 = smul.u32 8, %s27
          %s277 = smul.u32 4, %s28
          %s279 = ssub.s32 4096, 4096
          %280 = vsyncadd %s272, %s279
          %s281 = smul.addr %s276, 4
          %s282 = sadd.s32 %s277, %s281
          %s283 = smul.addr %s29, 128
          %s284 = sadd.s32 %s282, %s283
          %s285 = smul.addr %s284, 128
          %s286 = scalar_lea.hbm %s0, %s285
          %s287 = sshll.u32 %s275, 4
          %s288 = int_to_ptr.vmem [resolvable:$true] %s287
          %293 = dma.hbm_to_vmem [thread:$0]  %s286, 4096, %s288, %s272, 128, 128, 8
        $region40: #{tpu_custom_call.1} parent=35 // pred_fallthru
          _
      $region36: #{tpu_custom_call.1} parent=5 // pred_fallthru
        _
      %p294 = scmp.le.s32.totalorder 1, %s20
      %p295 = scmp.lt.s32.totalorder %s20, 9
      %p296 = pnand %p294, %p295
      %p297 = pneg %p296
      // Predicated region
      $region41: #{tpu_custom_call.1} parent=5 // pred_check
        _
      $region42: #{tpu_custom_call.1} parent=5 // pred_check_branch
        %299 = sbr.rel (%p296) target = $region44
      $region43: #{tpu_custom_call.1} parent=5 // pred_region
        %s300 = ssub.s32 %s20, 1
        %s301 = sand.u32 %s56, 1
        %s302 = scalar_lea.sflag [#allocation3], %s301
        %s303 = sand.u32 %s56, 1
        %s304 = smul.addr %s303, 256
        %s305 = scalar_lea.vmem [#allocation2], %s304
        // Predicated region
        $region45: #{tpu_custom_call.1} parent=43 // pred_check
          %p306 = pneg %p69
        $region46: #{tpu_custom_call.1} parent=43 // pred_check_branch
          %308 = sbr.rel (%p306) target = $region48
        $region47: #{tpu_custom_call.1} parent=43 // pred_region
          %309 = dma.done %s302, 4096
        $region48: #{tpu_custom_call.1} parent=43 // pred_fallthru
          _
        // Predicated region
        $region49: #{tpu_custom_call.1} parent=43 // pred_check
          %p310 = pneg %p90
        $region50: #{tpu_custom_call.1} parent=43 // pred_check_branch
          %312 = sbr.rel (%p310) target = $region52
        $region51: #{tpu_custom_call.1} parent=43 // pred_region
          %313 = dma.done [#allocation6], 1024
        $region52: #{tpu_custom_call.1} parent=43 // pred_fallthru
          _
        // Predicated region
        $region53: #{tpu_custom_call.1} parent=43 // pred_check
          %p314 = pneg %p132
        $region54: #{tpu_custom_call.1} parent=43 // pred_check_branch
          %316 = sbr.rel (%p314) target = $region56
        $region55: #{tpu_custom_call.1} parent=43 // pred_region
          %317 = dma.done [#allocation6], 16384
        $region56: #{tpu_custom_call.1} parent=43 // pred_fallthru
          _
        // Predicated region
        $region57: #{tpu_custom_call.1} parent=43 // pred_check
          %p318 = pneg %p153
        $region58: #{tpu_custom_call.1} parent=43 // pred_check_branch
          %320 = sbr.rel (%p318) target = $region60
        $region59: #{tpu_custom_call.1} parent=43 // pred_region
          %321 = dma.done [#allocation9], 512
        $region60: #{tpu_custom_call.1} parent=43 // pred_fallthru
          _
        %s322 = sand.u32 %s56, 1
        %s323 = scalar_lea.sflag [#allocation3], %s322
        %s324 = sand.u32 %s56, 1
        %s325 = smul.addr %s324, 256
        %s326 = scalar_lea.vmem [#allocation2], %s325
        %p327 = pneg %p69
        %p328 = pneg %p66
        %p329 = pneg %p90
        %p330 = pneg %p87
        %p331 = pneg %p111
        %p332 = pneg %p108
        %p333 = pneg %p132
        %p334 = pneg %p129
        %p335 = pneg %p153
        %p336 = pneg %p150
        %p337 = pneg %p174
        %p338 = pneg %p171
        %p339 = pneg %p204
        %p340 = pneg %p201
        %s341 = sand.u32 %s191, 1
        %s342 = scalar_lea.sflag [#allocation4], %s341
        %s343 = sand.u32 %s191, 1
        %s344 = smul.addr %s343, 256
        %s345 = scalar_lea.vmem [#allocation10], %s344
        %s346 = smul.u32 8, %s30
        %s347 = smul.u32 4, %s31
        %s348 = smul.u32 8, %s30
        %s349 = smul.u32 4, %s31
        %v351 = vld [vmem:[%s305] sm:$0xff]
        %v352 = vld [vmem:[%s305 + $0x8] sm:$0xff]
        %v353 = vld [vmem:[%s305 + $0x10] sm:$0xff]
        %v354 = vld [vmem:[%s305 + $0x18] sm:$0xff]
        %v355 = vld [vmem:[%s305 + $0x20] sm:$0xff]
        %v356 = vld [vmem:[%s305 + $0x28] sm:$0xff]
        %v357 = vld [vmem:[%s305 + $0x30] sm:$0xff]
        %v358 = vld [vmem:[%s305 + $0x38] sm:$0xff]
        %v359 = vld [vmem:[%s305 + $0x40] sm:$0xff]
        %v360 = vld [vmem:[%s305 + $0x48] sm:$0xff]
        %v361 = vld [vmem:[%s305 + $0x50] sm:$0xff]
        %v362 = vld [vmem:[%s305 + $0x58] sm:$0xff]
        %v363 = vld [vmem:[%s305 + $0x60] sm:$0xff]
        %v364 = vld [vmem:[%s305 + $0x68] sm:$0xff]
        %v365 = vld [vmem:[%s305 + $0x70] sm:$0xff]
        %v366 = vld [vmem:[%s305 + $0x78] sm:$0xff]
        %v367 = vld [vmem:[%s305 + $0x80] sm:$0xff]
        %v368 = vld [vmem:[%s305 + $0x88] sm:$0xff]
        %v369 = vld [vmem:[%s305 + $0x90] sm:$0xff]
        %v370 = vld [vmem:[%s305 + $0x98] sm:$0xff]
        %v371 = vld [vmem:[%s305 + $0xa0] sm:$0xff]
        %v372 = vld [vmem:[%s305 + $0xa8] sm:$0xff]
        %v373 = vld [vmem:[%s305 + $0xb0] sm:$0xff]
        %v374 = vld [vmem:[%s305 + $0xb8] sm:$0xff]
        %v375 = vld [vmem:[%s305 + $0xc0] sm:$0xff]
        %v376 = vld [vmem:[%s305 + $0xc8] sm:$0xff]
        %v377 = vld [vmem:[%s305 + $0xd0] sm:$0xff]
        %v378 = vld [vmem:[%s305 + $0xd8] sm:$0xff]
        %v379 = vld [vmem:[%s305 + $0xe0] sm:$0xff]
        %v380 = vld [vmem:[%s305 + $0xe8] sm:$0xff]
        %v381 = vld [vmem:[%s305 + $0xf0] sm:$0xff]
        %v382 = vld [vmem:[%s305 + $0xf8] sm:$0xff]
        %v383 = vpack.c.bf16 %v352, %v351
        %v384 = vpack.c.bf16 %v354, %v353
        %v385 = vpack.c.bf16 %v356, %v355
        %v386 = vpack.c.bf16 %v358, %v357
        %v387 = vpack.c.bf16 %v360, %v359
        %v388 = vpack.c.bf16 %v362, %v361
        %v389 = vpack.c.bf16 %v364, %v363
        %v390 = vpack.c.bf16 %v366, %v365
        %v391 = vpack.c.bf16 %v368, %v367
        %v392 = vpack.c.bf16 %v370, %v369
        %v393 = vpack.c.bf16 %v372, %v371
        %v394 = vpack.c.bf16 %v374, %v373
        %v395 = vpack.c.bf16 %v376, %v375
        %v396 = vpack.c.bf16 %v378, %v377
        %v397 = vpack.c.bf16 %v380, %v379
        %v398 = vpack.c.bf16 %v382, %v381
        %v399 = vld [vmem:[#allocation5] sm:$0xff]
        %v400 = vld [vmem:[#allocation5 + $0x8] sm:$0xff]
        %v401 = vld [vmem:[#allocation5 + $0x10] sm:$0xff]
        %v402 = vld [vmem:[#allocation5 + $0x18] sm:$0xff]
        %v403 = vld [vmem:[#allocation5 + $0x20] sm:$0xff]
        %v404 = vld [vmem:[#allocation5 + $0x28] sm:$0xff]
        %v405 = vld [vmem:[#allocation5 + $0x30] sm:$0xff]
        %v406 = vld [vmem:[#allocation5 + $0x38] sm:$0xff]
        %v407 = vld [vmem:[%s2] sm:$0x3]
        %v409 = vlaneseq
        %v410 = vshrl.u32 %v409, 7
        %v411 = vsub.s32 0, %v410
        %v412 = vrot.slane %v407, %v411
        %v413 = vlaneseq
        %v414 = vshrl.u32 %v413, 7
        %v415 = vsub.s32 1, %v414
        %v416 = vrot.slane %v407, %v415
        %v427 = vunpack.c.l.b16 %v399
        %v428 = vunpack.c.h.b16 %v399
        %v429 = vunpack.c.l.b16 %v400
        %v430 = vunpack.c.h.b16 %v400
        %v431 = vunpack.c.l.b16 %v401
        %v432 = vunpack.c.h.b16 %v401
        %v433 = vunpack.c.l.b16 %v402
        %v434 = vunpack.c.h.b16 %v402
        %v435 = vunpack.c.l.b16 %v403
        %v436 = vunpack.c.h.b16 %v403
        %v437 = vunpack.c.l.b16 %v404
        %v438 = vunpack.c.h.b16 %v404
        %v439 = vunpack.c.l.b16 %v405
        %v440 = vunpack.c.h.b16 %v405
        %v441 = vunpack.c.l.b16 %v406
        %v442 = vunpack.c.h.b16 %v406
        %v443 = vpack.c.b16 %v429, %v427
        %v444 = vpack.c.b16 %v430, %v428
        %v445 = vpack.c.b16 %v433, %v431
        %v446 = vpack.c.b16 %v434, %v432
        %v447 = vpack.c.b16 %v437, %v435
        %v448 = vpack.c.b16 %v438, %v436
        %v449 = vpack.c.b16 %v441, %v439
        %v450 = vpack.c.b16 %v442, %v440
        %vm459 = vcmask 523264
        %v461 = vsel %vm459, %v383, 0
        %v464 = vsel %vm459, %v384, 0
        %v467 = vsel %vm459, %v385, 0
        %v470 = vsel %vm459, %v386, 0
        %v473 = vsel %vm459, %v387, 0
        %v476 = vsel %vm459, %v388, 0
        %v479 = vsel %vm459, %v389, 0
        %v482 = vsel %vm459, %v390, 0
        %v485 = vsel %vm459, %v391, 0
        %v488 = vsel %vm459, %v392, 0
        %v491 = vsel %vm459, %v393, 0
        %v494 = vsel %vm459, %v394, 0
        %v497 = vsel %vm459, %v395, 0
        %v500 = vsel %vm459, %v396, 0
        %v503 = vsel %vm459, %v397, 0
        %v506 = vsel %vm459, %v398, 0
        %508 = vmatprep.subr.bf16.mxu0 %v444
        %509 = vmatpush1.bf16.msra.mxu0 %v443
        %510 = vmatprep.subr.bf16.mxu0 %v446
        %511 = vmatpush1.bf16.msra.mxu0 %v445
        %512 = vmatprep.subr.bf16.mxu0 %v448
        %513 = vmatpush1.bf16.msra.mxu0 %v447
        %514 = vmatprep.subr.bf16.mxu0 %v450
        %515 = vmatpush1.bf16.msra.mxu0 %v449
        %516 = vmatprep.subr.bf16.mxu0 0
        %517 = vmatpush1.bf16.msra.mxu0 0
        %518 = vmatprep.subr.bf16.mxu0 0
        %519 = vmatpush1.bf16.msra.mxu0 0
        %520 = vmatprep.subr.bf16.mxu0 0
        %521 = vmatpush1.bf16.msra.mxu0 0
        %522 = vmatprep.subr.bf16.mxu0 0
        %523 = vmatpush1.bf16.msra.mxu0 0
        %524 = vmatprep.subr.bf16.mxu0 0
        %525 = vmatpush1.bf16.msra.mxu0 0
        %526 = vmatprep.subr.bf16.mxu0 0
        %527 = vmatpush1.bf16.msra.mxu0 0
        %528 = vmatprep.subr.bf16.mxu0 0
        %529 = vmatpush1.bf16.msra.mxu0 0
        %530 = vmatprep.subr.bf16.mxu0 0
        %531 = vmatpush1.bf16.msra.mxu0 0
        %532 = vmatprep.subr.bf16.mxu0 0
        %533 = vmatpush1.bf16.msra.mxu0 0
        %534 = vmatprep.subr.bf16.mxu0 0
        %535 = vmatpush1.bf16.msra.mxu0 0
        %536 = vmatprep.subr.bf16.mxu0 0
        %537 = vmatpush1.bf16.msra.mxu0 0
        %538 = vmatprep.subr.bf16.mxu0 0
        %539 = vmatpush1.bf16.msra.mxu0 0
        %540 = vmatprep.mubr.bf16.mxu0 0
        %541 = vmatmul.mubr.bf16.gmra.mrb[0].mxu0 %v461
        %v542 = vpop.f32.mrb[0].mxu0
        %v543 = vadd.f32 %v412, %v542
        %v544 = vpop.f32.mrb[0].mxu0
        %v545 = vadd.f32 %v416, %v544
        %v546 = vpop.f32.mrb[0].mxu0
        %v547 = vadd.f32 %v412, %v546
        %v548 = vpop.f32.mrb[0].mxu0
        %v549 = vadd.f32 %v416, %v548
        %550 = vmatprep.mubr.bf16.mxu0 0
        %551 = vmatmul.mubr.bf16.gmra.mrb[0].mxu0 %v464
        %v552 = vpop.f32.mrb[0].mxu0
        %v553 = vadd.f32 %v412, %v552
        %v554 = vpop.f32.mrb[0].mxu0
        %v555 = vadd.f32 %v416, %v554
        %v556 = vpop.f32.mrb[0].mxu0
        %v557 = vadd.f32 %v412, %v556
        %v558 = vpop.f32.mrb[0].mxu0
        %v559 = vadd.f32 %v416, %v558
        %560 = vmatprep.mubr.bf16.mxu0 0
        %561 = vmatmul.mubr.bf16.gmra.mrb[0].mxu0 %v467
        %v562 = vpop.f32.mrb[0].mxu0
        %v563 = vadd.f32 %v412, %v562
        %v564 = vpop.f32.mrb[0].mxu0
        %v565 = vadd.f32 %v416, %v564
        %v566 = vpop.f32.mrb[0].mxu0
        %v567 = vadd.f32 %v412, %v566
        %v568 = vpop.f32.mrb[0].mxu0
        %v569 = vadd.f32 %v416, %v568
        %570 = vmatprep.mubr.bf16.mxu0 0
        %571 = vmatmul.mubr.bf16.gmra.mrb[0].mxu0 %v470
        %v572 = vpop.f32.mrb[0].mxu0
        %v573 = vadd.f32 %v412, %v572
        %v574 = vpop.f32.mrb[0].mxu0
        %v575 = vadd.f32 %v416, %v574
        %v576 = vpop.f32.mrb[0].mxu0
        %v577 = vadd.f32 %v412, %v576
        %v578 = vpop.f32.mrb[0].mxu0
        %v579 = vadd.f32 %v416, %v578
        %580 = vmatprep.mubr.bf16.mxu0 0
        %581 = vmatmul.mubr.bf16.gmra.mrb[0].mxu0 %v473
        %v582 = vpop.f32.mrb[0].mxu0
        %v583 = vadd.f32 %v412, %v582
        %v584 = vpop.f32.mrb[0].mxu0
        %v585 = vadd.f32 %v416, %v584
        %v586 = vpop.f32.mrb[0].mxu0
        %v587 = vadd.f32 %v412, %v586
        %v588 = vpop.f32.mrb[0].mxu0
        %v589 = vadd.f32 %v416, %v588
        %590 = vmatprep.mubr.bf16.mxu0 0
        %591 = vmatmul.mubr.bf16.gmra.mrb[0].mxu0 %v476
        %v592 = vpop.f32.mrb[0].mxu0
        %v593 = vadd.f32 %v412, %v592
        %v594 = vpop.f32.mrb[0].mxu0
        %v595 = vadd.f32 %v416, %v594
        %v596 = vpop.f32.mrb[0].mxu0
        %v597 = vadd.f32 %v412, %v596
        %v598 = vpop.f32.mrb[0].mxu0
        %v599 = vadd.f32 %v416, %v598
        %600 = vmatprep.mubr.bf16.mxu0 0
        %601 = vmatmul.mubr.bf16.gmra.mrb[0].mxu0 %v479
        %v602 = vpop.f32.mrb[0].mxu0
        %v603 = vadd.f32 %v412, %v602
        %v604 = vpop.f32.mrb[0].mxu0
        %v605 = vadd.f32 %v416, %v604
        %v606 = vpop.f32.mrb[0].mxu0
        %v607 = vadd.f32 %v412, %v606
        %v608 = vpop.f32.mrb[0].mxu0
        %v609 = vadd.f32 %v416, %v608
        %610 = vmatprep.mubr.bf16.mxu0 0
        %611 = vmatmul.mubr.bf16.gmra.mrb[0].mxu0 %v482
        %v612 = vpop.f32.mrb[0].mxu0
        %v613 = vadd.f32 %v412, %v612
        %v614 = vpop.f32.mrb[0].mxu0
        %v615 = vadd.f32 %v416, %v614
        %v616 = vpop.f32.mrb[0].mxu0
        %v617 = vadd.f32 %v412, %v616
        %v618 = vpop.f32.mrb[0].mxu0
        %v619 = vadd.f32 %v416, %v618
        %620 = vmatprep.mubr.bf16.mxu0 0
        %621 = vmatmul.mubr.bf16.gmra.mrb[0].mxu0 %v485
        %v622 = vpop.f32.mrb[0].mxu0
        %v623 = vadd.f32 %v412, %v622
        %v624 = vpop.f32.mrb[0].mxu0
        %v625 = vadd.f32 %v416, %v624
        %v626 = vpop.f32.mrb[0].mxu0
        %v627 = vadd.f32 %v412, %v626
        %v628 = vpop.f32.mrb[0].mxu0
        %v629 = vadd.f32 %v416, %v628
        %630 = vmatprep.mubr.bf16.mxu0 0
        %631 = vmatmul.mubr.bf16.gmra.mrb[0].mxu0 %v488
        %v632 = vpop.f32.mrb[0].mxu0
        %v633 = vadd.f32 %v412, %v632
        %v634 = vpop.f32.mrb[0].mxu0
        %v635 = vadd.f32 %v416, %v634
        %v636 = vpop.f32.mrb[0].mxu0
        %v637 = vadd.f32 %v412, %v636
        %v638 = vpop.f32.mrb[0].mxu0
        %v639 = vadd.f32 %v416, %v638
        %640 = vmatprep.mubr.bf16.mxu0 0
        %641 = vmatmul.mubr.bf16.gmra.mrb[0].mxu0 %v491
        %v642 = vpop.f32.mrb[0].mxu0
        %v643 = vadd.f32 %v412, %v642
        %v644 = vpop.f32.mrb[0].mxu0
        %v645 = vadd.f32 %v416, %v644
        %v646 = vpop.f32.mrb[0].mxu0
        %v647 = vadd.f32 %v412, %v646
        %v648 = vpop.f32.mrb[0].mxu0
        %v649 = vadd.f32 %v416, %v648
        %650 = vmatprep.mubr.bf16.mxu0 0
        %651 = vmatmul.mubr.bf16.gmra.mrb[0].mxu0 %v494
        %v652 = vpop.f32.mrb[0].mxu0
        %v653 = vadd.f32 %v412, %v652
        %v654 = vpop.f32.mrb[0].mxu0
        %v655 = vadd.f32 %v416, %v654
        %v656 = vpop.f32.mrb[0].mxu0
        %v657 = vadd.f32 %v412, %v656
        %v658 = vpop.f32.mrb[0].mxu0
        %v659 = vadd.f32 %v416, %v658
        %660 = vmatprep.mubr.bf16.mxu0 0
        %661 = vmatmul.mubr.bf16.gmra.mrb[0].mxu0 %v497
        %v662 = vpop.f32.mrb[0].mxu0
        %v663 = vadd.f32 %v412, %v662
        %v664 = vpop.f32.mrb[0].mxu0
        %v665 = vadd.f32 %v416, %v664
        %v666 = vpop.f32.mrb[0].mxu0
        %v667 = vadd.f32 %v412, %v666
        %v668 = vpop.f32.mrb[0].mxu0
        %v669 = vadd.f32 %v416, %v668
        %670 = vmatprep.mubr.bf16.mxu0 0
        %671 = vmatmul.mubr.bf16.gmra.mrb[0].mxu0 %v500
        %v672 = vpop.f32.mrb[0].mxu0
        %v673 = vadd.f32 %v412, %v672
        %v674 = vpop.f32.mrb[0].mxu0
        %v675 = vadd.f32 %v416, %v674
        %v676 = vpop.f32.mrb[0].mxu0
        %v677 = vadd.f32 %v412, %v676
        %v678 = vpop.f32.mrb[0].mxu0
        %v679 = vadd.f32 %v416, %v678
        %680 = vmatprep.mubr.bf16.mxu0 0
        %681 = vmatmul.mubr.bf16.gmra.mrb[0].mxu0 %v503
        %v682 = vpop.f32.mrb[0].mxu0
        %v683 = vadd.f32 %v412, %v682
        %v684 = vpop.f32.mrb[0].mxu0
        %v685 = vadd.f32 %v416, %v684
        %v686 = vpop.f32.mrb[0].mxu0
        %v687 = vadd.f32 %v412, %v686
        %v688 = vpop.f32.mrb[0].mxu0
        %v689 = vadd.f32 %v416, %v688
        %690 = vmatprep.mubr.bf16.mxu0 0
        %691 = vmatmul.mubr.bf16.gmra.mrb[0].mxu0 %v506
        %v692 = vpop.f32.mrb[0].mxu0
        %v693 = vadd.f32 %v412, %v692
        %v694 = vpop.f32.mrb[0].mxu0
        %v695 = vadd.f32 %v416, %v694
        %v696 = vpop.f32.mrb[0].mxu0
        %v697 = vadd.f32 %v412, %v696
        %v698 = vpop.f32.mrb[0].mxu0
        %v699 = vadd.f32 %v416, %v698
        %700 = vdwg.mxu0
        %v701 = vpack.c.bf16 %v547, %v543
        %v702 = vpack.c.bf16 %v557, %v553
        %v703 = vpack.c.bf16 %v567, %v563
        %v704 = vpack.c.bf16 %v577, %v573
        %v705 = vpack.c.bf16 %v587, %v583
        %v706 = vpack.c.bf16 %v597, %v593
        %v707 = vpack.c.bf16 %v607, %v603
        %v708 = vpack.c.bf16 %v617, %v613
        %v709 = vpack.c.bf16 %v627, %v623
        %v710 = vpack.c.bf16 %v637, %v633
        %v711 = vpack.c.bf16 %v647, %v643
        %v712 = vpack.c.bf16 %v657, %v653
        %v713 = vpack.c.bf16 %v667, %v663
        %v714 = vpack.c.bf16 %v677, %v673
        %v715 = vpack.c.bf16 %v687, %v683
        %v716 = vpack.c.bf16 %v697, %v693
        %v717 = vpack.c.bf16 %v549, %v545
        %v718 = vpack.c.bf16 %v559, %v555
        %v719 = vpack.c.bf16 %v569, %v565
        %v720 = vpack.c.bf16 %v579, %v575
        %v721 = vpack.c.bf16 %v589, %v585
        %v722 = vpack.c.bf16 %v599, %v595
        %v723 = vpack.c.bf16 %v609, %v605
        %v724 = vpack.c.bf16 %v619, %v615
        %v725 = vpack.c.bf16 %v629, %v625
        %v726 = vpack.c.bf16 %v639, %v635
        %v727 = vpack.c.bf16 %v649, %v645
        %v728 = vpack.c.bf16 %v659, %v655
        %v729 = vpack.c.bf16 %v669, %v665
        %v730 = vpack.c.bf16 %v679, %v675
        %v731 = vpack.c.bf16 %v689, %v685
        %v732 = vpack.c.bf16 %v699, %v695
        %v733 = vld [vmem:[#allocation7] sm:$0xff]
        %v734 = vld [vmem:[#allocation7 + $0x8] sm:$0xff]
        %v735 = vld [vmem:[#allocation7 + $0x10] sm:$0xff]
        %v736 = vld [vmem:[#allocation7 + $0x18] sm:$0xff]
        %v737 = vld [vmem:[#allocation7 + $0x20] sm:$0xff]
        %v738 = vld [vmem:[#allocation7 + $0x28] sm:$0xff]
        %v739 = vld [vmem:[#allocation7 + $0x30] sm:$0xff]
        %v740 = vld [vmem:[#allocation7 + $0x38] sm:$0xff]
        %v741 = vld [vmem:[#allocation7 + $0x40] sm:$0xff]
        %v742 = vld [vmem:[#allocation7 + $0x48] sm:$0xff]
        %v743 = vld [vmem:[#allocation7 + $0x50] sm:$0xff]
        %v744 = vld [vmem:[#allocation7 + $0x58] sm:$0xff]
        %v745 = vld [vmem:[#allocation7 + $0x60] sm:$0xff]
        %v746 = vld [vmem:[#allocation7 + $0x68] sm:$0xff]
        %v747 = vld [vmem:[#allocation7 + $0x70] sm:$0xff]
        %v748 = vld [vmem:[#allocation7 + $0x78] sm:$0xff]
        %v749 = vld [vmem:[#allocation7 + $0x80] sm:$0xff]
        %v750 = vld [vmem:[#allocation7 + $0x88] sm:$0xff]
        %v751 = vld [vmem:[#allocation7 + $0x90] sm:$0xff]
        %v752 = vld [vmem:[#allocation7 + $0x98] sm:$0xff]
        %v753 = vld [vmem:[#allocation7 + $0xa0] sm:$0xff]
        %v754 = vld [vmem:[#allocation7 + $0xa8] sm:$0xff]
        %v755 = vld [vmem:[#allocation7 + $0xb0] sm:$0xff]
        %v756 = vld [vmem:[#allocation7 + $0xb8] sm:$0xff]
        %v757 = vld [vmem:[#allocation7 + $0xc0] sm:$0xff]
        %v758 = vld [vmem:[#allocation7 + $0xc8] sm:$0xff]
        %v759 = vld [vmem:[#allocation7 + $0xd0] sm:$0xff]
        %v760 = vld [vmem:[#allocation7 + $0xd8] sm:$0xff]
        %v761 = vld [vmem:[#allocation7 + $0xe0] sm:$0xff]
        %v762 = vld [vmem:[#allocation7 + $0xe8] sm:$0xff]
        %v763 = vld [vmem:[#allocation7 + $0xf0] sm:$0xff]
        %v764 = vld [vmem:[#allocation7 + $0xf8] sm:$0xff]
        %v765 = vld [vmem:[#allocation7 + $0x100] sm:$0xff]
        %v766 = vld [vmem:[#allocation7 + $0x108] sm:$0xff]
        %v767 = vld [vmem:[#allocation7 + $0x110] sm:$0xff]
        %v768 = vld [vmem:[#allocation7 + $0x118] sm:$0xff]
        %v769 = vld [vmem:[#allocation7 + $0x120] sm:$0xff]
        %v770 = vld [vmem:[#allocation7 + $0x128] sm:$0xff]
        %v771 = vld [vmem:[#allocation7 + $0x130] sm:$0xff]
        %v772 = vld [vmem:[#allocation7 + $0x138] sm:$0xff]
        %v773 = vld [vmem:[#allocation7 + $0x140] sm:$0xff]
        %v774 = vld [vmem:[#allocation7 + $0x148] sm:$0xff]
        %v775 = vld [vmem:[#allocation7 + $0x150] sm:$0xff]
        %v776 = vld [vmem:[#allocation7 + $0x158] sm:$0xff]
        %v777 = vld [vmem:[#allocation7 + $0x160] sm:$0xff]
        %v778 = vld [vmem:[#allocation7 + $0x168] sm:$0xff]
        %v779 = vld [vmem:[#allocation7 + $0x170] sm:$0xff]
        %v780 = vld [vmem:[#allocation7 + $0x178] sm:$0xff]
        %v781 = vld [vmem:[#allocation7 + $0x180] sm:$0xff]
        %v782 = vld [vmem:[#allocation7 + $0x188] sm:$0xff]
        %v783 = vld [vmem:[#allocation7 + $0x190] sm:$0xff]
        %v784 = vld [vmem:[#allocation7 + $0x198] sm:$0xff]
        %v785 = vld [vmem:[#allocation7 + $0x1a0] sm:$0xff]
        %v786 = vld [vmem:[#allocation7 + $0x1a8] sm:$0xff]
        %v787 = vld [vmem:[#allocation7 + $0x1b0] sm:$0xff]
        %v788 = vld [vmem:[#allocation7 + $0x1b8] sm:$0xff]
        %v789 = vld [vmem:[#allocation7 + $0x1c0] sm:$0xff]
        %v790 = vld [vmem:[#allocation7 + $0x1c8] sm:$0xff]
        %v791 = vld [vmem:[#allocation7 + $0x1d0] sm:$0xff]
        %v792 = vld [vmem:[#allocation7 + $0x1d8] sm:$0xff]
        %v793 = vld [vmem:[#allocation7 + $0x1e0] sm:$0xff]
        %v794 = vld [vmem:[#allocation7 + $0x1e8] sm:$0xff]
        %v795 = vld [vmem:[#allocation7 + $0x1f0] sm:$0xff]
        %v796 = vld [vmem:[#allocation7 + $0x1f8] sm:$0xff]
        %813 = vrot.lane.b32.xlu0 %v701, 64
        %v814 = vpop.permute.xlu0 %813
        %815 = vrot.lane.b32.xlu0 %v702, 64
        %v816 = vpop.permute.xlu0 %815
        %817 = vrot.lane.b32.xlu0 %v703, 64
        %v818 = vpop.permute.xlu0 %817
        %819 = vrot.lane.b32.xlu0 %v704, 64
        %v820 = vpop.permute.xlu0 %819
        %821 = vrot.lane.b32.xlu0 %v705, 64
        %v822 = vpop.permute.xlu0 %821
        %823 = vrot.lane.b32.xlu0 %v706, 64
        %v824 = vpop.permute.xlu0 %823
        %825 = vrot.lane.b32.xlu0 %v707, 64
        %v826 = vpop.permute.xlu0 %825
        %827 = vrot.lane.b32.xlu0 %v708, 64
        %v828 = vpop.permute.xlu0 %827
        %829 = vrot.lane.b32.xlu0 %v709, 64
        %v830 = vpop.permute.xlu0 %829
        %831 = vrot.lane.b32.xlu0 %v710, 64
        %v832 = vpop.permute.xlu0 %831
        %833 = vrot.lane.b32.xlu0 %v711, 64
        %v834 = vpop.permute.xlu0 %833
        %835 = vrot.lane.b32.xlu0 %v712, 64
        %v836 = vpop.permute.xlu0 %835
        %837 = vrot.lane.b32.xlu0 %v713, 64
        %v838 = vpop.permute.xlu0 %837
        %839 = vrot.lane.b32.xlu0 %v714, 64
        %v840 = vpop.permute.xlu0 %839
        %841 = vrot.lane.b32.xlu0 %v715, 64
        %v842 = vpop.permute.xlu0 %841
        %843 = vrot.lane.b32.xlu0 %v716, 64
        %v844 = vpop.permute.xlu0 %843
        %vm845 = vcmask 261120
        %v847 = vsel %vm845, %v701, 0
        %v850 = vsel %vm845, %v702, 0
        %v853 = vsel %vm845, %v703, 0
        %v856 = vsel %vm845, %v704, 0
        %v859 = vsel %vm845, %v705, 0
        %v862 = vsel %vm845, %v706, 0
        %v865 = vsel %vm845, %v707, 0
        %v868 = vsel %vm845, %v708, 0
        %v871 = vsel %vm845, %v709, 0
        %v874 = vsel %vm845, %v710, 0
        %v877 = vsel %vm845, %v711, 0
        %v880 = vsel %vm845, %v712, 0
        %v883 = vsel %vm845, %v713, 0
        %v886 = vsel %vm845, %v714, 0
        %v889 = vsel %vm845, %v715, 0
        %v892 = vsel %vm845, %v716, 0
        %v895 = vsel %vm845, %v814, 0
        %v898 = vsel %vm845, %v816, 0
        %v901 = vsel %vm845, %v818, 0
        %v904 = vsel %vm845, %v820, 0
        %v907 = vsel %vm845, %v822, 0
        %v910 = vsel %vm845, %v824, 0
        %v913 = vsel %vm845, %v826, 0
        %v916 = vsel %vm845, %v828, 0
        %v919 = vsel %vm845, %v830, 0
        %v922 = vsel %vm845, %v832, 0
        %v925 = vsel %vm845, %v834, 0
        %v928 = vsel %vm845, %v836, 0
        %v931 = vsel %vm845, %v838, 0
        %v934 = vsel %vm845, %v840, 0
        %v937 = vsel %vm845, %v842, 0
        %v940 = vsel %vm845, %v844, 0
        %942 = vmatprep.subr.bf16.mxu0 0
        %943 = vmatpush1.bf16.xpose.msra.mxu0 %v895
        %944 = vmatprep.subr.bf16.mxu0 0
        %945 = vmatpush1.bf16.xpose.msra.mxu0 %v898
        %946 = vmatprep.subr.bf16.mxu0 0
        %947 = vmatpush1.bf16.xpose.msra.mxu0 %v901
        %948 = vmatprep.subr.bf16.mxu0 0
        %949 = vmatpush1.bf16.xpose.msra.mxu0 %v904
        %950 = vmatprep.subr.bf16.mxu0 0
        %951 = vmatpush1.bf16.xpose.msra.mxu0 %v907
        %952 = vmatprep.subr.bf16.mxu0 0
        %953 = vmatpush1.bf16.xpose.msra.mxu0 %v910
        %954 = vmatprep.subr.bf16.mxu0 0
        %955 = vmatpush1.bf16.xpose.msra.mxu0 %v913
        %956 = vmatprep.subr.bf16.mxu0 0
        %957 = vmatpush1.bf16.xpose.msra.mxu0 %v916
        %958 = vmatprep.subr.bf16.mxu0 0
        %959 = vmatpush1.bf16.xpose.msra.mxu0 %v919
        %960 = vmatprep.subr.bf16.mxu0 0
        %961 = vmatpush1.bf16.xpose.msra.mxu0 %v922
        %962 = vmatprep.subr.bf16.mxu0 0
        %963 = vmatpush1.bf16.xpose.msra.mxu0 %v925
        %964 = vmatprep.subr.bf16.mxu0 0
        %965 = vmatpush1.bf16.xpose.msra.mxu0 %v928
        %966 = vmatprep.subr.bf16.mxu0 0
        %967 = vmatpush1.bf16.xpose.msra.mxu0 %v931
        %968 = vmatprep.subr.bf16.mxu0 0
        %969 = vmatpush1.bf16.xpose.msra.mxu0 %v934
        %970 = vmatprep.subr.bf16.mxu0 0
        %971 = vmatpush1.bf16.xpose.msra.mxu0 %v937
        %972 = vmatprep.subr.bf16.mxu0 0
        %973 = vmatpush1.bf16.xpose.msra.mxu0 %v940
        %974 = vmatprep.mubr.bf16.mxu0 0
        %975 = vmatmul.mubr.bf16.gmra.mrb[0].mxu0 %v847
        %v976 = vpop.f32.mrb[0].mxu0
        %v977 = vadd.f32 %v733, %v976
        %v978 = vpop.f32.mrb[0].mxu0
        %v979 = vadd.f32 %v734, %v978
        %v980 = vpop.f32.mrb[0].mxu0
        %v981 = vadd.f32 %v735, %v980
        %v982 = vpop.f32.mrb[0].mxu0
        %v983 = vadd.f32 %v736, %v982
        %984 = vmatprep.mubr.bf16.mxu0 0
        %985 = vmatmul.mubr.bf16.gmra.mrb[0].mxu0 %v850
        %v986 = vpop.f32.mrb[0].mxu0
        %v987 = vadd.f32 %v737, %v986
        %v988 = vpop.f32.mrb[0].mxu0
        %v989 = vadd.f32 %v738, %v988
        %v990 = vpop.f32.mrb[0].mxu0
        %v991 = vadd.f32 %v739, %v990
        %v992 = vpop.f32.mrb[0].mxu0
        %v993 = vadd.f32 %v740, %v992
        %994 = vmatprep.mubr.bf16.mxu0 0
        %995 = vmatmul.mubr.bf16.gmra.mrb[0].mxu0 %v853
        %v996 = vpop.f32.mrb[0].mxu0
        %v997 = vadd.f32 %v741, %v996
        %v998 = vpop.f32.mrb[0].mxu0
        %v999 = vadd.f32 %v742, %v998
        %v1000 = vpop.f32.mrb[0].mxu0
        %v1001 = vadd.f32 %v743, %v1000
        %v1002 = vpop.f32.mrb[0].mxu0
        %v1003 = vadd.f32 %v744, %v1002
        %1004 = vmatprep.mubr.bf16.mxu0 0
        %1005 = vmatmul.mubr.bf16.gmra.mrb[0].mxu0 %v856
        %v1006 = vpop.f32.mrb[0].mxu0
        %v1007 = vadd.f32 %v745, %v1006
        %v1008 = vpop.f32.mrb[0].mxu0
        %v1009 = vadd.f32 %v746, %v1008
        %v1010 = vpop.f32.mrb[0].mxu0
        %v1011 = vadd.f32 %v747, %v1010
        %v1012 = vpop.f32.mrb[0].mxu0
        %v1013 = vadd.f32 %v748, %v1012
        %1014 = vmatprep.mubr.bf16.mxu0 0
        %1015 = vmatmul.mubr.bf16.gmra.mrb[0].mxu0 %v859
        %v1016 = vpop.f32.mrb[0].mxu0
        %v1017 = vadd.f32 %v749, %v1016
        %v1018 = vpop.f32.mrb[0].mxu0
        %v1019 = vadd.f32 %v750, %v1018
        %v1020 = vpop.f32.mrb[0].mxu0
        %v1021 = vadd.f32 %v751, %v1020
        %v1022 = vpop.f32.mrb[0].mxu0
        %v1023 = vadd.f32 %v752, %v1022
        %1024 = vmatprep.mubr.bf16.mxu0 0
        %1025 = vmatmul.mubr.bf16.gmra.mrb[0].mxu0 %v862
        %v1026 = vpop.f32.mrb[0].mxu0
        %v1027 = vadd.f32 %v753, %v1026
        %v1028 = vpop.f32.mrb[0].mxu0
        %v1029 = vadd.f32 %v754, %v1028
        %v1030 = vpop.f32.mrb[0].mxu0
        %v1031 = vadd.f32 %v755, %v1030
        %v1032 = vpop.f32.mrb[0].mxu0
        %v1033 = vadd.f32 %v756, %v1032
        %1034 = vmatprep.mubr.bf16.mxu0 0
        %1035 = vmatmul.mubr.bf16.gmra.mrb[0].mxu0 %v865
        %v1036 = vpop.f32.mrb[0].mxu0
        %v1037 = vadd.f32 %v757, %v1036
        %v1038 = vpop.f32.mrb[0].mxu0
        %v1039 = vadd.f32 %v758, %v1038
        %v1040 = vpop.f32.mrb[0].mxu0
        %v1041 = vadd.f32 %v759, %v1040
        %v1042 = vpop.f32.mrb[0].mxu0
        %v1043 = vadd.f32 %v760, %v1042
        %1044 = vmatprep.mubr.bf16.mxu0 0
        %1045 = vmatmul.mubr.bf16.gmra.mrb[0].mxu0 %v868
        %v1046 = vpop.f32.mrb[0].mxu0
        %v1047 = vadd.f32 %v761, %v1046
        %v1048 = vpop.f32.mrb[0].mxu0
        %v1049 = vadd.f32 %v762, %v1048
        %v1050 = vpop.f32.mrb[0].mxu0
        %v1051 = vadd.f32 %v763, %v1050
        %v1052 = vpop.f32.mrb[0].mxu0
        %v1053 = vadd.f32 %v764, %v1052
        %1054 = vmatprep.mubr.bf16.mxu0 0
        %1055 = vmatmul.mubr.bf16.gmra.mrb[0].mxu0 %v871
        %v1056 = vpop.f32.mrb[0].mxu0
        %v1057 = vadd.f32 %v765, %v1056
        %v1058 = vpop.f32.mrb[0].mxu0
        %v1059 = vadd.f32 %v766, %v1058
        %v1060 = vpop.f32.mrb[0].mxu0
        %v1061 = vadd.f32 %v767, %v1060
        %v1062 = vpop.f32.mrb[0].mxu0
        %v1063 = vadd.f32 %v768, %v1062
        %1064 = vmatprep.mubr.bf16.mxu0 0
        %1065 = vmatmul.mubr.bf16.gmra.mrb[0].mxu0 %v874
        %v1066 = vpop.f32.mrb[0].mxu0
        %v1067 = vadd.f32 %v769, %v1066
        %v1068 = vpop.f32.mrb[0].mxu0
        %v1069 = vadd.f32 %v770, %v1068
        %v1070 = vpop.f32.mrb[0].mxu0
        %v1071 = vadd.f32 %v771, %v1070
        %v1072 = vpop.f32.mrb[0].mxu0
        %v1073 = vadd.f32 %v772, %v1072
        %1074 = vmatprep.mubr.bf16.mxu0 0
        %1075 = vmatmul.mubr.bf16.gmra.mrb[0].mxu0 %v877
        %v1076 = vpop.f32.mrb[0].mxu0
        %v1077 = vadd.f32 %v773, %v1076
        %v1078 = vpop.f32.mrb[0].mxu0
        %v1079 = vadd.f32 %v774, %v1078
        %v1080 = vpop.f32.mrb[0].mxu0
        %v1081 = vadd.f32 %v775, %v1080
        %v1082 = vpop.f32.mrb[0].mxu0
        %v1083 = vadd.f32 %v776, %v1082
        %1084 = vmatprep.mubr.bf16.mxu0 0
        %1085 = vmatmul.mubr.bf16.gmra.mrb[0].mxu0 %v880
        %v1086 = vpop.f32.mrb[0].mxu0
        %v1087 = vadd.f32 %v777, %v1086
        %v1088 = vpop.f32.mrb[0].mxu0
        %v1089 = vadd.f32 %v778, %v1088
        %v1090 = vpop.f32.mrb[0].mxu0
        %v1091 = vadd.f32 %v779, %v1090
        %v1092 = vpop.f32.mrb[0].mxu0
        %v1093 = vadd.f32 %v780, %v1092
        %1094 = vmatprep.mubr.bf16.mxu0 0
        %1095 = vmatmul.mubr.bf16.gmra.mrb[0].mxu0 %v883
        %v1096 = vpop.f32.mrb[0].mxu0
        %v1097 = vadd.f32 %v781, %v1096
        %v1098 = vpop.f32.mrb[0].mxu0
        %v1099 = vadd.f32 %v782, %v1098
        %v1100 = vpop.f32.mrb[0].mxu0
        %v1101 = vadd.f32 %v783, %v1100
        %v1102 = vpop.f32.mrb[0].mxu0
        %v1103 = vadd.f32 %v784, %v1102
        %1104 = vmatprep.mubr.bf16.mxu0 0
        %1105 = vmatmul.mubr.bf16.gmra.mrb[0].mxu0 %v886
        %v1106 = vpop.f32.mrb[0].mxu0
        %v1107 = vadd.f32 %v785, %v1106
        %v1108 = vpop.f32.mrb[0].mxu0
        %v1109 = vadd.f32 %v786, %v1108
        %v1110 = vpop.f32.mrb[0].mxu0
        %v1111 = vadd.f32 %v787, %v1110
        %v1112 = vpop.f32.mrb[0].mxu0
        %v1113 = vadd.f32 %v788, %v1112
        %1114 = vmatprep.mubr.bf16.mxu0 0
        %1115 = vmatmul.mubr.bf16.gmra.mrb[0].mxu0 %v889
        %v1116 = vpop.f32.mrb[0].mxu0
        %v1117 = vadd.f32 %v789, %v1116
        %v1118 = vpop.f32.mrb[0].mxu0
        %v1119 = vadd.f32 %v790, %v1118
        %v1120 = vpop.f32.mrb[0].mxu0
        %v1121 = vadd.f32 %v791, %v1120
        %v1122 = vpop.f32.mrb[0].mxu0
        %v1123 = vadd.f32 %v792, %v1122
        %1124 = vmatprep.mubr.bf16.mxu0 0
        %1125 = vmatmul.mubr.bf16.gmra.mrb[0].mxu0 %v892
        %v1126 = vpop.f32.mrb[0].mxu0
        %v1127 = vadd.f32 %v793, %v1126
        %v1128 = vpop.f32.mrb[0].mxu0
        %v1129 = vadd.f32 %v794, %v1128
        %v1130 = vpop.f32.mrb[0].mxu0
        %v1131 = vadd.f32 %v795, %v1130
        %v1132 = vpop.f32.mrb[0].mxu0
        %v1133 = vadd.f32 %v796, %v1132
        %1134 = vdwg.mxu0
        %v1135 = vmax.f32 %v977, %v979
        %1136 = vmax.xlane.f32.xlu0 %v1135
        %v1137 = vpop.xlane.xlu0 %1136
        %v1138 = vmax.f32 %v981, %v983
        %1139 = vmax.xlane.f32.xlu0 %v1138
        %v1140 = vpop.xlane.xlu0 %1139
        %v1141 = vmax.f32 %v987, %v989
        %1142 = vmax.xlane.f32.xlu0 %v1141
        %v1143 = vpop.xlane.xlu0 %1142
        %v1144 = vmax.f32 %v991, %v993
        %1145 = vmax.xlane.f32.xlu0 %v1144
        %v1146 = vpop.xlane.xlu0 %1145
        %v1147 = vmax.f32 %v997, %v999
        %1148 = vmax.xlane.f32.xlu0 %v1147
        %v1149 = vpop.xlane.xlu0 %1148
        %v1150 = vmax.f32 %v1001, %v1003
        %1151 = vmax.xlane.f32.xlu0 %v1150
        %v1152 = vpop.xlane.xlu0 %1151
        %v1153 = vmax.f32 %v1007, %v1009
        %1154 = vmax.xlane.f32.xlu0 %v1153
        %v1155 = vpop.xlane.xlu0 %1154
        %v1156 = vmax.f32 %v1011, %v1013
        %1157 = vmax.xlane.f32.xlu0 %v1156
        %v1158 = vpop.xlane.xlu0 %1157
        %v1159 = vmax.f32 %v1017, %v1019
        %1160 = vmax.xlane.f32.xlu0 %v1159
        %v1161 = vpop.xlane.xlu0 %1160
        %v1162 = vmax.f32 %v1021, %v1023
        %1163 = vmax.xlane.f32.xlu0 %v1162
        %v1164 = vpop.xlane.xlu0 %1163
        %v1165 = vmax.f32 %v1027, %v1029
        %1166 = vmax.xlane.f32.xlu0 %v1165
        %v1167 = vpop.xlane.xlu0 %1166
        %v1168 = vmax.f32 %v1031, %v1033
        %1169 = vmax.xlane.f32.xlu0 %v1168
        %v1170 = vpop.xlane.xlu0 %1169
        %v1171 = vmax.f32 %v1037, %v1039
        %1172 = vmax.xlane.f32.xlu0 %v1171
        %v1173 = vpop.xlane.xlu0 %1172
        %v1174 = vmax.f32 %v1041, %v1043
        %1175 = vmax.xlane.f32.xlu0 %v1174
        %v1176 = vpop.xlane.xlu0 %1175
        %v1177 = vmax.f32 %v1047, %v1049
        %1178 = vmax.xlane.f32.xlu0 %v1177
        %v1179 = vpop.xlane.xlu0 %1178
        %v1180 = vmax.f32 %v1051, %v1053
        %1181 = vmax.xlane.f32.xlu0 %v1180
        %v1182 = vpop.xlane.xlu0 %1181
        %v1183 = vmax.f32 %v1057, %v1059
        %1184 = vmax.xlane.f32.xlu0 %v1183
        %v1185 = vpop.xlane.xlu0 %1184
        %v1186 = vmax.f32 %v1061, %v1063
        %1187 = vmax.xlane.f32.xlu0 %v1186
        %v1188 = vpop.xlane.xlu0 %1187
        %v1189 = vmax.f32 %v1067, %v1069
        %1190 = vmax.xlane.f32.xlu0 %v1189
        %v1191 = vpop.xlane.xlu0 %1190
        %v1192 = vmax.f32 %v1071, %v1073
        %1193 = vmax.xlane.f32.xlu0 %v1192
        %v1194 = vpop.xlane.xlu0 %1193
        %v1195 = vmax.f32 %v1077, %v1079
        %1196 = vmax.xlane.f32.xlu0 %v1195
        %v1197 = vpop.xlane.xlu0 %1196
        %v1198 = vmax.f32 %v1081, %v1083
        %1199 = vmax.xlane.f32.xlu0 %v1198
        %v1200 = vpop.xlane.xlu0 %1199
        %v1201 = vmax.f32 %v1087, %v1089
        %1202 = vmax.xlane.f32.xlu0 %v1201
        %v1203 = vpop.xlane.xlu0 %1202
        %v1204 = vmax.f32 %v1091, %v1093
        %1205 = vmax.xlane.f32.xlu0 %v1204
        %v1206 = vpop.xlane.xlu0 %1205
        %v1207 = vmax.f32 %v1097, %v1099
        %1208 = vmax.xlane.f32.xlu0 %v1207
        %v1209 = vpop.xlane.xlu0 %1208
        %v1210 = vmax.f32 %v1101, %v1103
        %1211 = vmax.xlane.f32.xlu0 %v1210
        %v1212 = vpop.xlane.xlu0 %1211
        %v1213 = vmax.f32 %v1107, %v1109
        %1214 = vmax.xlane.f32.xlu0 %v1213
        %v1215 = vpop.xlane.xlu0 %1214
        %v1216 = vmax.f32 %v1111, %v1113
        %1217 = vmax.xlane.f32.xlu0 %v1216
        %v1218 = vpop.xlane.xlu0 %1217
        %v1219 = vmax.f32 %v1117, %v1119
        %1220 = vmax.xlane.f32.xlu0 %v1219
        %v1221 = vpop.xlane.xlu0 %1220
        %v1222 = vmax.f32 %v1121, %v1123
        %1223 = vmax.xlane.f32.xlu0 %v1222
        %v1224 = vpop.xlane.xlu0 %1223
        %v1225 = vmax.f32 %v1127, %v1129
        %1226 = vmax.xlane.f32.xlu0 %v1225
        %v1227 = vpop.xlane.xlu0 %1226
        %v1228 = vmax.f32 %v1131, %v1133
        %1229 = vmax.xlane.f32.xlu0 %v1228
        %v1230 = vpop.xlane.xlu0 %1229
        %v1231 = vsub.f32 %v977, %v1137
        %v1232 = vsub.f32 %v979, %v1137
        %v1233 = vsub.f32 %v981, %v1140
        %v1234 = vsub.f32 %v983, %v1140
        %v1235 = vsub.f32 %v987, %v1143
        %v1236 = vsub.f32 %v989, %v1143
        %v1237 = vsub.f32 %v991, %v1146
        %v1238 = vsub.f32 %v993, %v1146
        %v1239 = vsub.f32 %v997, %v1149
        %v1240 = vsub.f32 %v999, %v1149
        %v1241 = vsub.f32 %v1001, %v1152
        %v1242 = vsub.f32 %v1003, %v1152
        %v1243 = vsub.f32 %v1007, %v1155
        %v1244 = vsub.f32 %v1009, %v1155
        %v1245 = vsub.f32 %v1011, %v1158
        %v1246 = vsub.f32 %v1013, %v1158
        %v1247 = vsub.f32 %v1017, %v1161
        %v1248 = vsub.f32 %v1019, %v1161
        %v1249 = vsub.f32 %v1021, %v1164
        %v1250 = vsub.f32 %v1023, %v1164
        %v1251 = vsub.f32 %v1027, %v1167
        %v1252 = vsub.f32 %v1029, %v1167
        %v1253 = vsub.f32 %v1031, %v1170
        %v1254 = vsub.f32 %v1033, %v1170
        %v1255 = vsub.f32 %v1037, %v1173
        %v1256 = vsub.f32 %v1039, %v1173
        %v1257 = vsub.f32 %v1041, %v1176
        %v1258 = vsub.f32 %v1043, %v1176
        %v1259 = vsub.f32 %v1047, %v1179
        %v1260 = vsub.f32 %v1049, %v1179
        %v1261 = vsub.f32 %v1051, %v1182
        %v1262 = vsub.f32 %v1053, %v1182
        %v1263 = vsub.f32 %v1057, %v1185
        %v1264 = vsub.f32 %v1059, %v1185
        %v1265 = vsub.f32 %v1061, %v1188
        %v1266 = vsub.f32 %v1063, %v1188
        %v1267 = vsub.f32 %v1067, %v1191
        %v1268 = vsub.f32 %v1069, %v1191
        %v1269 = vsub.f32 %v1071, %v1194
        %v1270 = vsub.f32 %v1073, %v1194
        %v1271 = vsub.f32 %v1077, %v1197
        %v1272 = vsub.f32 %v1079, %v1197
        %v1273 = vsub.f32 %v1081, %v1200
        %v1274 = vsub.f32 %v1083, %v1200
        %v1275 = vsub.f32 %v1087, %v1203
        %v1276 = vsub.f32 %v1089, %v1203
        %v1277 = vsub.f32 %v1091, %v1206
        %v1278 = vsub.f32 %v1093, %v1206
        %v1279 = vsub.f32 %v1097, %v1209
        %v1280 = vsub.f32 %v1099, %v1209
        %v1281 = vsub.f32 %v1101, %v1212
        %v1282 = vsub.f32 %v1103, %v1212
        %v1283 = vsub.f32 %v1107, %v1215
        %v1284 = vsub.f32 %v1109, %v1215
        %v1285 = vsub.f32 %v1111, %v1218
        %v1286 = vsub.f32 %v1113, %v1218
        %v1287 = vsub.f32 %v1117, %v1221
        %v1288 = vsub.f32 %v1119, %v1221
        %v1289 = vsub.f32 %v1121, %v1224
        %v1290 = vsub.f32 %v1123, %v1224
        %v1291 = vsub.f32 %v1127, %v1227
        %v1292 = vsub.f32 %v1129, %v1227
        %v1293 = vsub.f32 %v1131, %v1230
        %v1294 = vsub.f32 %v1133, %v1230
        %v1295 = vmul.f32 %v1231, 1.442695
        %v1296 = vpow.pop %v1295
        %v1297 = vmul.f32 %v1232, 1.442695
        %v1298 = vpow.pop %v1297
        %v1299 = vmul.f32 %v1233, 1.442695
        %v1300 = vpow.pop %v1299
        %v1301 = vmul.f32 %v1234, 1.442695
        %v1302 = vpow.pop %v1301
        %v1303 = vmul.f32 %v1235, 1.442695
        %v1304 = vpow.pop %v1303
        %v1305 = vmul.f32 %v1236, 1.442695
        %v1306 = vpow.pop %v1305
        %v1307 = vmul.f32 %v1237, 1.442695
        %v1308 = vpow.pop %v1307
        %v1309 = vmul.f32 %v1238, 1.442695
        %v1310 = vpow.pop %v1309
        %v1311 = vmul.f32 %v1239, 1.442695
        %v1312 = vpow.pop %v1311
        %v1313 = vmul.f32 %v1240, 1.442695
        %v1314 = vpow.pop %v1313
        %v1315 = vmul.f32 %v1241, 1.442695
        %v1316 = vpow.pop %v1315
        %v1317 = vmul.f32 %v1242, 1.442695
        %v1318 = vpow.pop %v1317
        %v1319 = vmul.f32 %v1243, 1.442695
        %v1320 = vpow.pop %v1319
        %v1321 = vmul.f32 %v1244, 1.442695
        %v1322 = vpow.pop %v1321
        %v1323 = vmul.f32 %v1245, 1.442695
        %v1324 = vpow.pop %v1323
        %v1325 = vmul.f32 %v1246, 1.442695
        %v1326 = vpow.pop %v1325
        %v1327 = vmul.f32 %v1247, 1.442695
        %v1328 = vpow.pop %v1327
        %v1329 = vmul.f32 %v1248, 1.442695
        %v1330 = vpow.pop %v1329
        %v1331 = vmul.f32 %v1249, 1.442695
        %v1332 = vpow.pop %v1331
        %v1333 = vmul.f32 %v1250, 1.442695
        %v1334 = vpow.pop %v1333
        %v1335 = vmul.f32 %v1251, 1.442695
        %v1336 = vpow.pop %v1335
        %v1337 = vmul.f32 %v1252, 1.442695
        %v1338 = vpow.pop %v1337
        %v1339 = vmul.f32 %v1253, 1.442695
        %v1340 = vpow.pop %v1339
        %v1341 = vmul.f32 %v1254, 1.442695
        %v1342 = vpow.pop %v1341
        %v1343 = vmul.f32 %v1255, 1.442695
        %v1344 = vpow.pop %v1343
        %v1345 = vmul.f32 %v1256, 1.442695
        %v1346 = vpow.pop %v1345
        %v1347 = vmul.f32 %v1257, 1.442695
        %v1348 = vpow.pop %v1347
        %v1349 = vmul.f32 %v1258, 1.442695
        %v1350 = vpow.pop %v1349
        %v1351 = vmul.f32 %v1259, 1.442695
        %v1352 = vpow.pop %v1351
        %v1353 = vmul.f32 %v1260, 1.442695
        %v1354 = vpow.pop %v1353
        %v1355 = vmul.f32 %v1261, 1.442695
        %v1356 = vpow.pop %v1355
        %v1357 = vmul.f32 %v1262, 1.442695
        %v1358 = vpow.pop %v1357
        %v1359 = vmul.f32 %v1263, 1.442695
        %v1360 = vpow.pop %v1359
        %v1361 = vmul.f32 %v1264, 1.442695
        %v1362 = vpow.pop %v1361
        %v1363 = vmul.f32 %v1265, 1.442695
        %v1364 = vpow.pop %v1363
        %v1365 = vmul.f32 %v1266, 1.442695
        %v1366 = vpow.pop %v1365
        %v1367 = vmul.f32 %v1267, 1.442695
        %v1368 = vpow.pop %v1367
        %v1369 = vmul.f32 %v1268, 1.442695
        %v1370 = vpow.pop %v1369
        %v1371 = vmul.f32 %v1269, 1.442695
        %v1372 = vpow.pop %v1371
        %v1373 = vmul.f32 %v1270, 1.442695
        %v1374 = vpow.pop %v1373
        %v1375 = vmul.f32 %v1271, 1.442695
        %v1376 = vpow.pop %v1375
        %v1377 = vmul.f32 %v1272, 1.442695
        %v1378 = vpow.pop %v1377
        %v1379 = vmul.f32 %v1273, 1.442695
        %v1380 = vpow.pop %v1379
        %v1381 = vmul.f32 %v1274, 1.442695
        %v1382 = vpow.pop %v1381
        %v1383 = vmul.f32 %v1275, 1.442695
        %v1384 = vpow.pop %v1383
        %v1385 = vmul.f32 %v1276, 1.442695
        %v1386 = vpow.pop %v1385
        %v1387 = vmul.f32 %v1277, 1.442695
        %v1388 = vpow.pop %v1387
        %v1389 = vmul.f32 %v1278, 1.442695
        %v1390 = vpow.pop %v1389
        %v1391 = vmul.f32 %v1279, 1.442695
        %v1392 = vpow.pop %v1391
        %v1393 = vmul.f32 %v1280, 1.442695
        %v1394 = vpow.pop %v1393
        %v1395 = vmul.f32 %v1281, 1.442695
        %v1396 = vpow.pop %v1395
        %v1397 = vmul.f32 %v1282, 1.442695
        %v1398 = vpow.pop %v1397
        %v1399 = vmul.f32 %v1283, 1.442695
        %v1400 = vpow.pop %v1399
        %v1401 = vmul.f32 %v1284, 1.442695
        %v1402 = vpow.pop %v1401
        %v1403 = vmul.f32 %v1285, 1.442695
        %v1404 = vpow.pop %v1403
        %v1405 = vmul.f32 %v1286, 1.442695
        %v1406 = vpow.pop %v1405
        %v1407 = vmul.f32 %v1287, 1.442695
        %v1408 = vpow.pop %v1407
        %v1409 = vmul.f32 %v1288, 1.442695
        %v1410 = vpow.pop %v1409
        %v1411 = vmul.f32 %v1289, 1.442695
        %v1412 = vpow.pop %v1411
        %v1413 = vmul.f32 %v1290, 1.442695
        %v1414 = vpow.pop %v1413
        %v1415 = vmul.f32 %v1291, 1.442695
        %v1416 = vpow.pop %v1415
        %v1417 = vmul.f32 %v1292, 1.442695
        %v1418 = vpow.pop %v1417
        %v1419 = vmul.f32 %v1293, 1.442695
        %v1420 = vpow.pop %v1419
        %v1421 = vmul.f32 %v1294, 1.442695
        %v1422 = vpow.pop %v1421
        %v1423 = vadd.f32 %v1296, %v1298
        %1424 = vadd.xlane.f32.xlu0 %v1423
        %v1425 = vpop.xlane.xlu0 %1424
        %v1426 = vadd.f32 %v1300, %v1302
        %1427 = vadd.xlane.f32.xlu0 %v1426
        %v1428 = vpop.xlane.xlu0 %1427
        %v1429 = vadd.f32 %v1304, %v1306
        %1430 = vadd.xlane.f32.xlu0 %v1429
        %v1431 = vpop.xlane.xlu0 %1430
        %v1432 = vadd.f32 %v1308, %v1310
        %1433 = vadd.xlane.f32.xlu0 %v1432
        %v1434 = vpop.xlane.xlu0 %1433
        %v1435 = vadd.f32 %v1312, %v1314
        %1436 = vadd.xlane.f32.xlu0 %v1435
        %v1437 = vpop.xlane.xlu0 %1436
        %v1438 = vadd.f32 %v1316, %v1318
        %1439 = vadd.xlane.f32.xlu0 %v1438
        %v1440 = vpop.xlane.xlu0 %1439
        %v1441 = vadd.f32 %v1320, %v1322
        %1442 = vadd.xlane.f32.xlu0 %v1441
        %v1443 = vpop.xlane.xlu0 %1442
        %v1444 = vadd.f32 %v1324, %v1326
        %1445 = vadd.xlane.f32.xlu0 %v1444
        %v1446 = vpop.xlane.xlu0 %1445
        %v1447 = vadd.f32 %v1328, %v1330
        %1448 = vadd.xlane.f32.xlu0 %v1447
        %v1449 = vpop.xlane.xlu0 %1448
        %v1450 = vadd.f32 %v1332, %v1334
        %1451 = vadd.xlane.f32.xlu0 %v1450
        %v1452 = vpop.xlane.xlu0 %1451
        %v1453 = vadd.f32 %v1336, %v1338
        %1454 = vadd.xlane.f32.xlu0 %v1453
        %v1455 = vpop.xlane.xlu0 %1454
        %v1456 = vadd.f32 %v1340, %v1342
        %1457 = vadd.xlane.f32.xlu0 %v1456
        %v1458 = vpop.xlane.xlu0 %1457
        %v1459 = vadd.f32 %v1344, %v1346
        %1460 = vadd.xlane.f32.xlu0 %v1459
        %v1461 = vpop.xlane.xlu0 %1460
        %v1462 = vadd.f32 %v1348, %v1350
        %1463 = vadd.xlane.f32.xlu0 %v1462
        %v1464 = vpop.xlane.xlu0 %1463
        %v1465 = vadd.f32 %v1352, %v1354
        %1466 = vadd.xlane.f32.xlu0 %v1465
        %v1467 = vpop.xlane.xlu0 %1466
        %v1468 = vadd.f32 %v1356, %v1358
        %1469 = vadd.xlane.f32.xlu0 %v1468
        %v1470 = vpop.xlane.xlu0 %1469
        %v1471 = vadd.f32 %v1360, %v1362
        %1472 = vadd.xlane.f32.xlu0 %v1471
        %v1473 = vpop.xlane.xlu0 %1472
        %v1474 = vadd.f32 %v1364, %v1366
        %1475 = vadd.xlane.f32.xlu0 %v1474
        %v1476 = vpop.xlane.xlu0 %1475
        %v1477 = vadd.f32 %v1368, %v1370
        %1478 = vadd.xlane.f32.xlu0 %v1477
        %v1479 = vpop.xlane.xlu0 %1478
        %v1480 = vadd.f32 %v1372, %v1374
        %1481 = vadd.xlane.f32.xlu0 %v1480
        %v1482 = vpop.xlane.xlu0 %1481
        %v1483 = vadd.f32 %v1376, %v1378
        %1484 = vadd.xlane.f32.xlu0 %v1483
        %v1485 = vpop.xlane.xlu0 %1484
        %v1486 = vadd.f32 %v1380, %v1382
        %1487 = vadd.xlane.f32.xlu0 %v1486
        %v1488 = vpop.xlane.xlu0 %1487
        %v1489 = vadd.f32 %v1384, %v1386
        %1490 = vadd.xlane.f32.xlu0 %v1489
        %v1491 = vpop.xlane.xlu0 %1490
        %v1492 = vadd.f32 %v1388, %v1390
        %1493 = vadd.xlane.f32.xlu0 %v1492
        %v1494 = vpop.xlane.xlu0 %1493
        %v1495 = vadd.f32 %v1392, %v1394
        %1496 = vadd.xlane.f32.xlu0 %v1495
        %v1497 = vpop.xlane.xlu0 %1496
        %v1498 = vadd.f32 %v1396, %v1398
        %1499 = vadd.xlane.f32.xlu0 %v1498
        %v1500 = vpop.xlane.xlu0 %1499
        %v1501 = vadd.f32 %v1400, %v1402
        %1502 = vadd.xlane.f32.xlu0 %v1501
        %v1503 = vpop.xlane.xlu0 %1502
        %v1504 = vadd.f32 %v1404, %v1406
        %1505 = vadd.xlane.f32.xlu0 %v1504
        %v1506 = vpop.xlane.xlu0 %1505
        %v1507 = vadd.f32 %v1408, %v1410
        %1508 = vadd.xlane.f32.xlu0 %v1507
        %v1509 = vpop.xlane.xlu0 %1508
        %v1510 = vadd.f32 %v1412, %v1414
        %1511 = vadd.xlane.f32.xlu0 %v1510
        %v1512 = vpop.xlane.xlu0 %1511
        %v1513 = vadd.f32 %v1416, %v1418
        %1514 = vadd.xlane.f32.xlu0 %v1513
        %v1515 = vpop.xlane.xlu0 %1514
        %v1516 = vadd.f32 %v1420, %v1422
        %1517 = vadd.xlane.f32.xlu0 %v1516
        %v1518 = vpop.xlane.xlu0 %1517
        %v1519 = vrcp.pop %v1425
        %v1520 = vrcp.pop %v1428
        %v1521 = vrcp.pop %v1431
        %v1522 = vrcp.pop %v1434
        %v1523 = vrcp.pop %v1437
        %v1524 = vrcp.pop %v1440
        %v1525 = vrcp.pop %v1443
        %v1526 = vrcp.pop %v1446
        %v1527 = vrcp.pop %v1449
        %v1528 = vrcp.pop %v1452
        %v1529 = vrcp.pop %v1455
        %v1530 = vrcp.pop %v1458
        %v1531 = vrcp.pop %v1461
        %v1532 = vrcp.pop %v1464
        %v1533 = vrcp.pop %v1467
        %v1534 = vrcp.pop %v1470
        %v1535 = vrcp.pop %v1473
        %v1536 = vrcp.pop %v1476
        %v1537 = vrcp.pop %v1479
        %v1538 = vrcp.pop %v1482
        %v1539 = vrcp.pop %v1485
        %v1540 = vrcp.pop %v1488
        %v1541 = vrcp.pop %v1491
        %v1542 = vrcp.pop %v1494
        %v1543 = vrcp.pop %v1497
        %v1544 = vrcp.pop %v1500
        %v1545 = vrcp.pop %v1503
        %v1546 = vrcp.pop %v1506
        %v1547 = vrcp.pop %v1509
        %v1548 = vrcp.pop %v1512
        %v1549 = vrcp.pop %v1515
        %v1550 = vrcp.pop %v1518
        %v1551 = vpack.c.bf16 %v1300, %v1296
        %v1552 = vpack.c.bf16 %v1302, %v1298
        %v1553 = vpack.c.bf16 %v1308, %v1304
        %v1554 = vpack.c.bf16 %v1310, %v1306
        %v1555 = vpack.c.bf16 %v1316, %v1312
        %v1556 = vpack.c.bf16 %v1318, %v1314
        %v1557 = vpack.c.bf16 %v1324, %v1320
        %v1558 = vpack.c.bf16 %v1326, %v1322
        %v1559 = vpack.c.bf16 %v1332, %v1328
        %v1560 = vpack.c.bf16 %v1334, %v1330
        %v1561 = vpack.c.bf16 %v1340, %v1336
        %v1562 = vpack.c.bf16 %v1342, %v1338
        %v1563 = vpack.c.bf16 %v1348, %v1344
        %v1564 = vpack.c.bf16 %v1350, %v1346
        %v1565 = vpack.c.bf16 %v1356, %v1352
        %v1566 = vpack.c.bf16 %v1358, %v1354
        %v1567 = vpack.c.bf16 %v1364, %v1360
        %v1568 = vpack.c.bf16 %v1366, %v1362
        %v1569 = vpack.c.bf16 %v1372, %v1368
        %v1570 = vpack.c.bf16 %v1374, %v1370
        %v1571 = vpack.c.bf16 %v1380, %v1376
        %v1572 = vpack.c.bf16 %v1382, %v1378
        %v1573 = vpack.c.bf16 %v1388, %v1384
        %v1574 = vpack.c.bf16 %v1390, %v1386
        %v1575 = vpack.c.bf16 %v1396, %v1392
        %v1576 = vpack.c.bf16 %v1398, %v1394
        %v1577 = vpack.c.bf16 %v1404, %v1400
        %v1578 = vpack.c.bf16 %v1406, %v1402
        %v1579 = vpack.c.bf16 %v1412, %v1408
        %v1580 = vpack.c.bf16 %v1414, %v1410
        %v1581 = vpack.c.bf16 %v1420, %v1416
        %v1582 = vpack.c.bf16 %v1422, %v1418
        %1583 = vmatprep.subr.bf16.mxu0 0
        %1584 = vmatpush1.bf16.msra.mxu0 %v717
        %1585 = vmatprep.subr.bf16.mxu0 0
        %1586 = vmatpush1.bf16.msra.mxu0 %v718
        %1587 = vmatprep.subr.bf16.mxu0 0
        %1588 = vmatpush1.bf16.msra.mxu0 %v719
        %1589 = vmatprep.subr.bf16.mxu0 0
        %1590 = vmatpush1.bf16.msra.mxu0 %v720
        %1591 = vmatprep.subr.bf16.mxu0 0
        %1592 = vmatpush1.bf16.msra.mxu0 %v721
        %1593 = vmatprep.subr.bf16.mxu0 0
        %1594 = vmatpush1.bf16.msra.mxu0 %v722
        %1595 = vmatprep.subr.bf16.mxu0 0
        %1596 = vmatpush1.bf16.msra.mxu0 %v723
        %1597 = vmatprep.subr.bf16.mxu0 0
        %1598 = vmatpush1.bf16.msra.mxu0 %v724
        %1599 = vmatprep.subr.bf16.mxu0 0
        %1600 = vmatpush1.bf16.msra.mxu0 %v725
        %1601 = vmatprep.subr.bf16.mxu0 0
        %1602 = vmatpush1.bf16.msra.mxu0 %v726
        %1603 = vmatprep.subr.bf16.mxu0 0
        %1604 = vmatpush1.bf16.msra.mxu0 %v727
        %1605 = vmatprep.subr.bf16.mxu0 0
        %1606 = vmatpush1.bf16.msra.mxu0 %v728
        %1607 = vmatprep.subr.bf16.mxu0 0
        %1608 = vmatpush1.bf16.msra.mxu0 %v729
        %1609 = vmatprep.subr.bf16.mxu0 0
        %1610 = vmatpush1.bf16.msra.mxu0 %v730
        %1611 = vmatprep.subr.bf16.mxu0 0
        %1612 = vmatpush1.bf16.msra.mxu0 %v731
        %1613 = vmatprep.subr.bf16.mxu0 0
        %1614 = vmatpush1.bf16.msra.mxu0 %v732
        %1615 = vmatprep.mubr.bf16.mxu0 %v1552
        %1616 = vmatmul.mubr.bf16.gmra.mrb[0].mxu0 %v1551
        %v1617 = vpop.f32.mrb[0].mxu0
        %v1618 = vadd.f32 0.0, %v1617
        %v1619 = vpop.f32.mrb[0].mxu0
        %v1620 = vpop.f32.mrb[0].mxu0
        %v1621 = vadd.f32 0.0, %v1620
        %v1622 = vpop.f32.mrb[0].mxu0
        %1623 = vmatprep.mubr.bf16.mxu0 %v1554
        %1624 = vmatmul.mubr.bf16.gmra.mrb[0].mxu0 %v1553
        %v1625 = vpop.f32.mrb[0].mxu0
        %v1626 = vadd.f32 0.0, %v1625
        %v1627 = vpop.f32.mrb[0].mxu0
        %v1628 = vpop.f32.mrb[0].mxu0
        %v1629 = vadd.f32 0.0, %v1628
        %v1630 = vpop.f32.mrb[0].mxu0
        %1631 = vmatprep.mubr.bf16.mxu0 %v1556
        %1632 = vmatmul.mubr.bf16.gmra.mrb[0].mxu0 %v1555
        %v1633 = vpop.f32.mrb[0].mxu0
        %v1634 = vadd.f32 0.0, %v1633
        %v1635 = vpop.f32.mrb[0].mxu0
        %v1636 = vpop.f32.mrb[0].mxu0
        %v1637 = vadd.f32 0.0, %v1636
        %v1638 = vpop.f32.mrb[0].mxu0
        %1639 = vmatprep.mubr.bf16.mxu0 %v1558
        %1640 = vmatmul.mubr.bf16.gmra.mrb[0].mxu0 %v1557
        %v1641 = vpop.f32.mrb[0].mxu0
        %v1642 = vadd.f32 0.0, %v1641
        %v1643 = vpop.f32.mrb[0].mxu0
        %v1644 = vpop.f32.mrb[0].mxu0
        %v1645 = vadd.f32 0.0, %v1644
        %v1646 = vpop.f32.mrb[0].mxu0
        %1647 = vmatprep.mubr.bf16.mxu0 %v1560
        %1648 = vmatmul.mubr.bf16.gmra.mrb[0].mxu0 %v1559
        %v1649 = vpop.f32.mrb[0].mxu0
        %v1650 = vadd.f32 0.0, %v1649
        %v1651 = vpop.f32.mrb[0].mxu0
        %v1652 = vpop.f32.mrb[0].mxu0
        %v1653 = vadd.f32 0.0, %v1652
        %v1654 = vpop.f32.mrb[0].mxu0
        %1655 = vmatprep.mubr.bf16.mxu0 %v1562
        %1656 = vmatmul.mubr.bf16.gmra.mrb[0].mxu0 %v1561
        %v1657 = vpop.f32.mrb[0].mxu0
        %v1658 = vadd.f32 0.0, %v1657
        %v1659 = vpop.f32.mrb[0].mxu0
        %v1660 = vpop.f32.mrb[0].mxu0
        %v1661 = vadd.f32 0.0, %v1660
        %v1662 = vpop.f32.mrb[0].mxu0
        %1663 = vmatprep.mubr.bf16.mxu0 %v1564
        %1664 = vmatmul.mubr.bf16.gmra.mrb[0].mxu0 %v1563
        %v1665 = vpop.f32.mrb[0].mxu0
        %v1666 = vadd.f32 0.0, %v1665
        %v1667 = vpop.f32.mrb[0].mxu0
        %v1668 = vpop.f32.mrb[0].mxu0
        %v1669 = vadd.f32 0.0, %v1668
        %v1670 = vpop.f32.mrb[0].mxu0
        %1671 = vmatprep.mubr.bf16.mxu0 %v1566
        %1672 = vmatmul.mubr.bf16.gmra.mrb[0].mxu0 %v1565
        %v1673 = vpop.f32.mrb[0].mxu0
        %v1674 = vadd.f32 0.0, %v1673
        %v1675 = vpop.f32.mrb[0].mxu0
        %v1676 = vpop.f32.mrb[0].mxu0
        %v1677 = vadd.f32 0.0, %v1676
        %v1678 = vpop.f32.mrb[0].mxu0
        %1679 = vmatprep.mubr.bf16.mxu0 %v1568
        %1680 = vmatmul.mubr.bf16.gmra.mrb[0].mxu0 %v1567
        %v1681 = vpop.f32.mrb[0].mxu0
        %v1682 = vadd.f32 0.0, %v1681
        %v1683 = vpop.f32.mrb[0].mxu0
        %v1684 = vpop.f32.mrb[0].mxu0
        %v1685 = vadd.f32 0.0, %v1684
        %v1686 = vpop.f32.mrb[0].mxu0
        %1687 = vmatprep.mubr.bf16.mxu0 %v1570
        %1688 = vmatmul.mubr.bf16.gmra.mrb[0].mxu0 %v1569
        %v1689 = vpop.f32.mrb[0].mxu0
        %v1690 = vadd.f32 0.0, %v1689
        %v1691 = vpop.f32.mrb[0].mxu0
        %v1692 = vpop.f32.mrb[0].mxu0
        %v1693 = vadd.f32 0.0, %v1692
        %v1694 = vpop.f32.mrb[0].mxu0
        %1695 = vmatprep.mubr.bf16.mxu0 %v1572
        %1696 = vmatmul.mubr.bf16.gmra.mrb[0].mxu0 %v1571
        %v1697 = vpop.f32.mrb[0].mxu0
        %v1698 = vadd.f32 0.0, %v1697
        %v1699 = vpop.f32.mrb[0].mxu0
        %v1700 = vpop.f32.mrb[0].mxu0
        %v1701 = vadd.f32 0.0, %v1700
        %v1702 = vpop.f32.mrb[0].mxu0
        %1703 = vmatprep.mubr.bf16.mxu0 %v1574
        %1704 = vmatmul.mubr.bf16.gmra.mrb[0].mxu0 %v1573
        %v1705 = vpop.f32.mrb[0].mxu0
        %v1706 = vadd.f32 0.0, %v1705
        %v1707 = vpop.f32.mrb[0].mxu0
        %v1708 = vpop.f32.mrb[0].mxu0
        %v1709 = vadd.f32 0.0, %v1708
        %v1710 = vpop.f32.mrb[0].mxu0
        %1711 = vmatprep.mubr.bf16.mxu0 %v1576
        %1712 = vmatmul.mubr.bf16.gmra.mrb[0].mxu0 %v1575
        %v1713 = vpop.f32.mrb[0].mxu0
        %v1714 = vadd.f32 0.0, %v1713
        %v1715 = vpop.f32.mrb[0].mxu0
        %v1716 = vpop.f32.mrb[0].mxu0
        %v1717 = vadd.f32 0.0, %v1716
        %v1718 = vpop.f32.mrb[0].mxu0
        %1719 = vmatprep.mubr.bf16.mxu0 %v1578
        %1720 = vmatmul.mubr.bf16.gmra.mrb[0].mxu0 %v1577
        %v1721 = vpop.f32.mrb[0].mxu0
        %v1722 = vadd.f32 0.0, %v1721
        %v1723 = vpop.f32.mrb[0].mxu0
        %v1724 = vpop.f32.mrb[0].mxu0
        %v1725 = vadd.f32 0.0, %v1724
        %v1726 = vpop.f32.mrb[0].mxu0
        %1727 = vmatprep.mubr.bf16.mxu0 %v1580
        %1728 = vmatmul.mubr.bf16.gmra.mrb[0].mxu0 %v1579
        %v1729 = vpop.f32.mrb[0].mxu0
        %v1730 = vadd.f32 0.0, %v1729
        %v1731 = vpop.f32.mrb[0].mxu0
        %v1732 = vpop.f32.mrb[0].mxu0
        %v1733 = vadd.f32 0.0, %v1732
        %v1734 = vpop.f32.mrb[0].mxu0
        %1735 = vmatprep.mubr.bf16.mxu0 %v1582
        %1736 = vmatmul.mubr.bf16.gmra.mrb[0].mxu0 %v1581
        %v1737 = vpop.f32.mrb[0].mxu0
        %v1738 = vadd.f32 0.0, %v1737
        %v1739 = vpop.f32.mrb[0].mxu0
        %v1740 = vpop.f32.mrb[0].mxu0
        %v1741 = vadd.f32 0.0, %v1740
        %v1742 = vpop.f32.mrb[0].mxu0
        %1743 = vdwg.mxu0
        %v1744 = vmul.f32 %v1618, %v1519
        %v1745 = vmul.f32 %v1621, %v1520
        %v1746 = vmul.f32 %v1626, %v1521
        %v1747 = vmul.f32 %v1629, %v1522
        %v1748 = vmul.f32 %v1634, %v1523
        %v1749 = vmul.f32 %v1637, %v1524
        %v1750 = vmul.f32 %v1642, %v1525
        %v1751 = vmul.f32 %v1645, %v1526
        %v1752 = vmul.f32 %v1650, %v1527
        %v1753 = vmul.f32 %v1653, %v1528
        %v1754 = vmul.f32 %v1658, %v1529
        %v1755 = vmul.f32 %v1661, %v1530
        %v1756 = vmul.f32 %v1666, %v1531
        %v1757 = vmul.f32 %v1669, %v1532
        %v1758 = vmul.f32 %v1674, %v1533
        %v1759 = vmul.f32 %v1677, %v1534
        %v1760 = vmul.f32 %v1682, %v1535
        %v1761 = vmul.f32 %v1685, %v1536
        %v1762 = vmul.f32 %v1690, %v1537
        %v1763 = vmul.f32 %v1693, %v1538
        %v1764 = vmul.f32 %v1698, %v1539
        %v1765 = vmul.f32 %v1701, %v1540
        %v1766 = vmul.f32 %v1706, %v1541
        %v1767 = vmul.f32 %v1709, %v1542
        %v1768 = vmul.f32 %v1714, %v1543
        %v1769 = vmul.f32 %v1717, %v1544
        %v1770 = vmul.f32 %v1722, %v1545
        %v1771 = vmul.f32 %v1725, %v1546
        %v1772 = vmul.f32 %v1730, %v1547
        %v1773 = vmul.f32 %v1733, %v1548
        %v1774 = vmul.f32 %v1738, %v1549
        %v1775 = vmul.f32 %v1741, %v1550
        %v1776 = vpack.c.bf16 %v1745, %v1744
        %v1777 = vpack.c.bf16 %v1747, %v1746
        %v1778 = vpack.c.bf16 %v1749, %v1748
        %v1779 = vpack.c.bf16 %v1751, %v1750
        %v1780 = vpack.c.bf16 %v1753, %v1752
        %v1781 = vpack.c.bf16 %v1755, %v1754
        %v1782 = vpack.c.bf16 %v1757, %v1756
        %v1783 = vpack.c.bf16 %v1759, %v1758
        %v1784 = vpack.c.bf16 %v1761, %v1760
        %v1785 = vpack.c.bf16 %v1763, %v1762
        %v1786 = vpack.c.bf16 %v1765, %v1764
        %v1787 = vpack.c.bf16 %v1767, %v1766
        %v1788 = vpack.c.bf16 %v1769, %v1768
        %v1789 = vpack.c.bf16 %v1771, %v1770
        %v1790 = vpack.c.bf16 %v1773, %v1772
        %v1791 = vpack.c.bf16 %v1775, %v1774
        %v1792 = vld [vmem:[#allocation8] sm:$0xf]
        %v1793 = vld [vmem:[#allocation8 + $0x4] sm:$0xf]
        %v1794 = vld [vmem:[#allocation8 + $0x8] sm:$0xf]
        %v1795 = vld [vmem:[#allocation8 + $0xc] sm:$0xf]
        %s1796 = scalar_lea.vmem [#allocation7], 512
        %v1797 = vld [vmem:[%s1796] sm:$0xff]
        %v1798 = vld [vmem:[%s1796 + $0x8] sm:$0xff]
        %v1799 = vld [vmem:[%s1796 + $0x10] sm:$0xff]
        %v1800 = vld [vmem:[%s1796 + $0x18] sm:$0xff]
        %v1801 = vld [vmem:[%s1796 + $0x20] sm:$0xff]
        %v1802 = vld [vmem:[%s1796 + $0x28] sm:$0xff]
        %v1803 = vld [vmem:[%s1796 + $0x30] sm:$0xff]
        %v1804 = vld [vmem:[%s1796 + $0x38] sm:$0xff]
        %v1805 = vld [vmem:[%s1796 + $0x40] sm:$0xff]
        %v1806 = vld [vmem:[%s1796 + $0x48] sm:$0xff]
        %v1807 = vld [vmem:[%s1796 + $0x50] sm:$0xff]
        %v1808 = vld [vmem:[%s1796 + $0x58] sm:$0xff]
        %v1809 = vld [vmem:[%s1796 + $0x60] sm:$0xff]
        %v1810 = vld [vmem:[%s1796 + $0x68] sm:$0xff]
        %v1811 = vld [vmem:[%s1796 + $0x70] sm:$0xff]
        %v1812 = vld [vmem:[%s1796 + $0x78] sm:$0xff]
        %v1813 = vld [vmem:[%s1796 + $0x80] sm:$0xff]
        %v1814 = vld [vmem:[%s1796 + $0x88] sm:$0xff]
        %v1815 = vld [vmem:[%s1796 + $0x90] sm:$0xff]
        %v1816 = vld [vmem:[%s1796 + $0x98] sm:$0xff]
        %v1817 = vld [vmem:[%s1796 + $0xa0] sm:$0xff]
        %v1818 = vld [vmem:[%s1796 + $0xa8] sm:$0xff]
        %v1819 = vld [vmem:[%s1796 + $0xb0] sm:$0xff]
        %v1820 = vld [vmem:[%s1796 + $0xb8] sm:$0xff]
        %v1821 = vld [vmem:[%s1796 + $0xc0] sm:$0xff]
        %v1822 = vld [vmem:[%s1796 + $0xc8] sm:$0xff]
        %v1823 = vld [vmem:[%s1796 + $0xd0] sm:$0xff]
        %v1824 = vld [vmem:[%s1796 + $0xd8] sm:$0xff]
        %v1825 = vld [vmem:[%s1796 + $0xe0] sm:$0xff]
        %v1826 = vld [vmem:[%s1796 + $0xe8] sm:$0xff]
        %v1827 = vld [vmem:[%s1796 + $0xf0] sm:$0xff]
        %v1828 = vld [vmem:[%s1796 + $0xf8] sm:$0xff]
        %v1829 = vld [vmem:[%s1796 + $0x100] sm:$0xff]
        %v1830 = vld [vmem:[%s1796 + $0x108] sm:$0xff]
        %v1831 = vld [vmem:[%s1796 + $0x110] sm:$0xff]
        %v1832 = vld [vmem:[%s1796 + $0x118] sm:$0xff]
        %v1833 = vld [vmem:[%s1796 + $0x120] sm:$0xff]
        %v1834 = vld [vmem:[%s1796 + $0x128] sm:$0xff]
        %v1835 = vld [vmem:[%s1796 + $0x130] sm:$0xff]
        %v1836 = vld [vmem:[%s1796 + $0x138] sm:$0xff]
        %v1837 = vld [vmem:[%s1796 + $0x140] sm:$0xff]
        %v1838 = vld [vmem:[%s1796 + $0x148] sm:$0xff]
        %v1839 = vld [vmem:[%s1796 + $0x150] sm:$0xff]
        %v1840 = vld [vmem:[%s1796 + $0x158] sm:$0xff]
        %v1841 = vld [vmem:[%s1796 + $0x160] sm:$0xff]
        %v1842 = vld [vmem:[%s1796 + $0x168] sm:$0xff]
        %v1843 = vld [vmem:[%s1796 + $0x170] sm:$0xff]
        %v1844 = vld [vmem:[%s1796 + $0x178] sm:$0xff]
        %v1845 = vld [vmem:[%s1796 + $0x180] sm:$0xff]
        %v1846 = vld [vmem:[%s1796 + $0x188] sm:$0xff]
        %v1847 = vld [vmem:[%s1796 + $0x190] sm:$0xff]
        %v1848 = vld [vmem:[%s1796 + $0x198] sm:$0xff]
        %v1849 = vld [vmem:[%s1796 + $0x1a0] sm:$0xff]
        %v1850 = vld [vmem:[%s1796 + $0x1a8] sm:$0xff]
        %v1851 = vld [vmem:[%s1796 + $0x1b0] sm:$0xff]
        %v1852 = vld [vmem:[%s1796 + $0x1b8] sm:$0xff]
        %v1853 = vld [vmem:[%s1796 + $0x1c0] sm:$0xff]
        %v1854 = vld [vmem:[%s1796 + $0x1c8] sm:$0xff]
        %v1855 = vld [vmem:[%s1796 + $0x1d0] sm:$0xff]
        %v1856 = vld [vmem:[%s1796 + $0x1d8] sm:$0xff]
        %v1857 = vld [vmem:[%s1796 + $0x1e0] sm:$0xff]
        %v1858 = vld [vmem:[%s1796 + $0x1e8] sm:$0xff]
        %v1859 = vld [vmem:[%s1796 + $0x1f0] sm:$0xff]
        %v1860 = vld [vmem:[%s1796 + $0x1f8] sm:$0xff]
        %1861 = vrot.lane.b32.xlu0 %v701, 96
        %v1862 = vpop.permute.xlu0 %1861
        %1863 = vrot.lane.b32.xlu0 %v702, 96
        %v1864 = vpop.permute.xlu0 %1863
        %1865 = vrot.lane.b32.xlu0 %v703, 96
        %v1866 = vpop.permute.xlu0 %1865
        %1867 = vrot.lane.b32.xlu0 %v704, 96
        %v1868 = vpop.permute.xlu0 %1867
        %1869 = vrot.lane.b32.xlu0 %v705, 96
        %v1870 = vpop.permute.xlu0 %1869
        %1871 = vrot.lane.b32.xlu0 %v706, 96
        %v1872 = vpop.permute.xlu0 %1871
        %1873 = vrot.lane.b32.xlu0 %v707, 96
        %v1874 = vpop.permute.xlu0 %1873
        %1875 = vrot.lane.b32.xlu0 %v708, 96
        %v1876 = vpop.permute.xlu0 %1875
        %1877 = vrot.lane.b32.xlu0 %v709, 96
        %v1878 = vpop.permute.xlu0 %1877
        %1879 = vrot.lane.b32.xlu0 %v710, 96
        %v1880 = vpop.permute.xlu0 %1879
        %1881 = vrot.lane.b32.xlu0 %v711, 96
        %v1882 = vpop.permute.xlu0 %1881
        %1883 = vrot.lane.b32.xlu0 %v712, 96
        %v1884 = vpop.permute.xlu0 %1883
        %1885 = vrot.lane.b32.xlu0 %v713, 96
        %v1886 = vpop.permute.xlu0 %1885
        %1887 = vrot.lane.b32.xlu0 %v714, 96
        %v1888 = vpop.permute.xlu0 %1887
        %1889 = vrot.lane.b32.xlu0 %v715, 96
        %v1890 = vpop.permute.xlu0 %1889
        %1891 = vrot.lane.b32.xlu0 %v716, 96
        %v1892 = vpop.permute.xlu0 %1891
        %1893 = vrot.lane.b32.xlu0 %v701, 32
        %v1894 = vpop.permute.xlu0 %1893
        %1895 = vrot.lane.b32.xlu0 %v702, 32
        %v1896 = vpop.permute.xlu0 %1895
        %1897 = vrot.lane.b32.xlu0 %v703, 32
        %v1898 = vpop.permute.xlu0 %1897
        %1899 = vrot.lane.b32.xlu0 %v704, 32
        %v1900 = vpop.permute.xlu0 %1899
        %1901 = vrot.lane.b32.xlu0 %v705, 32
        %v1902 = vpop.permute.xlu0 %1901
        %1903 = vrot.lane.b32.xlu0 %v706, 32
        %v1904 = vpop.permute.xlu0 %1903
        %1905 = vrot.lane.b32.xlu0 %v707, 32
        %v1906 = vpop.permute.xlu0 %1905
        %1907 = vrot.lane.b32.xlu0 %v708, 32
        %v1908 = vpop.permute.xlu0 %1907
        %1909 = vrot.lane.b32.xlu0 %v709, 32
        %v1910 = vpop.permute.xlu0 %1909
        %1911 = vrot.lane.b32.xlu0 %v710, 32
        %v1912 = vpop.permute.xlu0 %1911
        %1913 = vrot.lane.b32.xlu0 %v711, 32
        %v1914 = vpop.permute.xlu0 %1913
        %1915 = vrot.lane.b32.xlu0 %v712, 32
        %v1916 = vpop.permute.xlu0 %1915
        %1917 = vrot.lane.b32.xlu0 %v713, 32
        %v1918 = vpop.permute.xlu0 %1917
        %1919 = vrot.lane.b32.xlu0 %v714, 32
        %v1920 = vpop.permute.xlu0 %1919
        %1921 = vrot.lane.b32.xlu0 %v715, 32
        %v1922 = vpop.permute.xlu0 %1921
        %1923 = vrot.lane.b32.xlu0 %v716, 32
        %v1924 = vpop.permute.xlu0 %1923
        %v1926 = vsel %vm845, %v1862, 0
        %v1929 = vsel %vm845, %v1864, 0
        %v1932 = vsel %vm845, %v1866, 0
        %v1935 = vsel %vm845, %v1868, 0
        %v1938 = vsel %vm845, %v1870, 0
        %v1941 = vsel %vm845, %v1872, 0
        %v1944 = vsel %vm845, %v1874, 0
        %v1947 = vsel %vm845, %v1876, 0
        %v1950 = vsel %vm845, %v1878, 0
        %v1953 = vsel %vm845, %v1880, 0
        %v1956 = vsel %vm845, %v1882, 0
        %v1959 = vsel %vm845, %v1884, 0
        %v1962 = vsel %vm845, %v1886, 0
        %v1965 = vsel %vm845, %v1888, 0
        %v1968 = vsel %vm845, %v1890, 0
        %v1971 = vsel %vm845, %v1892, 0
        %v1974 = vsel %vm845, %v1894, 0
        %v1977 = vsel %vm845, %v1896, 0
        %v1980 = vsel %vm845, %v1898, 0
        %v1983 = vsel %vm845, %v1900, 0
        %v1986 = vsel %vm845, %v1902, 0
        %v1989 = vsel %vm845, %v1904, 0
        %v1992 = vsel %vm845, %v1906, 0
        %v1995 = vsel %vm845, %v1908, 0
        %v1998 = vsel %vm845, %v1910, 0
        %v2001 = vsel %vm845, %v1912, 0
        %v2004 = vsel %vm845, %v1914, 0
        %v2007 = vsel %vm845, %v1916, 0
        %v2010 = vsel %vm845, %v1918, 0
        %v2013 = vsel %vm845, %v1920, 0
        %v2016 = vsel %vm845, %v1922, 0
        %v2019 = vsel %vm845, %v1924, 0
        %2021 = vmatprep.subr.bf16.mxu0 0
        %2022 = vmatpush1.bf16.xpose.msra.mxu0 %v1974
        %2023 = vmatprep.subr.bf16.mxu0 0
        %2024 = vmatpush1.bf16.xpose.msra.mxu0 %v1977
        %2025 = vmatprep.subr.bf16.mxu0 0
        %2026 = vmatpush1.bf16.xpose.msra.mxu0 %v1980
        %2027 = vmatprep.subr.bf16.mxu0 0
        %2028 = vmatpush1.bf16.xpose.msra.mxu0 %v1983
        %2029 = vmatprep.subr.bf16.mxu0 0
        %2030 = vmatpush1.bf16.xpose.msra.mxu0 %v1986
        %2031 = vmatprep.subr.bf16.mxu0 0
        %2032 = vmatpush1.bf16.xpose.msra.mxu0 %v1989
        %2033 = vmatprep.subr.bf16.mxu0 0
        %2034 = vmatpush1.bf16.xpose.msra.mxu0 %v1992
        %2035 = vmatprep.subr.bf16.mxu0 0
        %2036 = vmatpush1.bf16.xpose.msra.mxu0 %v1995
        %2037 = vmatprep.subr.bf16.mxu0 0
        %2038 = vmatpush1.bf16.xpose.msra.mxu0 %v1998
        %2039 = vmatprep.subr.bf16.mxu0 0
        %2040 = vmatpush1.bf16.xpose.msra.mxu0 %v2001
        %2041 = vmatprep.subr.bf16.mxu0 0
        %2042 = vmatpush1.bf16.xpose.msra.mxu0 %v2004
        %2043 = vmatprep.subr.bf16.mxu0 0
        %2044 = vmatpush1.bf16.xpose.msra.mxu0 %v2007
        %2045 = vmatprep.subr.bf16.mxu0 0
        %2046 = vmatpush1.bf16.xpose.msra.mxu0 %v2010
        %2047 = vmatprep.subr.bf16.mxu0 0
        %2048 = vmatpush1.bf16.xpose.msra.mxu0 %v2013
        %2049 = vmatprep.subr.bf16.mxu0 0
        %2050 = vmatpush1.bf16.xpose.msra.mxu0 %v2016
        %2051 = vmatprep.subr.bf16.mxu0 0
        %2052 = vmatpush1.bf16.xpose.msra.mxu0 %v2019
        %2053 = vmatprep.mubr.bf16.mxu0 0
        %2054 = vmatmul.mubr.bf16.gmra.mrb[0].mxu0 %v1926
        %v2055 = vpop.f32.mrb[0].mxu0
        %v2056 = vadd.f32 %v1797, %v2055
        %v2057 = vpop.f32.mrb[0].mxu0
        %v2058 = vadd.f32 %v1798, %v2057
        %v2059 = vpop.f32.mrb[0].mxu0
        %v2060 = vadd.f32 %v1799, %v2059
        %v2061 = vpop.f32.mrb[0].mxu0
        %v2062 = vadd.f32 %v1800, %v2061
        %2063 = vmatprep.mubr.bf16.mxu0 0
        %2064 = vmatmul.mubr.bf16.gmra.mrb[0].mxu0 %v1929
        %v2065 = vpop.f32.mrb[0].mxu0
        %v2066 = vadd.f32 %v1801, %v2065
        %v2067 = vpop.f32.mrb[0].mxu0
        %v2068 = vadd.f32 %v1802, %v2067
        %v2069 = vpop.f32.mrb[0].mxu0
        %v2070 = vadd.f32 %v1803, %v2069
        %v2071 = vpop.f32.mrb[0].mxu0
        %v2072 = vadd.f32 %v1804, %v2071
        %2073 = vmatprep.mubr.bf16.mxu0 0
        %2074 = vmatmul.mubr.bf16.gmra.mrb[0].mxu0 %v1932
        %v2075 = vpop.f32.mrb[0].mxu0
        %v2076 = vadd.f32 %v1805, %v2075
        %v2077 = vpop.f32.mrb[0].mxu0
        %v2078 = vadd.f32 %v1806, %v2077
        %v2079 = vpop.f32.mrb[0].mxu0
        %v2080 = vadd.f32 %v1807, %v2079
        %v2081 = vpop.f32.mrb[0].mxu0
        %v2082 = vadd.f32 %v1808, %v2081
        %2083 = vmatprep.mubr.bf16.mxu0 0
        %2084 = vmatmul.mubr.bf16.gmra.mrb[0].mxu0 %v1935
        %v2085 = vpop.f32.mrb[0].mxu0
        %v2086 = vadd.f32 %v1809, %v2085
        %v2087 = vpop.f32.mrb[0].mxu0
        %v2088 = vadd.f32 %v1810, %v2087
        %v2089 = vpop.f32.mrb[0].mxu0
        %v2090 = vadd.f32 %v1811, %v2089
        %v2091 = vpop.f32.mrb[0].mxu0
        %v2092 = vadd.f32 %v1812, %v2091
        %2093 = vmatprep.mubr.bf16.mxu0 0
        %2094 = vmatmul.mubr.bf16.gmra.mrb[0].mxu0 %v1938
        %v2095 = vpop.f32.mrb[0].mxu0
        %v2096 = vadd.f32 %v1813, %v2095
        %v2097 = vpop.f32.mrb[0].mxu0
        %v2098 = vadd.f32 %v1814, %v2097
        %v2099 = vpop.f32.mrb[0].mxu0
        %v2100 = vadd.f32 %v1815, %v2099
        %v2101 = vpop.f32.mrb[0].mxu0
        %v2102 = vadd.f32 %v1816, %v2101
        %2103 = vmatprep.mubr.bf16.mxu0 0
        %2104 = vmatmul.mubr.bf16.gmra.mrb[0].mxu0 %v1941
        %v2105 = vpop.f32.mrb[0].mxu0
        %v2106 = vadd.f32 %v1817, %v2105
        %v2107 = vpop.f32.mrb[0].mxu0
        %v2108 = vadd.f32 %v1818, %v2107
        %v2109 = vpop.f32.mrb[0].mxu0
        %v2110 = vadd.f32 %v1819, %v2109
        %v2111 = vpop.f32.mrb[0].mxu0
        %v2112 = vadd.f32 %v1820, %v2111
        %2113 = vmatprep.mubr.bf16.mxu0 0
        %2114 = vmatmul.mubr.bf16.gmra.mrb[0].mxu0 %v1944
        %v2115 = vpop.f32.mrb[0].mxu0
        %v2116 = vadd.f32 %v1821, %v2115
        %v2117 = vpop.f32.mrb[0].mxu0
        %v2118 = vadd.f32 %v1822, %v2117
        %v2119 = vpop.f32.mrb[0].mxu0
        %v2120 = vadd.f32 %v1823, %v2119
        %v2121 = vpop.f32.mrb[0].mxu0
        %v2122 = vadd.f32 %v1824, %v2121
        %2123 = vmatprep.mubr.bf16.mxu0 0
        %2124 = vmatmul.mubr.bf16.gmra.mrb[0].mxu0 %v1947
        %v2125 = vpop.f32.mrb[0].mxu0
        %v2126 = vadd.f32 %v1825, %v2125
        %v2127 = vpop.f32.mrb[0].mxu0
        %v2128 = vadd.f32 %v1826, %v2127
        %v2129 = vpop.f32.mrb[0].mxu0
        %v2130 = vadd.f32 %v1827, %v2129
        %v2131 = vpop.f32.mrb[0].mxu0
        %v2132 = vadd.f32 %v1828, %v2131
        %2133 = vmatprep.mubr.bf16.mxu0 0
        %2134 = vmatmul.mubr.bf16.gmra.mrb[0].mxu0 %v1950
        %v2135 = vpop.f32.mrb[0].mxu0
        %v2136 = vadd.f32 %v1829, %v2135
        %v2137 = vpop.f32.mrb[0].mxu0
        %v2138 = vadd.f32 %v1830, %v2137
        %v2139 = vpop.f32.mrb[0].mxu0
        %v2140 = vadd.f32 %v1831, %v2139
        %v2141 = vpop.f32.mrb[0].mxu0
        %v2142 = vadd.f32 %v1832, %v2141
        %2143 = vmatprep.mubr.bf16.mxu0 0
        %2144 = vmatmul.mubr.bf16.gmra.mrb[0].mxu0 %v1953
        %v2145 = vpop.f32.mrb[0].mxu0
        %v2146 = vadd.f32 %v1833, %v2145
        %v2147 = vpop.f32.mrb[0].mxu0
        %v2148 = vadd.f32 %v1834, %v2147
        %v2149 = vpop.f32.mrb[0].mxu0
        %v2150 = vadd.f32 %v1835, %v2149
        %v2151 = vpop.f32.mrb[0].mxu0
        %v2152 = vadd.f32 %v1836, %v2151
        %2153 = vmatprep.mubr.bf16.mxu0 0
        %2154 = vmatmul.mubr.bf16.gmra.mrb[0].mxu0 %v1956
        %v2155 = vpop.f32.mrb[0].mxu0
        %v2156 = vadd.f32 %v1837, %v2155
        %v2157 = vpop.f32.mrb[0].mxu0
        %v2158 = vadd.f32 %v1838, %v2157
        %v2159 = vpop.f32.mrb[0].mxu0
        %v2160 = vadd.f32 %v1839, %v2159
        %v2161 = vpop.f32.mrb[0].mxu0
        %v2162 = vadd.f32 %v1840, %v2161
        %2163 = vmatprep.mubr.bf16.mxu0 0
        %2164 = vmatmul.mubr.bf16.gmra.mrb[0].mxu0 %v1959
        %v2165 = vpop.f32.mrb[0].mxu0
        %v2166 = vadd.f32 %v1841, %v2165
        %v2167 = vpop.f32.mrb[0].mxu0
        %v2168 = vadd.f32 %v1842, %v2167
        %v2169 = vpop.f32.mrb[0].mxu0
        %v2170 = vadd.f32 %v1843, %v2169
        %v2171 = vpop.f32.mrb[0].mxu0
        %v2172 = vadd.f32 %v1844, %v2171
        %2173 = vmatprep.mubr.bf16.mxu0 0
        %2174 = vmatmul.mubr.bf16.gmra.mrb[0].mxu0 %v1962
        %v2175 = vpop.f32.mrb[0].mxu0
        %v2176 = vadd.f32 %v1845, %v2175
        %v2177 = vpop.f32.mrb[0].mxu0
        %v2178 = vadd.f32 %v1846, %v2177
        %v2179 = vpop.f32.mrb[0].mxu0
        %v2180 = vadd.f32 %v1847, %v2179
        %v2181 = vpop.f32.mrb[0].mxu0
        %v2182 = vadd.f32 %v1848, %v2181
        %2183 = vmatprep.mubr.bf16.mxu0 0
        %2184 = vmatmul.mubr.bf16.gmra.mrb[0].mxu0 %v1965
        %v2185 = vpop.f32.mrb[0].mxu0
        %v2186 = vadd.f32 %v1849, %v2185
        %v2187 = vpop.f32.mrb[0].mxu0
        %v2188 = vadd.f32 %v1850, %v2187
        %v2189 = vpop.f32.mrb[0].mxu0
        %v2190 = vadd.f32 %v1851, %v2189
        %v2191 = vpop.f32.mrb[0].mxu0
        %v2192 = vadd.f32 %v1852, %v2191
        %2193 = vmatprep.mubr.bf16.mxu0 0
        %2194 = vmatmul.mubr.bf16.gmra.mrb[0].mxu0 %v1968
        %v2195 = vpop.f32.mrb[0].mxu0
        %v2196 = vadd.f32 %v1853, %v2195
        %v2197 = vpop.f32.mrb[0].mxu0
        %v2198 = vadd.f32 %v1854, %v2197
        %v2199 = vpop.f32.mrb[0].mxu0
        %v2200 = vadd.f32 %v1855, %v2199
        %v2201 = vpop.f32.mrb[0].mxu0
        %v2202 = vadd.f32 %v1856, %v2201
        %2203 = vmatprep.mubr.bf16.mxu0 0
        %2204 = vmatmul.mubr.bf16.gmra.mrb[0].mxu0 %v1971
        %v2205 = vpop.f32.mrb[0].mxu0
        %v2206 = vadd.f32 %v1857, %v2205
        %v2207 = vpop.f32.mrb[0].mxu0
        %v2208 = vadd.f32 %v1858, %v2207
        %v2209 = vpop.f32.mrb[0].mxu0
        %v2210 = vadd.f32 %v1859, %v2209
        %v2211 = vpop.f32.mrb[0].mxu0
        %v2212 = vadd.f32 %v1860, %v2211
        %2213 = vdwg.mxu0
        %v2214 = vmax.f32 %v2056, %v2058
        %2215 = vmax.xlane.f32.xlu0 %v2214
        %v2216 = vpop.xlane.xlu0 %2215
        %v2217 = vmax.f32 %v2060, %v2062
        %2218 = vmax.xlane.f32.xlu0 %v2217
        %v2219 = vpop.xlane.xlu0 %2218
        %v2220 = vmax.f32 %v2066, %v2068
        %2221 = vmax.xlane.f32.xlu0 %v2220
        %v2222 = vpop.xlane.xlu0 %2221
        %v2223 = vmax.f32 %v2070, %v2072
        %2224 = vmax.xlane.f32.xlu0 %v2223
        %v2225 = vpop.xlane.xlu0 %2224
        %v2226 = vmax.f32 %v2076, %v2078
        %2227 = vmax.xlane.f32.xlu0 %v2226
        %v2228 = vpop.xlane.xlu0 %2227
        %v2229 = vmax.f32 %v2080, %v2082
        %2230 = vmax.xlane.f32.xlu0 %v2229
        %v2231 = vpop.xlane.xlu0 %2230
        %v2232 = vmax.f32 %v2086, %v2088
        %2233 = vmax.xlane.f32.xlu0 %v2232
        %v2234 = vpop.xlane.xlu0 %2233
        %v2235 = vmax.f32 %v2090, %v2092
        %2236 = vmax.xlane.f32.xlu0 %v2235
        %v2237 = vpop.xlane.xlu0 %2236
        %v2238 = vmax.f32 %v2096, %v2098
        %2239 = vmax.xlane.f32.xlu0 %v2238
        %v2240 = vpop.xlane.xlu0 %2239
        %v2241 = vmax.f32 %v2100, %v2102
        %2242 = vmax.xlane.f32.xlu0 %v2241
        %v2243 = vpop.xlane.xlu0 %2242
        %v2244 = vmax.f32 %v2106, %v2108
        %2245 = vmax.xlane.f32.xlu0 %v2244
        %v2246 = vpop.xlane.xlu0 %2245
        %v2247 = vmax.f32 %v2110, %v2112
        %2248 = vmax.xlane.f32.xlu0 %v2247
        %v2249 = vpop.xlane.xlu0 %2248
        %v2250 = vmax.f32 %v2116, %v2118
        %2251 = vmax.xlane.f32.xlu0 %v2250
        %v2252 = vpop.xlane.xlu0 %2251
        %v2253 = vmax.f32 %v2120, %v2122
        %2254 = vmax.xlane.f32.xlu0 %v2253
        %v2255 = vpop.xlane.xlu0 %2254
        %v2256 = vmax.f32 %v2126, %v2128
        %2257 = vmax.xlane.f32.xlu0 %v2256
        %v2258 = vpop.xlane.xlu0 %2257
        %v2259 = vmax.f32 %v2130, %v2132
        %2260 = vmax.xlane.f32.xlu0 %v2259
        %v2261 = vpop.xlane.xlu0 %2260
        %v2262 = vmax.f32 %v2136, %v2138
        %2263 = vmax.xlane.f32.xlu0 %v2262
        %v2264 = vpop.xlane.xlu0 %2263
        %v2265 = vmax.f32 %v2140, %v2142
        %2266 = vmax.xlane.f32.xlu0 %v2265
        %v2267 = vpop.xlane.xlu0 %2266
        %v2268 = vmax.f32 %v2146, %v2148
        %2269 = vmax.xlane.f32.xlu0 %v2268
        %v2270 = vpop.xlane.xlu0 %2269
        %v2271 = vmax.f32 %v2150, %v2152
        %2272 = vmax.xlane.f32.xlu0 %v2271
        %v2273 = vpop.xlane.xlu0 %2272
        %v2274 = vmax.f32 %v2156, %v2158
        %2275 = vmax.xlane.f32.xlu0 %v2274
        %v2276 = vpop.xlane.xlu0 %2275
        %v2277 = vmax.f32 %v2160, %v2162
        %2278 = vmax.xlane.f32.xlu0 %v2277
        %v2279 = vpop.xlane.xlu0 %2278
        %v2280 = vmax.f32 %v2166, %v2168
        %2281 = vmax.xlane.f32.xlu0 %v2280
        %v2282 = vpop.xlane.xlu0 %2281
        %v2283 = vmax.f32 %v2170, %v2172
        %2284 = vmax.xlane.f32.xlu0 %v2283
        %v2285 = vpop.xlane.xlu0 %2284
        %v2286 = vmax.f32 %v2176, %v2178
        %2287 = vmax.xlane.f32.xlu0 %v2286
        %v2288 = vpop.xlane.xlu0 %2287
        %v2289 = vmax.f32 %v2180, %v2182
        %2290 = vmax.xlane.f32.xlu0 %v2289
        %v2291 = vpop.xlane.xlu0 %2290
        %v2292 = vmax.f32 %v2186, %v2188
        %2293 = vmax.xlane.f32.xlu0 %v2292
        %v2294 = vpop.xlane.xlu0 %2293
        %v2295 = vmax.f32 %v2190, %v2192
        %2296 = vmax.xlane.f32.xlu0 %v2295
        %v2297 = vpop.xlane.xlu0 %2296
        %v2298 = vmax.f32 %v2196, %v2198
        %2299 = vmax.xlane.f32.xlu0 %v2298
        %v2300 = vpop.xlane.xlu0 %2299
        %v2301 = vmax.f32 %v2200, %v2202
        %2302 = vmax.xlane.f32.xlu0 %v2301
        %v2303 = vpop.xlane.xlu0 %2302
        %v2304 = vmax.f32 %v2206, %v2208
        %2305 = vmax.xlane.f32.xlu0 %v2304
        %v2306 = vpop.xlane.xlu0 %2305
        %v2307 = vmax.f32 %v2210, %v2212
        %2308 = vmax.xlane.f32.xlu0 %v2307
        %v2309 = vpop.xlane.xlu0 %2308
        %v2310 = vsub.f32 %v2056, %v2216
        %v2311 = vsub.f32 %v2058, %v2216
        %v2312 = vsub.f32 %v2060, %v2219
        %v2313 = vsub.f32 %v2062, %v2219
        %v2314 = vsub.f32 %v2066, %v2222
        %v2315 = vsub.f32 %v2068, %v2222
        %v2316 = vsub.f32 %v2070, %v2225
        %v2317 = vsub.f32 %v2072, %v2225
        %v2318 = vsub.f32 %v2076, %v2228
        %v2319 = vsub.f32 %v2078, %v2228
        %v2320 = vsub.f32 %v2080, %v2231
        %v2321 = vsub.f32 %v2082, %v2231
        %v2322 = vsub.f32 %v2086, %v2234
        %v2323 = vsub.f32 %v2088, %v2234
        %v2324 = vsub.f32 %v2090, %v2237
        %v2325 = vsub.f32 %v2092, %v2237
        %v2326 = vsub.f32 %v2096, %v2240
        %v2327 = vsub.f32 %v2098, %v2240
        %v2328 = vsub.f32 %v2100, %v2243
        %v2329 = vsub.f32 %v2102, %v2243
        %v2330 = vsub.f32 %v2106, %v2246
        %v2331 = vsub.f32 %v2108, %v2246
        %v2332 = vsub.f32 %v2110, %v2249
        %v2333 = vsub.f32 %v2112, %v2249
        %v2334 = vsub.f32 %v2116, %v2252
        %v2335 = vsub.f32 %v2118, %v2252
        %v2336 = vsub.f32 %v2120, %v2255
        %v2337 = vsub.f32 %v2122, %v2255
        %v2338 = vsub.f32 %v2126, %v2258
        %v2339 = vsub.f32 %v2128, %v2258
        %v2340 = vsub.f32 %v2130, %v2261
        %v2341 = vsub.f32 %v2132, %v2261
        %v2342 = vsub.f32 %v2136, %v2264
        %v2343 = vsub.f32 %v2138, %v2264
        %v2344 = vsub.f32 %v2140, %v2267
        %v2345 = vsub.f32 %v2142, %v2267
        %v2346 = vsub.f32 %v2146, %v2270
        %v2347 = vsub.f32 %v2148, %v2270
        %v2348 = vsub.f32 %v2150, %v2273
        %v2349 = vsub.f32 %v2152, %v2273
        %v2350 = vsub.f32 %v2156, %v2276
        %v2351 = vsub.f32 %v2158, %v2276
        %v2352 = vsub.f32 %v2160, %v2279
        %v2353 = vsub.f32 %v2162, %v2279
        %v2354 = vsub.f32 %v2166, %v2282
        %v2355 = vsub.f32 %v2168, %v2282
        %v2356 = vsub.f32 %v2170, %v2285
        %v2357 = vsub.f32 %v2172, %v2285
        %v2358 = vsub.f32 %v2176, %v2288
        %v2359 = vsub.f32 %v2178, %v2288
        %v2360 = vsub.f32 %v2180, %v2291
        %v2361 = vsub.f32 %v2182, %v2291
        %v2362 = vsub.f32 %v2186, %v2294
        %v2363 = vsub.f32 %v2188, %v2294
        %v2364 = vsub.f32 %v2190, %v2297
        %v2365 = vsub.f32 %v2192, %v2297
        %v2366 = vsub.f32 %v2196, %v2300
        %v2367 = vsub.f32 %v2198, %v2300
        %v2368 = vsub.f32 %v2200, %v2303
        %v2369 = vsub.f32 %v2202, %v2303
        %v2370 = vsub.f32 %v2206, %v2306
        %v2371 = vsub.f32 %v2208, %v2306
        %v2372 = vsub.f32 %v2210, %v2309
        %v2373 = vsub.f32 %v2212, %v2309
        %v2374 = vmul.f32 %v2310, 1.442695
        %v2375 = vpow.pop %v2374
        %v2376 = vmul.f32 %v2311, 1.442695
        %v2377 = vpow.pop %v2376
        %v2378 = vmul.f32 %v2312, 1.442695
        %v2379 = vpow.pop %v2378
        %v2380 = vmul.f32 %v2313, 1.442695
        %v2381 = vpow.pop %v2380
        %v2382 = vmul.f32 %v2314, 1.442695
        %v2383 = vpow.pop %v2382
        %v2384 = vmul.f32 %v2315, 1.442695
        %v2385 = vpow.pop %v2384
        %v2386 = vmul.f32 %v2316, 1.442695
        %v2387 = vpow.pop %v2386
        %v2388 = vmul.f32 %v2317, 1.442695
        %v2389 = vpow.pop %v2388
        %v2390 = vmul.f32 %v2318, 1.442695
        %v2391 = vpow.pop %v2390
        %v2392 = vmul.f32 %v2319, 1.442695
        %v2393 = vpow.pop %v2392
        %v2394 = vmul.f32 %v2320, 1.442695
        %v2395 = vpow.pop %v2394
        %v2396 = vmul.f32 %v2321, 1.442695
        %v2397 = vpow.pop %v2396
        %v2398 = vmul.f32 %v2322, 1.442695
        %v2399 = vpow.pop %v2398
        %v2400 = vmul.f32 %v2323, 1.442695
        %v2401 = vpow.pop %v2400
        %v2402 = vmul.f32 %v2324, 1.442695
        %v2403 = vpow.pop %v2402
        %v2404 = vmul.f32 %v2325, 1.442695
        %v2405 = vpow.pop %v2404
        %v2406 = vmul.f32 %v2326, 1.442695
        %v2407 = vpow.pop %v2406
        %v2408 = vmul.f32 %v2327, 1.442695
        %v2409 = vpow.pop %v2408
        %v2410 = vmul.f32 %v2328, 1.442695
        %v2411 = vpow.pop %v2410
        %v2412 = vmul.f32 %v2329, 1.442695
        %v2413 = vpow.pop %v2412
        %v2414 = vmul.f32 %v2330, 1.442695
        %v2415 = vpow.pop %v2414
        %v2416 = vmul.f32 %v2331, 1.442695
        %v2417 = vpow.pop %v2416
        %v2418 = vmul.f32 %v2332, 1.442695
        %v2419 = vpow.pop %v2418
        %v2420 = vmul.f32 %v2333, 1.442695
        %v2421 = vpow.pop %v2420
        %v2422 = vmul.f32 %v2334, 1.442695
        %v2423 = vpow.pop %v2422
        %v2424 = vmul.f32 %v2335, 1.442695
        %v2425 = vpow.pop %v2424
        %v2426 = vmul.f32 %v2336, 1.442695
        %v2427 = vpow.pop %v2426
        %v2428 = vmul.f32 %v2337, 1.442695
        %v2429 = vpow.pop %v2428
        %v2430 = vmul.f32 %v2338, 1.442695
        %v2431 = vpow.pop %v2430
        %v2432 = vmul.f32 %v2339, 1.442695
        %v2433 = vpow.pop %v2432
        %v2434 = vmul.f32 %v2340, 1.442695
        %v2435 = vpow.pop %v2434
        %v2436 = vmul.f32 %v2341, 1.442695
        %v2437 = vpow.pop %v2436
        %v2438 = vmul.f32 %v2342, 1.442695
        %v2439 = vpow.pop %v2438
        %v2440 = vmul.f32 %v2343, 1.442695
        %v2441 = vpow.pop %v2440
        %v2442 = vmul.f32 %v2344, 1.442695
        %v2443 = vpow.pop %v2442
        %v2444 = vmul.f32 %v2345, 1.442695
        %v2445 = vpow.pop %v2444
        %v2446 = vmul.f32 %v2346, 1.442695
        %v2447 = vpow.pop %v2446
        %v2448 = vmul.f32 %v2347, 1.442695
        %v2449 = vpow.pop %v2448
        %v2450 = vmul.f32 %v2348, 1.442695
        %v2451 = vpow.pop %v2450
        %v2452 = vmul.f32 %v2349, 1.442695
        %v2453 = vpow.pop %v2452
        %v2454 = vmul.f32 %v2350, 1.442695
        %v2455 = vpow.pop %v2454
        %v2456 = vmul.f32 %v2351, 1.442695
        %v2457 = vpow.pop %v2456
        %v2458 = vmul.f32 %v2352, 1.442695
        %v2459 = vpow.pop %v2458
        %v2460 = vmul.f32 %v2353, 1.442695
        %v2461 = vpow.pop %v2460
        %v2462 = vmul.f32 %v2354, 1.442695
        %v2463 = vpow.pop %v2462
        %v2464 = vmul.f32 %v2355, 1.442695
        %v2465 = vpow.pop %v2464
        %v2466 = vmul.f32 %v2356, 1.442695
        %v2467 = vpow.pop %v2466
        %v2468 = vmul.f32 %v2357, 1.442695
        %v2469 = vpow.pop %v2468
        %v2470 = vmul.f32 %v2358, 1.442695
        %v2471 = vpow.pop %v2470
        %v2472 = vmul.f32 %v2359, 1.442695
        %v2473 = vpow.pop %v2472
        %v2474 = vmul.f32 %v2360, 1.442695
        %v2475 = vpow.pop %v2474
        %v2476 = vmul.f32 %v2361, 1.442695
        %v2477 = vpow.pop %v2476
        %v2478 = vmul.f32 %v2362, 1.442695
        %v2479 = vpow.pop %v2478
        %v2480 = vmul.f32 %v2363, 1.442695
        %v2481 = vpow.pop %v2480
        %v2482 = vmul.f32 %v2364, 1.442695
        %v2483 = vpow.pop %v2482
        %v2484 = vmul.f32 %v2365, 1.442695
        %v2485 = vpow.pop %v2484
        %v2486 = vmul.f32 %v2366, 1.442695
        %v2487 = vpow.pop %v2486
        %v2488 = vmul.f32 %v2367, 1.442695
        %v2489 = vpow.pop %v2488
        %v2490 = vmul.f32 %v2368, 1.442695
        %v2491 = vpow.pop %v2490
        %v2492 = vmul.f32 %v2369, 1.442695
        %v2493 = vpow.pop %v2492
        %v2494 = vmul.f32 %v2370, 1.442695
        %v2495 = vpow.pop %v2494
        %v2496 = vmul.f32 %v2371, 1.442695
        %v2497 = vpow.pop %v2496
        %v2498 = vmul.f32 %v2372, 1.442695
        %v2499 = vpow.pop %v2498
        %v2500 = vmul.f32 %v2373, 1.442695
        %v2501 = vpow.pop %v2500
        %v2502 = vadd.f32 %v2375, %v2377
        %2503 = vadd.xlane.f32.xlu0 %v2502
        %v2504 = vpop.xlane.xlu0 %2503
        %v2505 = vadd.f32 %v2379, %v2381
        %2506 = vadd.xlane.f32.xlu0 %v2505
        %v2507 = vpop.xlane.xlu0 %2506
        %v2508 = vadd.f32 %v2383, %v2385
        %2509 = vadd.xlane.f32.xlu0 %v2508
        %v2510 = vpop.xlane.xlu0 %2509
        %v2511 = vadd.f32 %v2387, %v2389
        %2512 = vadd.xlane.f32.xlu0 %v2511
        %v2513 = vpop.xlane.xlu0 %2512
        %v2514 = vadd.f32 %v2391, %v2393
        %2515 = vadd.xlane.f32.xlu0 %v2514
        %v2516 = vpop.xlane.xlu0 %2515
        %v2517 = vadd.f32 %v2395, %v2397
        %2518 = vadd.xlane.f32.xlu0 %v2517
        %v2519 = vpop.xlane.xlu0 %2518
        %v2520 = vadd.f32 %v2399, %v2401
        %2521 = vadd.xlane.f32.xlu0 %v2520
        %v2522 = vpop.xlane.xlu0 %2521
        %v2523 = vadd.f32 %v2403, %v2405
        %2524 = vadd.xlane.f32.xlu0 %v2523
        %v2525 = vpop.xlane.xlu0 %2524
        %v2526 = vadd.f32 %v2407, %v2409
        %2527 = vadd.xlane.f32.xlu0 %v2526
        %v2528 = vpop.xlane.xlu0 %2527
        %v2529 = vadd.f32 %v2411, %v2413
        %2530 = vadd.xlane.f32.xlu0 %v2529
        %v2531 = vpop.xlane.xlu0 %2530
        %v2532 = vadd.f32 %v2415, %v2417
        %2533 = vadd.xlane.f32.xlu0 %v2532
        %v2534 = vpop.xlane.xlu0 %2533
        %v2535 = vadd.f32 %v2419, %v2421
        %2536 = vadd.xlane.f32.xlu0 %v2535
        %v2537 = vpop.xlane.xlu0 %2536
        %v2538 = vadd.f32 %v2423, %v2425
        %2539 = vadd.xlane.f32.xlu0 %v2538
        %v2540 = vpop.xlane.xlu0 %2539
        %v2541 = vadd.f32 %v2427, %v2429
        %2542 = vadd.xlane.f32.xlu0 %v2541
        %v2543 = vpop.xlane.xlu0 %2542
        %v2544 = vadd.f32 %v2431, %v2433
        %2545 = vadd.xlane.f32.xlu0 %v2544
        %v2546 = vpop.xlane.xlu0 %2545
        %v2547 = vadd.f32 %v2435, %v2437
        %2548 = vadd.xlane.f32.xlu0 %v2547
        %v2549 = vpop.xlane.xlu0 %2548
        %v2550 = vadd.f32 %v2439, %v2441
        %2551 = vadd.xlane.f32.xlu0 %v2550
        %v2552 = vpop.xlane.xlu0 %2551
        %v2553 = vadd.f32 %v2443, %v2445
        %2554 = vadd.xlane.f32.xlu0 %v2553
        %v2555 = vpop.xlane.xlu0 %2554
        %v2556 = vadd.f32 %v2447, %v2449
        %2557 = vadd.xlane.f32.xlu0 %v2556
        %v2558 = vpop.xlane.xlu0 %2557
        %v2559 = vadd.f32 %v2451, %v2453
        %2560 = vadd.xlane.f32.xlu0 %v2559
        %v2561 = vpop.xlane.xlu0 %2560
        %v2562 = vadd.f32 %v2455, %v2457
        %2563 = vadd.xlane.f32.xlu0 %v2562
        %v2564 = vpop.xlane.xlu0 %2563
        %v2565 = vadd.f32 %v2459, %v2461
        %2566 = vadd.xlane.f32.xlu0 %v2565
        %v2567 = vpop.xlane.xlu0 %2566
        %v2568 = vadd.f32 %v2463, %v2465
        %2569 = vadd.xlane.f32.xlu0 %v2568
        %v2570 = vpop.xlane.xlu0 %2569
        %v2571 = vadd.f32 %v2467, %v2469
        %2572 = vadd.xlane.f32.xlu0 %v2571
        %v2573 = vpop.xlane.xlu0 %2572
        %v2574 = vadd.f32 %v2471, %v2473
        %2575 = vadd.xlane.f32.xlu0 %v2574
        %v2576 = vpop.xlane.xlu0 %2575
        %v2577 = vadd.f32 %v2475, %v2477
        %2578 = vadd.xlane.f32.xlu0 %v2577
        %v2579 = vpop.xlane.xlu0 %2578
        %v2580 = vadd.f32 %v2479, %v2481
        %2581 = vadd.xlane.f32.xlu0 %v2580
        %v2582 = vpop.xlane.xlu0 %2581
        %v2583 = vadd.f32 %v2483, %v2485
        %2584 = vadd.xlane.f32.xlu0 %v2583
        %v2585 = vpop.xlane.xlu0 %2584
        %v2586 = vadd.f32 %v2487, %v2489
        %2587 = vadd.xlane.f32.xlu0 %v2586
        %v2588 = vpop.xlane.xlu0 %2587
        %v2589 = vadd.f32 %v2491, %v2493
        %2590 = vadd.xlane.f32.xlu0 %v2589
        %v2591 = vpop.xlane.xlu0 %2590
        %v2592 = vadd.f32 %v2495, %v2497
        %2593 = vadd.xlane.f32.xlu0 %v2592
        %v2594 = vpop.xlane.xlu0 %2593
        %v2595 = vadd.f32 %v2499, %v2501
        %2596 = vadd.xlane.f32.xlu0 %v2595
        %v2597 = vpop.xlane.xlu0 %2596
        %v2598 = vrcp.pop %v2504
        %v2599 = vrcp.pop %v2507
        %v2600 = vrcp.pop %v2510
        %v2601 = vrcp.pop %v2513
        %v2602 = vrcp.pop %v2516
        %v2603 = vrcp.pop %v2519
        %v2604 = vrcp.pop %v2522
        %v2605 = vrcp.pop %v2525
        %v2606 = vrcp.pop %v2528
        %v2607 = vrcp.pop %v2531
        %v2608 = vrcp.pop %v2534
        %v2609 = vrcp.pop %v2537
        %v2610 = vrcp.pop %v2540
        %v2611 = vrcp.pop %v2543
        %v2612 = vrcp.pop %v2546
        %v2613 = vrcp.pop %v2549
        %v2614 = vrcp.pop %v2552
        %v2615 = vrcp.pop %v2555
        %v2616 = vrcp.pop %v2558
        %v2617 = vrcp.pop %v2561
        %v2618 = vrcp.pop %v2564
        %v2619 = vrcp.pop %v2567
        %v2620 = vrcp.pop %v2570
        %v2621 = vrcp.pop %v2573
        %v2622 = vrcp.pop %v2576
        %v2623 = vrcp.pop %v2579
        %v2624 = vrcp.pop %v2582
        %v2625 = vrcp.pop %v2585
        %v2626 = vrcp.pop %v2588
        %v2627 = vrcp.pop %v2591
        %v2628 = vrcp.pop %v2594
        %v2629 = vrcp.pop %v2597
        %v2630 = vpack.c.bf16 %v2379, %v2375
        %v2631 = vpack.c.bf16 %v2381, %v2377
        %v2632 = vpack.c.bf16 %v2387, %v2383
        %v2633 = vpack.c.bf16 %v2389, %v2385
        %v2634 = vpack.c.bf16 %v2395, %v2391
        %v2635 = vpack.c.bf16 %v2397, %v2393
        %v2636 = vpack.c.bf16 %v2403, %v2399
        %v2637 = vpack.c.bf16 %v2405, %v2401
        %v2638 = vpack.c.bf16 %v2411, %v2407
        %v2639 = vpack.c.bf16 %v2413, %v2409
        %v2640 = vpack.c.bf16 %v2419, %v2415
        %v2641 = vpack.c.bf16 %v2421, %v2417
        %v2642 = vpack.c.bf16 %v2427, %v2423
        %v2643 = vpack.c.bf16 %v2429, %v2425
        %v2644 = vpack.c.bf16 %v2435, %v2431
        %v2645 = vpack.c.bf16 %v2437, %v2433
        %v2646 = vpack.c.bf16 %v2443, %v2439
        %v2647 = vpack.c.bf16 %v2445, %v2441
        %v2648 = vpack.c.bf16 %v2451, %v2447
        %v2649 = vpack.c.bf16 %v2453, %v2449
        %v2650 = vpack.c.bf16 %v2459, %v2455
        %v2651 = vpack.c.bf16 %v2461, %v2457
        %v2652 = vpack.c.bf16 %v2467, %v2463
        %v2653 = vpack.c.bf16 %v2469, %v2465
        %v2654 = vpack.c.bf16 %v2475, %v2471
        %v2655 = vpack.c.bf16 %v2477, %v2473
        %v2656 = vpack.c.bf16 %v2483, %v2479
        %v2657 = vpack.c.bf16 %v2485, %v2481
        %v2658 = vpack.c.bf16 %v2491, %v2487
        %v2659 = vpack.c.bf16 %v2493, %v2489
        %v2660 = vpack.c.bf16 %v2499, %v2495
        %v2661 = vpack.c.bf16 %v2501, %v2497
        %2678 = vrot.lane.b32.xlu0 %v717, 96
        %v2679 = vpop.permute.xlu0 %2678
        %2680 = vrot.lane.b32.xlu0 %v718, 96
        %v2681 = vpop.permute.xlu0 %2680
        %2682 = vrot.lane.b32.xlu0 %v719, 96
        %v2683 = vpop.permute.xlu0 %2682
        %2684 = vrot.lane.b32.xlu0 %v720, 96
        %v2685 = vpop.permute.xlu0 %2684
        %2686 = vrot.lane.b32.xlu0 %v721, 96
        %v2687 = vpop.permute.xlu0 %2686
        %2688 = vrot.lane.b32.xlu0 %v722, 96
        %v2689 = vpop.permute.xlu0 %2688
        %2690 = vrot.lane.b32.xlu0 %v723, 96
        %v2691 = vpop.permute.xlu0 %2690
        %2692 = vrot.lane.b32.xlu0 %v724, 96
        %v2693 = vpop.permute.xlu0 %2692
        %2694 = vrot.lane.b32.xlu0 %v725, 96
        %v2695 = vpop.permute.xlu0 %2694
        %2696 = vrot.lane.b32.xlu0 %v726, 96
        %v2697 = vpop.permute.xlu0 %2696
        %2698 = vrot.lane.b32.xlu0 %v727, 96
        %v2699 = vpop.permute.xlu0 %2698
        %2700 = vrot.lane.b32.xlu0 %v728, 96
        %v2701 = vpop.permute.xlu0 %2700
        %2702 = vrot.lane.b32.xlu0 %v729, 96
        %v2703 = vpop.permute.xlu0 %2702
        %2704 = vrot.lane.b32.xlu0 %v730, 96
        %v2705 = vpop.permute.xlu0 %2704
        %2706 = vrot.lane.b32.xlu0 %v731, 96
        %v2707 = vpop.permute.xlu0 %2706
        %2708 = vrot.lane.b32.xlu0 %v732, 96
        %v2709 = vpop.permute.xlu0 %2708
        %2726 = vmatprep.subr.bf16.mxu0 0
        %2727 = vmatpush1.bf16.msra.mxu0 %v2679
        %2728 = vmatprep.subr.bf16.mxu0 0
        %2729 = vmatpush1.bf16.msra.mxu0 %v2681
        %2730 = vmatprep.subr.bf16.mxu0 0
        %2731 = vmatpush1.bf16.msra.mxu0 %v2683
        %2732 = vmatprep.subr.bf16.mxu0 0
        %2733 = vmatpush1.bf16.msra.mxu0 %v2685
        %2734 = vmatprep.subr.bf16.mxu0 0
        %2735 = vmatpush1.bf16.msra.mxu0 %v2687
        %2736 = vmatprep.subr.bf16.mxu0 0
        %2737 = vmatpush1.bf16.msra.mxu0 %v2689
        %2738 = vmatprep.subr.bf16.mxu0 0
        %2739 = vmatpush1.bf16.msra.mxu0 %v2691
        %2740 = vmatprep.subr.bf16.mxu0 0
        %2741 = vmatpush1.bf16.msra.mxu0 %v2693
        %2742 = vmatprep.subr.bf16.mxu0 0
        %2743 = vmatpush1.bf16.msra.mxu0 %v2695
        %2744 = vmatprep.subr.bf16.mxu0 0
        %2745 = vmatpush1.bf16.msra.mxu0 %v2697
        %2746 = vmatprep.subr.bf16.mxu0 0
        %2747 = vmatpush1.bf16.msra.mxu0 %v2699
        %2748 = vmatprep.subr.bf16.mxu0 0
        %2749 = vmatpush1.bf16.msra.mxu0 %v2701
        %2750 = vmatprep.subr.bf16.mxu0 0
        %2751 = vmatpush1.bf16.msra.mxu0 %v2703
        %2752 = vmatprep.subr.bf16.mxu0 0
        %2753 = vmatpush1.bf16.msra.mxu0 %v2705
        %2754 = vmatprep.subr.bf16.mxu0 0
        %2755 = vmatpush1.bf16.msra.mxu0 %v2707
        %2756 = vmatprep.subr.bf16.mxu0 0
        %2757 = vmatpush1.bf16.msra.mxu0 %v2709
        %2758 = vmatprep.mubr.bf16.mxu0 %v2631
        %2759 = vmatmul.mubr.bf16.gmra.mrb[0].mxu0 %v2630
        %v2760 = vpop.f32.mrb[0].mxu0
        %v2761 = vadd.f32 0.0, %v2760
        %v2762 = vpop.f32.mrb[0].mxu0
        %v2763 = vpop.f32.mrb[0].mxu0
        %v2764 = vadd.f32 0.0, %v2763
        %v2765 = vpop.f32.mrb[0].mxu0
        %2766 = vmatprep.mubr.bf16.mxu0 %v2633
        %2767 = vmatmul.mubr.bf16.gmra.mrb[0].mxu0 %v2632
        %v2768 = vpop.f32.mrb[0].mxu0
        %v2769 = vadd.f32 0.0, %v2768
        %v2770 = vpop.f32.mrb[0].mxu0
        %v2771 = vpop.f32.mrb[0].mxu0
        %v2772 = vadd.f32 0.0, %v2771
        %v2773 = vpop.f32.mrb[0].mxu0
        %2774 = vmatprep.mubr.bf16.mxu0 %v2635
        %2775 = vmatmul.mubr.bf16.gmra.mrb[0].mxu0 %v2634
        %v2776 = vpop.f32.mrb[0].mxu0
        %v2777 = vadd.f32 0.0, %v2776
        %v2778 = vpop.f32.mrb[0].mxu0
        %v2779 = vpop.f32.mrb[0].mxu0
        %v2780 = vadd.f32 0.0, %v2779
        %v2781 = vpop.f32.mrb[0].mxu0
        %2782 = vmatprep.mubr.bf16.mxu0 %v2637
        %2783 = vmatmul.mubr.bf16.gmra.mrb[0].mxu0 %v2636
        %v2784 = vpop.f32.mrb[0].mxu0
        %v2785 = vadd.f32 0.0, %v2784
        %v2786 = vpop.f32.mrb[0].mxu0
        %v2787 = vpop.f32.mrb[0].mxu0
        %v2788 = vadd.f32 0.0, %v2787
        %v2789 = vpop.f32.mrb[0].mxu0
        %2790 = vmatprep.mubr.bf16.mxu0 %v2639
        %2791 = vmatmul.mubr.bf16.gmra.mrb[0].mxu0 %v2638
        %v2792 = vpop.f32.mrb[0].mxu0
        %v2793 = vadd.f32 0.0, %v2792
        %v2794 = vpop.f32.mrb[0].mxu0
        %v2795 = vpop.f32.mrb[0].mxu0
        %v2796 = vadd.f32 0.0, %v2795
        %v2797 = vpop.f32.mrb[0].mxu0
        %2798 = vmatprep.mubr.bf16.mxu0 %v2641
        %2799 = vmatmul.mubr.bf16.gmra.mrb[0].mxu0 %v2640
        %v2800 = vpop.f32.mrb[0].mxu0
        %v2801 = vadd.f32 0.0, %v2800
        %v2802 = vpop.f32.mrb[0].mxu0
        %v2803 = vpop.f32.mrb[0].mxu0
        %v2804 = vadd.f32 0.0, %v2803
        %v2805 = vpop.f32.mrb[0].mxu0
        %2806 = vmatprep.mubr.bf16.mxu0 %v2643
        %2807 = vmatmul.mubr.bf16.gmra.mrb[0].mxu0 %v2642
        %v2808 = vpop.f32.mrb[0].mxu0
        %v2809 = vadd.f32 0.0, %v2808
        %v2810 = vpop.f32.mrb[0].mxu0
        %v2811 = vpop.f32.mrb[0].mxu0
        %v2812 = vadd.f32 0.0, %v2811
        %v2813 = vpop.f32.mrb[0].mxu0
        %2814 = vmatprep.mubr.bf16.mxu0 %v2645
        %2815 = vmatmul.mubr.bf16.gmra.mrb[0].mxu0 %v2644
        %v2816 = vpop.f32.mrb[0].mxu0
        %v2817 = vadd.f32 0.0, %v2816
        %v2818 = vpop.f32.mrb[0].mxu0
        %v2819 = vpop.f32.mrb[0].mxu0
        %v2820 = vadd.f32 0.0, %v2819
        %v2821 = vpop.f32.mrb[0].mxu0
        %2822 = vmatprep.mubr.bf16.mxu0 %v2647
        %2823 = vmatmul.mubr.bf16.gmra.mrb[0].mxu0 %v2646
        %v2824 = vpop.f32.mrb[0].mxu0
        %v2825 = vadd.f32 0.0, %v2824
        %v2826 = vpop.f32.mrb[0].mxu0
        %v2827 = vpop.f32.mrb[0].mxu0
        %v2828 = vadd.f32 0.0, %v2827
        %v2829 = vpop.f32.mrb[0].mxu0
        %2830 = vmatprep.mubr.bf16.mxu0 %v2649
        %2831 = vmatmul.mubr.bf16.gmra.mrb[0].mxu0 %v2648
        %v2832 = vpop.f32.mrb[0].mxu0
        %v2833 = vadd.f32 0.0, %v2832
        %v2834 = vpop.f32.mrb[0].mxu0
        %v2835 = vpop.f32.mrb[0].mxu0
        %v2836 = vadd.f32 0.0, %v2835
        %v2837 = vpop.f32.mrb[0].mxu0
        %2838 = vmatprep.mubr.bf16.mxu0 %v2651
        %2839 = vmatmul.mubr.bf16.gmra.mrb[0].mxu0 %v2650
        %v2840 = vpop.f32.mrb[0].mxu0
        %v2841 = vadd.f32 0.0, %v2840
        %v2842 = vpop.f32.mrb[0].mxu0
        %v2843 = vpop.f32.mrb[0].mxu0
        %v2844 = vadd.f32 0.0, %v2843
        %v2845 = vpop.f32.mrb[0].mxu0
        %2846 = vmatprep.mubr.bf16.mxu0 %v2653
        %2847 = vmatmul.mubr.bf16.gmra.mrb[0].mxu0 %v2652
        %v2848 = vpop.f32.mrb[0].mxu0
        %v2849 = vadd.f32 0.0, %v2848
        %v2850 = vpop.f32.mrb[0].mxu0
        %v2851 = vpop.f32.mrb[0].mxu0
        %v2852 = vadd.f32 0.0, %v2851
        %v2853 = vpop.f32.mrb[0].mxu0
        %2854 = vmatprep.mubr.bf16.mxu0 %v2655
        %2855 = vmatmul.mubr.bf16.gmra.mrb[0].mxu0 %v2654
        %v2856 = vpop.f32.mrb[0].mxu0
        %v2857 = vadd.f32 0.0, %v2856
        %v2858 = vpop.f32.mrb[0].mxu0
        %v2859 = vpop.f32.mrb[0].mxu0
        %v2860 = vadd.f32 0.0, %v2859
        %v2861 = vpop.f32.mrb[0].mxu0
        %2862 = vmatprep.mubr.bf16.mxu0 %v2657
        %2863 = vmatmul.mubr.bf16.gmra.mrb[0].mxu0 %v2656
        %v2864 = vpop.f32.mrb[0].mxu0
        %v2865 = vadd.f32 0.0, %v2864
        %v2866 = vpop.f32.mrb[0].mxu0
        %v2867 = vpop.f32.mrb[0].mxu0
        %v2868 = vadd.f32 0.0, %v2867
        %v2869 = vpop.f32.mrb[0].mxu0
        %2870 = vmatprep.mubr.bf16.mxu0 %v2659
        %2871 = vmatmul.mubr.bf16.gmra.mrb[0].mxu0 %v2658
        %v2872 = vpop.f32.mrb[0].mxu0
        %v2873 = vadd.f32 0.0, %v2872
        %v2874 = vpop.f32.mrb[0].mxu0
        %v2875 = vpop.f32.mrb[0].mxu0
        %v2876 = vadd.f32 0.0, %v2875
        %v2877 = vpop.f32.mrb[0].mxu0
        %2878 = vmatprep.mubr.bf16.mxu0 %v2661
        %2879 = vmatmul.mubr.bf16.gmra.mrb[0].mxu0 %v2660
        %v2880 = vpop.f32.mrb[0].mxu0
        %v2881 = vadd.f32 0.0, %v2880
        %v2882 = vpop.f32.mrb[0].mxu0
        %v2883 = vpop.f32.mrb[0].mxu0
        %v2884 = vadd.f32 0.0, %v2883
        %v2885 = vpop.f32.mrb[0].mxu0
        %2886 = vdwg.mxu0
        %v2887 = vmul.f32 %v2761, %v2598
        %v2888 = vmul.f32 %v2764, %v2599
        %v2889 = vmul.f32 %v2769, %v2600
        %v2890 = vmul.f32 %v2772, %v2601
        %v2891 = vmul.f32 %v2777, %v2602
        %v2892 = vmul.f32 %v2780, %v2603
        %v2893 = vmul.f32 %v2785, %v2604
        %v2894 = vmul.f32 %v2788, %v2605
        %v2895 = vmul.f32 %v2793, %v2606
        %v2896 = vmul.f32 %v2796, %v2607
        %v2897 = vmul.f32 %v2801, %v2608
        %v2898 = vmul.f32 %v2804, %v2609
        %v2899 = vmul.f32 %v2809, %v2610
        %v2900 = vmul.f32 %v2812, %v2611
        %v2901 = vmul.f32 %v2817, %v2612
        %v2902 = vmul.f32 %v2820, %v2613
        %v2903 = vmul.f32 %v2825, %v2614
        %v2904 = vmul.f32 %v2828, %v2615
        %v2905 = vmul.f32 %v2833, %v2616
        %v2906 = vmul.f32 %v2836, %v2617
        %v2907 = vmul.f32 %v2841, %v2618
        %v2908 = vmul.f32 %v2844, %v2619
        %v2909 = vmul.f32 %v2849, %v2620
        %v2910 = vmul.f32 %v2852, %v2621
        %v2911 = vmul.f32 %v2857, %v2622
        %v2912 = vmul.f32 %v2860, %v2623
        %v2913 = vmul.f32 %v2865, %v2624
        %v2914 = vmul.f32 %v2868, %v2625
        %v2915 = vmul.f32 %v2873, %v2626
        %v2916 = vmul.f32 %v2876, %v2627
        %v2917 = vmul.f32 %v2881, %v2628
        %v2918 = vmul.f32 %v2884, %v2629
        %v2919 = vpack.c.bf16 %v2888, %v2887
        %v2920 = vpack.c.bf16 %v2890, %v2889
        %v2921 = vpack.c.bf16 %v2892, %v2891
        %v2922 = vpack.c.bf16 %v2894, %v2893
        %v2923 = vpack.c.bf16 %v2896, %v2895
        %v2924 = vpack.c.bf16 %v2898, %v2897
        %v2925 = vpack.c.bf16 %v2900, %v2899
        %v2926 = vpack.c.bf16 %v2902, %v2901
        %v2927 = vpack.c.bf16 %v2904, %v2903
        %v2928 = vpack.c.bf16 %v2906, %v2905
        %v2929 = vpack.c.bf16 %v2908, %v2907
        %v2930 = vpack.c.bf16 %v2910, %v2909
        %v2931 = vpack.c.bf16 %v2912, %v2911
        %v2932 = vpack.c.bf16 %v2914, %v2913
        %v2933 = vpack.c.bf16 %v2916, %v2915
        %v2934 = vpack.c.bf16 %v2918, %v2917
        %s2935 = scalar_lea.vmem [#allocation8], 16
        %v2936 = vld [vmem:[%s2935] sm:$0xf]
        %v2937 = vld [vmem:[%s2935 + $0x4] sm:$0xf]
        %v2938 = vld [vmem:[%s2935 + $0x8] sm:$0xf]
        %v2939 = vld [vmem:[%s2935 + $0xc] sm:$0xf]
        %v2944 = vunpack.c.l.b16 %v2936
        %v2945 = vunpack.c.l.b16 %v2937
        %v2946 = vunpack.c.l.b16 %v2938
        %v2947 = vunpack.c.l.b16 %v2939
        %v2948 = vpack.c.b16 %v2945, %v2944
        %v2949 = vpack.c.b16 %v2947, %v2946
        %v2953 = vsel %vm845, %v2919, 0
        %v2956 = vsel %vm845, %v2920, 0
        %v2959 = vsel %vm845, %v2921, 0
        %v2962 = vsel %vm845, %v2922, 0
        %v2965 = vsel %vm845, %v2923, 0
        %v2968 = vsel %vm845, %v2924, 0
        %v2971 = vsel %vm845, %v2925, 0
        %v2974 = vsel %vm845, %v2926, 0
        %v2977 = vsel %vm845, %v2927, 0
        %v2980 = vsel %vm845, %v2928, 0
        %v2983 = vsel %vm845, %v2929, 0
        %v2986 = vsel %vm845, %v2930, 0
        %v2989 = vsel %vm845, %v2931, 0
        %v2992 = vsel %vm845, %v2932, 0
        %v2995 = vsel %vm845, %v2933, 0
        %v2998 = vsel %vm845, %v2934, 0
        %3000 = vmatprep.subr.bf16.mxu0 0
        %3001 = vmatpush1.bf16.msra.mxu0 %v2948
        %3002 = vmatprep.subr.bf16.mxu0 0
        %3003 = vmatpush1.bf16.msra.mxu0 %v2949
        %3004 = vmatprep.subr.bf16.mxu0 0
        %3005 = vmatpush1.bf16.msra.mxu0 0
        %3006 = vmatprep.subr.bf16.mxu0 0
        %3007 = vmatpush1.bf16.msra.mxu0 0
        %3008 = vmatprep.subr.bf16.mxu0 0
        %3009 = vmatpush1.bf16.msra.mxu0 0
        %3010 = vmatprep.subr.bf16.mxu0 0
        %3011 = vmatpush1.bf16.msra.mxu0 0
        %3012 = vmatprep.subr.bf16.mxu0 0
        %3013 = vmatpush1.bf16.msra.mxu0 0
        %3014 = vmatprep.subr.bf16.mxu0 0
        %3015 = vmatpush1.bf16.msra.mxu0 0
        %3016 = vmatprep.subr.bf16.mxu0 0
        %3017 = vmatpush1.bf16.msra.mxu0 0
        %3018 = vmatprep.subr.bf16.mxu0 0
        %3019 = vmatpush1.bf16.msra.mxu0 0
        %3020 = vmatprep.subr.bf16.mxu0 0
        %3021 = vmatpush1.bf16.msra.mxu0 0
        %3022 = vmatprep.subr.bf16.mxu0 0
        %3023 = vmatpush1.bf16.msra.mxu0 0
        %3024 = vmatprep.subr.bf16.mxu0 0
        %3025 = vmatpush1.bf16.msra.mxu0 0
        %3026 = vmatprep.subr.bf16.mxu0 0
        %3027 = vmatpush1.bf16.msra.mxu0 0
        %3028 = vmatprep.subr.bf16.mxu0 0
        %3029 = vmatpush1.bf16.msra.mxu0 0
        %3030 = vmatprep.subr.bf16.mxu0 0
        %3031 = vmatpush1.bf16.msra.mxu0 0
        %3032 = vmatprep.mubr.bf16.mxu0 0
        %3033 = vmatmul.mubr.bf16.gmra.mrb[0].mxu0 %v2953
        %v3034 = vpop.f32.mrb[0].mxu0
        %v3035 = vadd.f32 0.0, %v3034
        %v3036 = vpop.f32.mrb[0].mxu0
        %v3037 = vpop.f32.mrb[0].mxu0
        %v3038 = vadd.f32 0.0, %v3037
        %v3039 = vpop.f32.mrb[0].mxu0
        %3040 = vmatprep.mubr.bf16.mxu0 0
        %3041 = vmatmul.mubr.bf16.gmra.mrb[0].mxu0 %v2956
        %v3042 = vpop.f32.mrb[0].mxu0
        %v3043 = vadd.f32 0.0, %v3042
        %v3044 = vpop.f32.mrb[0].mxu0
        %v3045 = vpop.f32.mrb[0].mxu0
        %v3046 = vadd.f32 0.0, %v3045
        %v3047 = vpop.f32.mrb[0].mxu0
        %3048 = vmatprep.mubr.bf16.mxu0 0
        %3049 = vmatmul.mubr.bf16.gmra.mrb[0].mxu0 %v2959
        %v3050 = vpop.f32.mrb[0].mxu0
        %v3051 = vadd.f32 0.0, %v3050
        %v3052 = vpop.f32.mrb[0].mxu0
        %v3053 = vpop.f32.mrb[0].mxu0
        %v3054 = vadd.f32 0.0, %v3053
        %v3055 = vpop.f32.mrb[0].mxu0
        %3056 = vmatprep.mubr.bf16.mxu0 0
        %3057 = vmatmul.mubr.bf16.gmra.mrb[0].mxu0 %v2962
        %v3058 = vpop.f32.mrb[0].mxu0
        %v3059 = vadd.f32 0.0, %v3058
        %v3060 = vpop.f32.mrb[0].mxu0
        %v3061 = vpop.f32.mrb[0].mxu0
        %v3062 = vadd.f32 0.0, %v3061
        %v3063 = vpop.f32.mrb[0].mxu0
        %3064 = vmatprep.mubr.bf16.mxu0 0
        %3065 = vmatmul.mubr.bf16.gmra.mrb[0].mxu0 %v2965
        %v3066 = vpop.f32.mrb[0].mxu0
        %v3067 = vadd.f32 0.0, %v3066
        %v3068 = vpop.f32.mrb[0].mxu0
        %v3069 = vpop.f32.mrb[0].mxu0
        %v3070 = vadd.f32 0.0, %v3069
        %v3071 = vpop.f32.mrb[0].mxu0
        %3072 = vmatprep.mubr.bf16.mxu0 0
        %3073 = vmatmul.mubr.bf16.gmra.mrb[0].mxu0 %v2968
        %v3074 = vpop.f32.mrb[0].mxu0
        %v3075 = vadd.f32 0.0, %v3074
        %v3076 = vpop.f32.mrb[0].mxu0
        %v3077 = vpop.f32.mrb[0].mxu0
        %v3078 = vadd.f32 0.0, %v3077
        %v3079 = vpop.f32.mrb[0].mxu0
        %3080 = vmatprep.mubr.bf16.mxu0 0
        %3081 = vmatmul.mubr.bf16.gmra.mrb[0].mxu0 %v2971
        %v3082 = vpop.f32.mrb[0].mxu0
        %v3083 = vadd.f32 0.0, %v3082
        %v3084 = vpop.f32.mrb[0].mxu0
        %v3085 = vpop.f32.mrb[0].mxu0
        %v3086 = vadd.f32 0.0, %v3085
        %v3087 = vpop.f32.mrb[0].mxu0
        %3088 = vmatprep.mubr.bf16.mxu0 0
        %3089 = vmatmul.mubr.bf16.gmra.mrb[0].mxu0 %v2974
        %v3090 = vpop.f32.mrb[0].mxu0
        %v3091 = vadd.f32 0.0, %v3090
        %v3092 = vpop.f32.mrb[0].mxu0
        %v3093 = vpop.f32.mrb[0].mxu0
        %v3094 = vadd.f32 0.0, %v3093
        %v3095 = vpop.f32.mrb[0].mxu0
        %3096 = vmatprep.mubr.bf16.mxu0 0
        %3097 = vmatmul.mubr.bf16.gmra.mrb[0].mxu0 %v2977
        %v3098 = vpop.f32.mrb[0].mxu0
        %v3099 = vadd.f32 0.0, %v3098
        %v3100 = vpop.f32.mrb[0].mxu0
        %v3101 = vpop.f32.mrb[0].mxu0
        %v3102 = vadd.f32 0.0, %v3101
        %v3103 = vpop.f32.mrb[0].mxu0
        %3104 = vmatprep.mubr.bf16.mxu0 0
        %3105 = vmatmul.mubr.bf16.gmra.mrb[0].mxu0 %v2980
        %v3106 = vpop.f32.mrb[0].mxu0
        %v3107 = vadd.f32 0.0, %v3106
        %v3108 = vpop.f32.mrb[0].mxu0
        %v3109 = vpop.f32.mrb[0].mxu0
        %v3110 = vadd.f32 0.0, %v3109
        %v3111 = vpop.f32.mrb[0].mxu0
        %3112 = vmatprep.mubr.bf16.mxu0 0
        %3113 = vmatmul.mubr.bf16.gmra.mrb[0].mxu0 %v2983
        %v3114 = vpop.f32.mrb[0].mxu0
        %v3115 = vadd.f32 0.0, %v3114
        %v3116 = vpop.f32.mrb[0].mxu0
        %v3117 = vpop.f32.mrb[0].mxu0
        %v3118 = vadd.f32 0.0, %v3117
        %v3119 = vpop.f32.mrb[0].mxu0
        %3120 = vmatprep.mubr.bf16.mxu0 0
        %3121 = vmatmul.mubr.bf16.gmra.mrb[0].mxu0 %v2986
        %v3122 = vpop.f32.mrb[0].mxu0
        %v3123 = vadd.f32 0.0, %v3122
        %v3124 = vpop.f32.mrb[0].mxu0
        %v3125 = vpop.f32.mrb[0].mxu0
        %v3126 = vadd.f32 0.0, %v3125
        %v3127 = vpop.f32.mrb[0].mxu0
        %3128 = vmatprep.mubr.bf16.mxu0 0
        %3129 = vmatmul.mubr.bf16.gmra.mrb[0].mxu0 %v2989
        %v3130 = vpop.f32.mrb[0].mxu0
        %v3131 = vadd.f32 0.0, %v3130
        %v3132 = vpop.f32.mrb[0].mxu0
        %v3133 = vpop.f32.mrb[0].mxu0
        %v3134 = vadd.f32 0.0, %v3133
        %v3135 = vpop.f32.mrb[0].mxu0
        %3136 = vmatprep.mubr.bf16.mxu0 0
        %3137 = vmatmul.mubr.bf16.gmra.mrb[0].mxu0 %v2992
        %v3138 = vpop.f32.mrb[0].mxu0
        %v3139 = vadd.f32 0.0, %v3138
        %v3140 = vpop.f32.mrb[0].mxu0
        %v3141 = vpop.f32.mrb[0].mxu0
        %v3142 = vadd.f32 0.0, %v3141
        %v3143 = vpop.f32.mrb[0].mxu0
        %3144 = vmatprep.mubr.bf16.mxu0 0
        %3145 = vmatmul.mubr.bf16.gmra.mrb[0].mxu0 %v2995
        %v3146 = vpop.f32.mrb[0].mxu0
        %v3147 = vadd.f32 0.0, %v3146
        %v3148 = vpop.f32.mrb[0].mxu0
        %v3149 = vpop.f32.mrb[0].mxu0
        %v3150 = vadd.f32 0.0, %v3149
        %v3151 = vpop.f32.mrb[0].mxu0
        %3152 = vmatprep.mubr.bf16.mxu0 0
        %3153 = vmatmul.mubr.bf16.gmra.mrb[0].mxu0 %v2998
        %v3154 = vpop.f32.mrb[0].mxu0
        %v3155 = vadd.f32 0.0, %v3154
        %v3156 = vpop.f32.mrb[0].mxu0
        %v3157 = vpop.f32.mrb[0].mxu0
        %v3158 = vadd.f32 0.0, %v3157
        %v3159 = vpop.f32.mrb[0].mxu0
        %3160 = vdwg.mxu0
        %v3165 = vunpack.c.l.b16 %v1792
        %v3166 = vunpack.c.l.b16 %v1793
        %v3167 = vunpack.c.l.b16 %v1794
        %v3168 = vunpack.c.l.b16 %v1795
        %v3169 = vpack.c.b16 %v3166, %v3165
        %v3170 = vpack.c.b16 %v3168, %v3167
        %v3174 = vsel %vm845, %v1776, 0
        %v3177 = vsel %vm845, %v1777, 0
        %v3180 = vsel %vm845, %v1778, 0
        %v3183 = vsel %vm845, %v1779, 0
        %v3186 = vsel %vm845, %v1780, 0
        %v3189 = vsel %vm845, %v1781, 0
        %v3192 = vsel %vm845, %v1782, 0
        %v3195 = vsel %vm845, %v1783, 0
        %v3198 = vsel %vm845, %v1784, 0
        %v3201 = vsel %vm845, %v1785, 0
        %v3204 = vsel %vm845, %v1786, 0
        %v3207 = vsel %vm845, %v1787, 0
        %v3210 = vsel %vm845, %v1788, 0
        %v3213 = vsel %vm845, %v1789, 0
        %v3216 = vsel %vm845, %v1790, 0
        %v3219 = vsel %vm845, %v1791, 0
        %3221 = vmatprep.subr.bf16.mxu0 0
        %3222 = vmatpush1.bf16.msra.mxu0 %v3169
        %3223 = vmatprep.subr.bf16.mxu0 0
        %3224 = vmatpush1.bf16.msra.mxu0 %v3170
        %3225 = vmatprep.subr.bf16.mxu0 0
        %3226 = vmatpush1.bf16.msra.mxu0 0
        %3227 = vmatprep.subr.bf16.mxu0 0
        %3228 = vmatpush1.bf16.msra.mxu0 0
        %3229 = vmatprep.subr.bf16.mxu0 0
        %3230 = vmatpush1.bf16.msra.mxu0 0
        %3231 = vmatprep.subr.bf16.mxu0 0
        %3232 = vmatpush1.bf16.msra.mxu0 0
        %3233 = vmatprep.subr.bf16.mxu0 0
        %3234 = vmatpush1.bf16.msra.mxu0 0
        %3235 = vmatprep.subr.bf16.mxu0 0
        %3236 = vmatpush1.bf16.msra.mxu0 0
        %3237 = vmatprep.subr.bf16.mxu0 0
        %3238 = vmatpush1.bf16.msra.mxu0 0
        %3239 = vmatprep.subr.bf16.mxu0 0
        %3240 = vmatpush1.bf16.msra.mxu0 0
        %3241 = vmatprep.subr.bf16.mxu0 0
        %3242 = vmatpush1.bf16.msra.mxu0 0
        %3243 = vmatprep.subr.bf16.mxu0 0
        %3244 = vmatpush1.bf16.msra.mxu0 0
        %3245 = vmatprep.subr.bf16.mxu0 0
        %3246 = vmatpush1.bf16.msra.mxu0 0
        %3247 = vmatprep.subr.bf16.mxu0 0
        %3248 = vmatpush1.bf16.msra.mxu0 0
        %3249 = vmatprep.subr.bf16.mxu0 0
        %3250 = vmatpush1.bf16.msra.mxu0 0
        %3251 = vmatprep.subr.bf16.mxu0 0
        %3252 = vmatpush1.bf16.msra.mxu0 0
        %3253 = vmatprep.mubr.bf16.mxu0 0
        %3254 = vmatmul.mubr.bf16.gmra.mrb[0].mxu0 %v3174
        %v3255 = vpop.f32.mrb[0].mxu0
        %v3256 = vadd.f32 %v3035, %v3255
        %v3257 = vpop.f32.mrb[0].mxu0
        %v3258 = vpop.f32.mrb[0].mxu0
        %v3259 = vadd.f32 %v3038, %v3258
        %v3260 = vpop.f32.mrb[0].mxu0
        %3261 = vmatprep.mubr.bf16.mxu0 0
        %3262 = vmatmul.mubr.bf16.gmra.mrb[0].mxu0 %v3177
        %v3263 = vpop.f32.mrb[0].mxu0
        %v3264 = vadd.f32 %v3043, %v3263
        %v3265 = vpop.f32.mrb[0].mxu0
        %v3266 = vpop.f32.mrb[0].mxu0
        %v3267 = vadd.f32 %v3046, %v3266
        %v3268 = vpop.f32.mrb[0].mxu0
        %3269 = vmatprep.mubr.bf16.mxu0 0
        %3270 = vmatmul.mubr.bf16.gmra.mrb[0].mxu0 %v3180
        %v3271 = vpop.f32.mrb[0].mxu0
        %v3272 = vadd.f32 %v3051, %v3271
        %v3273 = vpop.f32.mrb[0].mxu0
        %v3274 = vpop.f32.mrb[0].mxu0
        %v3275 = vadd.f32 %v3054, %v3274
        %v3276 = vpop.f32.mrb[0].mxu0
        %3277 = vmatprep.mubr.bf16.mxu0 0
        %3278 = vmatmul.mubr.bf16.gmra.mrb[0].mxu0 %v3183
        %v3279 = vpop.f32.mrb[0].mxu0
        %v3280 = vadd.f32 %v3059, %v3279
        %v3281 = vpop.f32.mrb[0].mxu0
        %v3282 = vpop.f32.mrb[0].mxu0
        %v3283 = vadd.f32 %v3062, %v3282
        %v3284 = vpop.f32.mrb[0].mxu0
        %3285 = vmatprep.mubr.bf16.mxu0 0
        %3286 = vmatmul.mubr.bf16.gmra.mrb[0].mxu0 %v3186
        %v3287 = vpop.f32.mrb[0].mxu0
        %v3288 = vadd.f32 %v3067, %v3287
        %v3289 = vpop.f32.mrb[0].mxu0
        %v3290 = vpop.f32.mrb[0].mxu0
        %v3291 = vadd.f32 %v3070, %v3290
        %v3292 = vpop.f32.mrb[0].mxu0
        %3293 = vmatprep.mubr.bf16.mxu0 0
        %3294 = vmatmul.mubr.bf16.gmra.mrb[0].mxu0 %v3189
        %v3295 = vpop.f32.mrb[0].mxu0
        %v3296 = vadd.f32 %v3075, %v3295
        %v3297 = vpop.f32.mrb[0].mxu0
        %v3298 = vpop.f32.mrb[0].mxu0
        %v3299 = vadd.f32 %v3078, %v3298
        %v3300 = vpop.f32.mrb[0].mxu0
        %3301 = vmatprep.mubr.bf16.mxu0 0
        %3302 = vmatmul.mubr.bf16.gmra.mrb[0].mxu0 %v3192
        %v3303 = vpop.f32.mrb[0].mxu0
        %v3304 = vadd.f32 %v3083, %v3303
        %v3305 = vpop.f32.mrb[0].mxu0
        %v3306 = vpop.f32.mrb[0].mxu0
        %v3307 = vadd.f32 %v3086, %v3306
        %v3308 = vpop.f32.mrb[0].mxu0
        %3309 = vmatprep.mubr.bf16.mxu0 0
        %3310 = vmatmul.mubr.bf16.gmra.mrb[0].mxu0 %v3195
        %v3311 = vpop.f32.mrb[0].mxu0
        %v3312 = vadd.f32 %v3091, %v3311
        %v3313 = vpop.f32.mrb[0].mxu0
        %v3314 = vpop.f32.mrb[0].mxu0
        %v3315 = vadd.f32 %v3094, %v3314
        %v3316 = vpop.f32.mrb[0].mxu0
        %3317 = vmatprep.mubr.bf16.mxu0 0
        %3318 = vmatmul.mubr.bf16.gmra.mrb[0].mxu0 %v3198
        %v3319 = vpop.f32.mrb[0].mxu0
        %v3320 = vadd.f32 %v3099, %v3319
        %v3321 = vpop.f32.mrb[0].mxu0
        %v3322 = vpop.f32.mrb[0].mxu0
        %v3323 = vadd.f32 %v3102, %v3322
        %v3324 = vpop.f32.mrb[0].mxu0
        %3325 = vmatprep.mubr.bf16.mxu0 0
        %3326 = vmatmul.mubr.bf16.gmra.mrb[0].mxu0 %v3201
        %v3327 = vpop.f32.mrb[0].mxu0
        %v3328 = vadd.f32 %v3107, %v3327
        %v3329 = vpop.f32.mrb[0].mxu0
        %v3330 = vpop.f32.mrb[0].mxu0
        %v3331 = vadd.f32 %v3110, %v3330
        %v3332 = vpop.f32.mrb[0].mxu0
        %3333 = vmatprep.mubr.bf16.mxu0 0
        %3334 = vmatmul.mubr.bf16.gmra.mrb[0].mxu0 %v3204
        %v3335 = vpop.f32.mrb[0].mxu0
        %v3336 = vadd.f32 %v3115, %v3335
        %v3337 = vpop.f32.mrb[0].mxu0
        %v3338 = vpop.f32.mrb[0].mxu0
        %v3339 = vadd.f32 %v3118, %v3338
        %v3340 = vpop.f32.mrb[0].mxu0
        %3341 = vmatprep.mubr.bf16.mxu0 0
        %3342 = vmatmul.mubr.bf16.gmra.mrb[0].mxu0 %v3207
        %v3343 = vpop.f32.mrb[0].mxu0
        %v3344 = vadd.f32 %v3123, %v3343
        %v3345 = vpop.f32.mrb[0].mxu0
        %v3346 = vpop.f32.mrb[0].mxu0
        %v3347 = vadd.f32 %v3126, %v3346
        %v3348 = vpop.f32.mrb[0].mxu0
        %3349 = vmatprep.mubr.bf16.mxu0 0
        %3350 = vmatmul.mubr.bf16.gmra.mrb[0].mxu0 %v3210
        %v3351 = vpop.f32.mrb[0].mxu0
        %v3352 = vadd.f32 %v3131, %v3351
        %v3353 = vpop.f32.mrb[0].mxu0
        %v3354 = vpop.f32.mrb[0].mxu0
        %v3355 = vadd.f32 %v3134, %v3354
        %v3356 = vpop.f32.mrb[0].mxu0
        %3357 = vmatprep.mubr.bf16.mxu0 0
        %3358 = vmatmul.mubr.bf16.gmra.mrb[0].mxu0 %v3213
        %v3359 = vpop.f32.mrb[0].mxu0
        %v3360 = vadd.f32 %v3139, %v3359
        %v3361 = vpop.f32.mrb[0].mxu0
        %v3362 = vpop.f32.mrb[0].mxu0
        %v3363 = vadd.f32 %v3142, %v3362
        %v3364 = vpop.f32.mrb[0].mxu0
        %3365 = vmatprep.mubr.bf16.mxu0 0
        %3366 = vmatmul.mubr.bf16.gmra.mrb[0].mxu0 %v3216
        %v3367 = vpop.f32.mrb[0].mxu0
        %v3368 = vadd.f32 %v3147, %v3367
        %v3369 = vpop.f32.mrb[0].mxu0
        %v3370 = vpop.f32.mrb[0].mxu0
        %v3371 = vadd.f32 %v3150, %v3370
        %v3372 = vpop.f32.mrb[0].mxu0
        %3373 = vmatprep.mubr.bf16.mxu0 0
        %3374 = vmatmul.mubr.bf16.gmra.mrb[0].mxu0 %v3219
        %v3375 = vpop.f32.mrb[0].mxu0
        %v3376 = vadd.f32 %v3155, %v3375
        %v3377 = vpop.f32.mrb[0].mxu0
        %v3378 = vpop.f32.mrb[0].mxu0
        %v3379 = vadd.f32 %v3158, %v3378
        %v3380 = vpop.f32.mrb[0].mxu0
        %3381 = vdwg.mxu0
        %v3382 = vld [vmem:[%s5] sm:$0x1]
        %v3384 = vlaneseq
        %v3385 = vshrl.u32 %v3384, 7
        %v3386 = vsub.s32 0, %v3385
        %v3387 = vrot.slane %v3382, %v3386
        %v3389 = vadd.f32 %v3256, %v3387
        %v3390 = vadd.f32 %v3259, %v3387
        %v3391 = vadd.f32 %v3264, %v3387
        %v3392 = vadd.f32 %v3267, %v3387
        %v3393 = vadd.f32 %v3272, %v3387
        %v3394 = vadd.f32 %v3275, %v3387
        %v3395 = vadd.f32 %v3280, %v3387
        %v3396 = vadd.f32 %v3283, %v3387
        %v3397 = vadd.f32 %v3288, %v3387
        %v3398 = vadd.f32 %v3291, %v3387
        %v3399 = vadd.f32 %v3296, %v3387
        %v3400 = vadd.f32 %v3299, %v3387
        %v3401 = vadd.f32 %v3304, %v3387
        %v3402 = vadd.f32 %v3307, %v3387
        %v3403 = vadd.f32 %v3312, %v3387
        %v3404 = vadd.f32 %v3315, %v3387
        %v3405 = vadd.f32 %v3320, %v3387
        %v3406 = vadd.f32 %v3323, %v3387
        %v3407 = vadd.f32 %v3328, %v3387
        %v3408 = vadd.f32 %v3331, %v3387
        %v3409 = vadd.f32 %v3336, %v3387
        %v3410 = vadd.f32 %v3339, %v3387
        %v3411 = vadd.f32 %v3344, %v3387
        %v3412 = vadd.f32 %v3347, %v3387
        %v3413 = vadd.f32 %v3352, %v3387
        %v3414 = vadd.f32 %v3355, %v3387
        %v3415 = vadd.f32 %v3360, %v3387
        %v3416 = vadd.f32 %v3363, %v3387
        %v3417 = vadd.f32 %v3368, %v3387
        %v3418 = vadd.f32 %v3371, %v3387
        %v3419 = vadd.f32 %v3376, %v3387
        %v3420 = vadd.f32 %v3379, %v3387
        %3421 = vst.msk [vmem:[%s345] sm:$0xff] %vm459, %v3389
        %3422 = vst.msk [vmem:[%s345 + $0x8] sm:$0xff] %vm459, %v3390
        %3423 = vst.msk [vmem:[%s345 + $0x10] sm:$0xff] %vm459, %v3391
        %3424 = vst.msk [vmem:[%s345 + $0x18] sm:$0xff] %vm459, %v3392
        %3425 = vst.msk [vmem:[%s345 + $0x20] sm:$0xff] %vm459, %v3393
        %3426 = vst.msk [vmem:[%s345 + $0x28] sm:$0xff] %vm459, %v3394
        %3427 = vst.msk [vmem:[%s345 + $0x30] sm:$0xff] %vm459, %v3395
        %3428 = vst.msk [vmem:[%s345 + $0x38] sm:$0xff] %vm459, %v3396
        %3429 = vst.msk [vmem:[%s345 + $0x40] sm:$0xff] %vm459, %v3397
        %3430 = vst.msk [vmem:[%s345 + $0x48] sm:$0xff] %vm459, %v3398
        %3431 = vst.msk [vmem:[%s345 + $0x50] sm:$0xff] %vm459, %v3399
        %3432 = vst.msk [vmem:[%s345 + $0x58] sm:$0xff] %vm459, %v3400
        %3433 = vst.msk [vmem:[%s345 + $0x60] sm:$0xff] %vm459, %v3401
        %3434 = vst.msk [vmem:[%s345 + $0x68] sm:$0xff] %vm459, %v3402
        %3435 = vst.msk [vmem:[%s345 + $0x70] sm:$0xff] %vm459, %v3403
        %3436 = vst.msk [vmem:[%s345 + $0x78] sm:$0xff] %vm459, %v3404
        %3437 = vst.msk [vmem:[%s345 + $0x80] sm:$0xff] %vm459, %v3405
        %3438 = vst.msk [vmem:[%s345 + $0x88] sm:$0xff] %vm459, %v3406
        %3439 = vst.msk [vmem:[%s345 + $0x90] sm:$0xff] %vm459, %v3407
        %3440 = vst.msk [vmem:[%s345 + $0x98] sm:$0xff] %vm459, %v3408
        %3441 = vst.msk [vmem:[%s345 + $0xa0] sm:$0xff] %vm459, %v3409
        %3442 = vst.msk [vmem:[%s345 + $0xa8] sm:$0xff] %vm459, %v3410
        %3443 = vst.msk [vmem:[%s345 + $0xb0] sm:$0xff] %vm459, %v3411
        %3444 = vst.msk [vmem:[%s345 + $0xb8] sm:$0xff] %vm459, %v3412
        %3445 = vst.msk [vmem:[%s345 + $0xc0] sm:$0xff] %vm459, %v3413
        %3446 = vst.msk [vmem:[%s345 + $0xc8] sm:$0xff] %vm459, %v3414
        %3447 = vst.msk [vmem:[%s345 + $0xd0] sm:$0xff] %vm459, %v3415
        %3448 = vst.msk [vmem:[%s345 + $0xd8] sm:$0xff] %vm459, %v3416
        %3449 = vst.msk [vmem:[%s345 + $0xe0] sm:$0xff] %vm459, %v3417
        %3450 = vst.msk [vmem:[%s345 + $0xe8] sm:$0xff] %vm459, %v3418
        %3451 = vst.msk [vmem:[%s345 + $0xf0] sm:$0xff] %vm459, %v3419
        %3452 = vst.msk [vmem:[%s345 + $0xf8] sm:$0xff] %vm459, %v3420
        %s3453 = sand.u32 %s191, 1
        %s3454 = scalar_lea.sflag [#allocation4], %s3453
        %s3455 = sand.u32 %s191, 1
        %s3456 = smul.addr %s3455, 256
        %s3457 = scalar_lea.vmem [#allocation10], %s3456
        // Predicated region
        $region61: #{tpu_custom_call.1} parent=43 // pred_check
          %p3458 = pneg %p201
        $region62: #{tpu_custom_call.1} parent=43 // pred_check_branch
          %3460 = sbr.rel (%p3458) target = $region64
        $region63: #{tpu_custom_call.1} parent=43 // pred_region
          %s3461 = smul.u32 8, %s30
          %s3462 = smul.u32 4, %s31
          %s3464 = ssub.s32 4096, 4096
          %3465 = vsyncadd %s3454, %s3464
          %s3466 = smul.addr %s3461, 4
          %s3467 = sadd.s32 %s3462, %s3466
          %s3468 = smul.addr %s32, 128
          %s3469 = sadd.s32 %s3467, %s3468
          %s3470 = smul.addr %s3469, 128
          %s3471 = scalar_lea.hbm %s6, %s3470
          %s3472 = sshll.u32 %s3457, 4
          %s3473 = int_to_ptr.vmem [resolvable:$true] %s3472
          %3478 = dma.vmem_to_hbm [thread:$0]  %s3473, 4096, %s3471, %s3454, 128, 128, 8
        $region64: #{tpu_custom_call.1} parent=43 // pred_fallthru
          _
      $region44: #{tpu_custom_call.1} parent=5 // pred_fallthru
        _
      %p3479 = scmp.le.s32.totalorder 2, %s20
      // Predicated region
      $region65: #{tpu_custom_call.1} parent=5 // pred_check
        %p3480 = pneg %p3479
      $region66: #{tpu_custom_call.1} parent=5 // pred_check_branch
        %3482 = sbr.rel (%p3480) target = $region68
      $region67: #{tpu_custom_call.1} parent=5 // pred_region
        %s3483 = ssub.s32 %s20, 2
        // Predicated region
        $region69: #{tpu_custom_call.1} parent=67 // pred_check
          %p3484 = pneg %p207
        $region70: #{tpu_custom_call.1} parent=67 // pred_check_branch
          %3486 = sbr.rel (%p3484) target = $region72
        $region71: #{tpu_custom_call.1} parent=67 // pred_region
          %s3487 = sand.u32 %s192, 1
          %s3488 = scalar_lea.sflag [#allocation4], %s3487
          %s3489 = sand.u32 %s192, 1
          %s3490 = smul.addr %s3489, 256
          %s3491 = scalar_lea.vmem [#allocation10], %s3490
          %3492 = dma.done %s3488, 4096
        $region72: #{tpu_custom_call.1} parent=67 // pred_fallthru
          _
      $region68: #{tpu_custom_call.1} parent=5 // pred_fallthru
        _
    $region6: #{tpu_custom_call.1} parent=1 // loop_footer
      %s24 = sadd.s32 1, %s20
    $region7: #{tpu_custom_call.1} parent=1 // loop_footer_branch
      %19 = sbr.rel target = $region3
    $region8: #{tpu_custom_call.1} parent=1 // loop_exit
      _
    %3493 = vsyncpa [#allocation3], 1
    %s3494 = scalar_lea.sflag [#allocation3], 1
    %3495 = vsyncpa %s3494, 1
    %3496 = vsyncpa [#allocation6], 1
    %3497 = vsyncpa [#allocation9], 1
    %3498 = vsyncpa [#allocation4], 1
    %s3499 = scalar_lea.sflag [#allocation4], 1
    %3500 = vsyncpa %s3499, 1

</llo_original>
